<compile_context>
chip_gen: v6e
topology: v6e:2x2x1
jax: 0.10.0
libtpu: 0.0.40
codegen_flags: <defaults>
</compile_context>

<pallas_src>
import functools

import jax
import jax.numpy as jnp
from jax import lax
from jax.experimental import pallas as pl
from jax.experimental.pallas import tpu as pltpu


# --------------------------------------------------------------------------- helpers


def _rows_per_chunk(num_rows, row_width, target=64):
    """Largest divisor d of num_rows with d*row_width <= target (at least 1)."""
    best = 1
    for d in range(1, num_rows + 1):
        if num_rows % d == 0 and d * row_width <= target:
            best = d
    return best


# --------------------------------------------------------------------------- kernel


def _depth_wise_kernel(x_ref, w1_ref, pg_ref, w3_ref, po_ref, o_ref,
                       pad_ref, dw_ref, *, H, W, G, stride, residual,
                       rpc1, rpc3):
    """Fused Depth_Wise block for one sample (activations stay VMEM-resident).

    x_ref  : (H*W, Cin)  f32   input sample, spatial-major.  For stride==2 the
                               wrapper pre-reorders every image row to
                               [even columns | odd columns].
    w1_ref : (Cin, G)    bf16  1x1 expand weights
    pg_ref : (15, G)     f32   packed per-channel params:
                                 rows 0..5  = bn1 scale, bn1 shift, prelu1,
                                              bn2 scale, bn2 shift, prelu2
                                 rows 6..14 = 3x3 depthwise weights (kh*3+kw)
    w3_ref : (G, Cout)   bf16  1x1 project weights
    po_ref : (2, Cout)   f32   bn3 scale / shift
    o_ref  : (Ho*Wo, Cout) f32 output sample
    pad_ref: (H+2, W+2, G) f32 expanded activation + 1px halo
                               stride==1: natural column layout (halo cols 0, W+1)
                               stride==2: parity layout
                                 [0..Wo-1]   odd  padded cols 1,3,..,W-1 (even orig cols)
                                 [Wo]        unused
                                 [Wo+1]      left halo (padded col 0)
                                 [Wo+2..W+1] even padded cols 2,4,..,W  (odd orig cols)
    dw_ref : (Ho*Wo, G)  f32   depthwise output (project-matmul LHS)
    """
    Ho, Wo = H // stride, W // stride
    f32 = jnp.float32

    s1 = pg_ref[0:1, :]
    b1 = pg_ref[1:2, :]
    a1 = pg_ref[2:3, :]

    # ---- zero ONLY the halo cells the 3x3 reads.  The interior is fully
    #      rewritten below every grid step (scratch persists across steps, but we
    #      re-zero per step so per-core scratches under "parallel" stay correct).
    if stride == 1:
        pad_ref[0:1, :, :] = jnp.zeros((1, W + 2, G), f32)            # top halo row
        pad_ref[H + 1:H + 2, :, :] = jnp.zeros((1, W + 2, G), f32)    # bottom halo row
        pad_ref[:, 0:1, :] = jnp.zeros((H + 2, 1, G), f32)            # left halo col
        pad_ref[:, W + 1:W + 2, :] = jnp.zeros((H + 2, 1, G), f32)    # right halo col
        tap_off = (0, 1, 2)                                           # kw = 0, 1, 2
    else:
        pad_ref[0:1, :, :] = jnp.zeros((1, W + 2, G), f32)            # top halo row
        pad_ref[:, Wo + 1:Wo + 2, :] = jnp.zeros((H + 2, 1, G), f32)  # left halo col
        tap_off = (Wo + 1, 0, Wo + 2)                                 # kw = 0, 1, 2

    # ---- stage 1: 1x1 expand (MXU, bf16 operands, f32 accumulate) + BN + PReLU,
    #      chunked over image rows and written straight into the padded scratch.
    for c in range(H // rpc1):
        r0 = c * rpc1
        xm = x_ref[pl.ds(r0 * W, rpc1 * W), :].astype(jnp.bfloat16)
        y = jnp.dot(xm, w1_ref[...], preferred_element_type=f32)      # (rpc1*W, G)
        y = y * s1 + b1
        y = jnp.where(y >= 0.0, y, y * a1)
        for rr in range(rpc1):
            row = y[rr * W:(rr + 1) * W, :]                           # (W, G)
            if stride == 1:
                pad_ref[1 + r0 + rr, 1:1 + W, :] = row
            else:
                # input row is [even cols | odd cols] (wrapper reorder)
                pad_ref[1 + r0 + rr, 0:Wo, :] = row[0:Wo, :]          # even orig cols
                pad_ref[1 + r0 + rr, Wo + 2:W + 2, :] = row[Wo:W, :]  # odd  orig cols

    # ---- stage 2: 3x3 depthwise conv + BN + PReLU, one output row at a time.
    #      Weight / BN / PReLU rows are broadcast to (Wo, G) ONCE before the loop;
    #      each padded row is loaded once per (i, kh), taps = unit-stride slices.
    wdb = [jnp.broadcast_to(pg_ref[6 + k:7 + k, :], (Wo, G)) for k in range(9)]
    s2b = jnp.broadcast_to(pg_ref[3:4, :], (Wo, G))
    b2b = jnp.broadcast_to(pg_ref[4:5, :], (Wo, G))
    a2b = jnp.broadcast_to(pg_ref[5:6, :], (Wo, G))

    def compute_row(i):
        acc = jnp.zeros((Wo, G), f32)
        for kh in range(3):
            prow = pad_ref[stride * i + kh, :, :]                     # (W+2, G), 1 load
            for kw in range(3):
                o0 = tap_off[kw]
                acc = acc + prow[o0:o0 + Wo, :] * wdb[kh * 3 + kw]
        out = acc * s2b + b2b
        return jnp.where(out >= 0.0, out, out * a2b)

    if Ho <= 16:
        # short loops: fully unroll at trace time (static indices, LLO visibility)
        for i in range(Ho):
            dw_ref[i * Wo:(i + 1) * Wo, :] = compute_row(i)
    else:
        # long loops: keep live vreg set to a single output row
        def body(i, carry):
            start = pl.multiple_of(i * Wo, Wo)
            dw_ref[pl.ds(start, Wo), :] = compute_row(i)
            return carry
        lax.fori_loop(0, Ho, body, 0)

    # ---- stage 3: 1x1 project (MXU) + BN (+ residual), chunked over output rows.
    s3 = po_ref[0:1, :]
    b3 = po_ref[1:2, :]
    for c in range(Ho // rpc3):
        m0 = c * rpc3 * Wo
        mlen = rpc3 * Wo
        lhs = dw_ref[pl.ds(m0, mlen), :].astype(jnp.bfloat16)
        y3 = jnp.dot(lhs, w3_ref[...], preferred_element_type=f32)    # (mlen, Cout)
        y3 = y3 * s3 + b3
        if residual:
            y3 = y3 + x_ref[pl.ds(m0, mlen), :]
        o_ref[pl.ds(m0, mlen), :] = y3.astype(o_ref.dtype)


# --------------------------------------------------------------------------- wrappers


def depth_wise_forward_nhwc(params, x_nhwc, *, stride, residual):
    """Depth_Wise forward on NHWC activations (no layout transposes)."""
    x = x_nhwc.astype(jnp.float32)
    N, H, W, Cin = x.shape
    G = params["w1"].shape[1]
    Cout = params["w3"].shape[1]
    if residual and (stride != 1 or Cin != Cout):
        raise ValueError("residual requires stride=1 and in_c == out_c")
    if H % stride or W % stride:
        raise ValueError("spatial dims must be divisible by stride")
    Ho, Wo = H // stride, W // stride

    # stride 2: reorder every image row to [even cols | odd cols] so the kernel's
    # 3x3 taps are all unit-stride (no strided / masked sublane loads in-kernel).
    # When called through the NCHW wrapper this fuses with the layout transpose.
    if stride == 2:
        perm = jnp.asarray(list(range(0, W, 2)) + list(range(1, W, 2)), jnp.int32)
        x = jnp.take(x, perm, axis=2)

    # pack the per-channel vectors -> 2 parameter DMAs instead of 11 tiny ones
    pg = jnp.concatenate([params["s1"], params["b1"], params["a1"],
                          params["s2"], params["b2"], params["a2"],
                          params["wd"].reshape(9, G)], axis=0)         # (15, G)
    po = jnp.concatenate([params["s3"], params["b3"]], axis=0)         # (2, Cout)

    rpc1 = _rows_per_chunk(H, W)      # image rows per expand chunk  (~64 positions)
    rpc3 = _rows_per_chunk(Ho, Wo)    # output rows per project chunk (~64 positions)

    kernel = functools.partial(_depth_wise_kernel, H=H, W=W, G=G, stride=stride,
                               residual=residual, rpc1=rpc1, rpc3=rpc3)

    out = pl.pallas_call(
        kernel,
        grid=(N,),
        in_specs=[
            pl.BlockSpec((None, H * W, Cin), lambda n: (n, 0, 0)),    # x (one sample)
            pl.BlockSpec((Cin, G), lambda n: (0, 0)),                 # w1 (bf16)
            pl.BlockSpec((15, G), lambda n: (0, 0)),                  # packed G-params
            pl.BlockSpec((G, Cout), lambda n: (0, 0)),                # w3 (bf16)
            pl.BlockSpec((2, Cout), lambda n: (0, 0)),                # packed Cout-params
        ],
        out_specs=pl.BlockSpec((None, Ho * Wo, Cout), lambda n: (n, 0, 0)),
        out_shape=jax.ShapeDtypeStruct((N, Ho * Wo, Cout), jnp.float32),
        scratch_shapes=[
            pltpu.VMEM((H + 2, W + 2, G), jnp.float32),   # expanded act + 1px halo
            pltpu.VMEM((Ho * Wo, G), jnp.float32),        # depthwise output (f32)
        ],
        compiler_params=pltpu.CompilerParams(dimension_semantics=("parallel",)),
    )(x.reshape(N, H * W, Cin), params["w1"], pg, params["w3"], po)
    return out.reshape(N, Ho, Wo, Cout)


def depth_wise_forward(params, x_nchw, *, stride, residual):
    """PyTorch-compatible NCHW interface around the NHWC core."""
    # TODO(synk): in a full MobileFaceNet, keep activations NHWC (and bf16) across
    # blocks and drop these per-block transposes -- each is a full HBM round trip.
    x = jnp.transpose(x_nchw, (0, 2, 3, 1))                           # NCHW -> NHWC
    out = depth_wise_forward_nhwc(params, x, stride=stride, residual=residual)
    return jnp.transpose(out, (0, 3, 1, 2))                           # NHWC -> NCHW


# --------------------------------------------------------------------------- params


class _Keys:
    def __init__(self, key):
        self._k = key

    def __call__(self):
        self._k, sub = jax.random.split(self._k)
        return sub


def _bn(kg, c):
    gamma = 1.0 + 0.1 * jax.random.normal(kg(), (c,), jnp.float32)
    beta = 0.1 * jax.random.normal(kg(), (c,), jnp.float32)
    mean = 0.1 * jax.random.normal(kg(), (c,), jnp.float32)
    var = 0.5 + 0.5 * jnp.abs(jax.random.normal(kg(), (c,), jnp.float32))
    scale = gamma * lax.rsqrt(var + 1e-5)
    shift = beta - mean * scale
    return scale.reshape(1, c), shift.reshape(1, c)


def _prelu(kg, c):
    return (0.25 + 0.05 * jax.random.normal(kg(), (c,), jnp.float32)).reshape(1, c)


def init_depth_wise(key, in_c, out_c, groups):
    kg = _Keys(key)
    p = {}
    p["w1"] = (jax.random.normal(kg(), (in_c, groups), jnp.float32)
               / jnp.sqrt(float(in_c))).astype(jnp.bfloat16)
    p["s1"], p["b1"] = _bn(kg, groups)
    p["a1"] = _prelu(kg, groups)
    p["wd"] = jax.random.normal(kg(), (3, 3, groups), jnp.float32) / 3.0
    p["s2"], p["b2"] = _bn(kg, groups)
    p["a2"] = _prelu(kg, groups)
    p["w3"] = (jax.random.normal(kg(), (groups, out_c), jnp.float32)
               / jnp.sqrt(float(groups))).astype(jnp.bfloat16)
    p["s3"], p["b3"] = _bn(kg, out_c)
    return p


# --------------------------------------------------------------------------- reference


def depth_wise_reference(params, x_nchw, *, stride, residual):
    """Pure-JAX reference with the same numerics (bf16 matmul operands, f32 acc)."""
    x = jnp.transpose(x_nchw, (0, 2, 3, 1)).astype(jnp.float32)
    N, H, W, Cin = x.shape
    G = params["w1"].shape[1]
    Cout = params["w3"].shape[1]
    Ho, Wo = H // stride, W // stride

    y = jnp.dot(x.reshape(-1, Cin).astype(jnp.bfloat16), params["w1"],
                preferred_element_type=jnp.float32)
    y = y * params["s1"] + params["b1"]
    y = jnp.where(y >= 0.0, y, y * params["a1"])
    y = y.reshape(N, H, W, G)

    yp = jnp.pad(y, ((0, 0), (1, 1), (1, 1), (0, 0)))
    acc = jnp.zeros((N, Ho, Wo, G), jnp.float32)
    for kh in range(3):
        for kw in range(3):
            tap = yp[:, kh:kh + stride * (Ho - 1) + 1:stride,
                     kw:kw + stride * (Wo - 1) + 1:stride, :]
            acc = acc + tap * params["wd"][kh, kw]
    y = acc * params["s2"] + params["b2"]
    y = jnp.where(y >= 0.0, y, y * params["a2"])

    z = jnp.dot(y.reshape(-1, G).astype(jnp.bfloat16), params["w3"],
                preferred_element_type=jnp.float32)
    z = z * params["s3"] + params["b3"]
    z = z.reshape(N, Ho, Wo, Cout)
    if residual:
        z = z + x
    return jnp.transpose(z, (0, 3, 1, 2))


# --------------------------------------------------------------------------- main


if __name__ == "__main__":
    root = jax.random.PRNGKey(0)
    kp1, kp2, kx = jax.random.split(root, 3)

    N, C_IN, HSP, C_GROUPS, C_OUT = 2, 128, 16, 256, 128
    x = jax.random.normal(kx, (N, C_IN, HSP, HSP), jnp.float32)

    # (a) down-sampling configuration: stride 2, no residual (module default semantics)
    p_ds = init_depth_wise(kp1, C_IN, C_OUT, C_GROUPS)
    fwd_ds = jax.jit(functools.partial(depth_wise_forward, stride=2, residual=False))
    ref_ds = jax.jit(functools.partial(depth_wise_reference, stride=2, residual=False))
    out_ds = jax.block_until_ready(fwd_ds(p_ds, x))
    chk_ds = jax.block_until_ready(ref_ds(p_ds, x))
    assert out_ds.shape == (N, C_OUT, HSP // 2, HSP // 2), out_ds.shape
    assert bool(jnp.all(jnp.isfinite(out_ds)))
    assert bool(jnp.allclose(out_ds, chk_ds, rtol=1e-2, atol=1e-2)), \
        float(jnp.max(jnp.abs(out_ds - chk_ds)))

    # (b) residual configuration: stride 1, in_c == out_c, shortcut add
    p_res = init_depth_wise(kp2, C_IN, C_OUT, C_GROUPS)
    fwd_res = jax.jit(functools.partial(depth_wise_forward, stride=1, residual=True))
    ref_res = jax.jit(functools.partial(depth_wise_reference, stride=1, residual=True))
    out_res = jax.block_until_ready(fwd_res(p_res, x))
    chk_res = jax.block_until_ready(ref_res(p_res, x))
    assert out_res.shape == (N, C_OUT, HSP, HSP), out_res.shape
    assert bool(jnp.all(jnp.isfinite(out_res)))
    assert bool(jnp.allclose(out_res, chk_res, rtol=1e-2, atol=1e-2)), \
        float(jnp.max(jnp.abs(out_res - chk_res)))

    print("KERNEL_OK")
</pallas_src>

<mosaic_0001>
module attributes {stable_mosaic.version = 11 : i64} {
  func.func @_depth_wise_kernel(%arg0: i32, %arg1: memref<1x256x128xf32, #tpu.memory_space<vmem>>, %arg2: memref<128x256xbf16, #tpu.memory_space<vmem>>, %arg3: memref<15x256xf32, #tpu.memory_space<vmem>>, %arg4: memref<256x128xbf16, #tpu.memory_space<vmem>>, %arg5: memref<2x128xf32, #tpu.memory_space<vmem>>, %arg6: memref<1x64x128xf32, #tpu.memory_space<vmem>>, %arg7: memref<18x18x256xf32, #tpu.memory_space<vmem>>, %arg8: memref<64x256xf32, #tpu.memory_space<vmem>>) attributes {dimension_semantics = [#tpu.dimension_semantics<parallel>], iteration_bounds = array<i64: 2>, scalar_prefetch = 0 : i64, scratch_operands = 2 : i64, tpu.core_type = #tpu.core_type<tc>, window_params = [{transform_indices = @transform_0, window_bounds = array<i64: 1, 256, 128>}, {pipeline_mode = #tpu.pipeline_mode<synchronous>, transform_indices = @transform_1, window_bounds = array<i64: 128, 256>}, {pipeline_mode = #tpu.pipeline_mode<synchronous>, transform_indices = @transform_2, window_bounds = array<i64: 15, 256>}, {pipeline_mode = #tpu.pipeline_mode<synchronous>, transform_indices = @transform_3, window_bounds = array<i64: 256, 128>}, {pipeline_mode = #tpu.pipeline_mode<synchronous>, transform_indices = @transform_4, window_bounds = array<i64: 2, 128>}, {transform_indices = @transform_5, window_bounds = array<i64: 1, 64, 128>}]} {
    %c0 = arith.constant 0 : index
    %c0_0 = arith.constant 0 : index
    %0 = vector.load %arg3[%c0, %c0_0] : memref<15x256xf32, #tpu.memory_space<vmem>>, vector<1x256xf32>
    %c1 = arith.constant 1 : index
    %c0_1 = arith.constant 0 : index
    %1 = vector.load %arg3[%c1, %c0_1] : memref<15x256xf32, #tpu.memory_space<vmem>>, vector<1x256xf32>
    %c2 = arith.constant 2 : index
    %c0_2 = arith.constant 0 : index
    %2 = vector.load %arg3[%c2, %c0_2] : memref<15x256xf32, #tpu.memory_space<vmem>>, vector<1x256xf32>
    %cst = arith.constant 0.000000e+00 : f32
    %3 = vector.broadcast %cst : f32 to vector<1x18x256xf32>
    %c0_3 = arith.constant 0 : index
    %c0_4 = arith.constant 0 : index
    %c0_5 = arith.constant 0 : index
    %4 = vector.load %arg7[%c0_3, %c0_4, %c0_5] : memref<18x18x256xf32, #tpu.memory_space<vmem>>, vector<1x18x256xf32>
    tpu.vector_store %arg7[%c0_3, %c0_4, %c0_5], %3 {strides = array<i32>} : memref<18x18x256xf32, #tpu.memory_space<vmem>>, vector<1x18x256xf32>,
    %cst_6 = arith.constant 0.000000e+00 : f32
    %5 = vector.broadcast %cst_6 : f32 to vector<18x1x256xf32>
    %c0_7 = arith.constant 0 : index
    %c9 = arith.constant 9 : index
    %c0_8 = arith.constant 0 : index
    %6 = vector.load %arg7[%c0_7, %c9, %c0_8] : memref<18x18x256xf32, #tpu.memory_space<vmem>>, vector<18x1x256xf32>
    tpu.vector_store %arg7[%c0_7, %c9, %c0_8], %5 {strides = array<i32>} : memref<18x18x256xf32, #tpu.memory_space<vmem>>, vector<18x1x256xf32>,
    %c0_9 = arith.constant 0 : index
    %c0_10 = arith.constant 0 : index
    %c0_11 = arith.constant 0 : index
    %7 = vector.load %arg1[%c0_9, %c0_10, %c0_11] : memref<1x256x128xf32, #tpu.memory_space<vmem>>, vector<1x64x128xf32>
    %8 = vector.shape_cast %7 : vector<1x64x128xf32> to vector<64x128xf32>
    %9 = arith.truncf %8 : vector<64x128xf32> to vector<64x128xbf16>
    %c0_12 = arith.constant 0 : index
    %c0_13 = arith.constant 0 : index
    %10 = vector.load %arg2[%c0_12, %c0_13] : memref<128x256xbf16, #tpu.memory_space<vmem>>, vector<128x256xbf16>
    %cst_14 = arith.constant dense<0.000000e+00> : vector<64x256xf32>
    %11 = tpu.matmul %9, %10, %cst_14 {dimension_numbers = #tpu.dot_dimension_numbers<[1], [0], [0], [1], [0, 0, 1, 1], [], []>} : vector<64x128xbf16>, vector<128x256xbf16>, vector<64x256xf32> -> vector<64x256xf32>
    %12 = vector.broadcast %0 : vector<1x256xf32> to vector<64x256xf32>
    %13 = arith.mulf %11, %12 : vector<64x256xf32>
    %14 = vector.broadcast %1 : vector<1x256xf32> to vector<64x256xf32>
    %15 = arith.addf %13, %14 : vector<64x256xf32>
    %cst_15 = arith.constant 0.000000e+00 : f32
    %16 = vector.broadcast %cst_15 : f32 to vector<64x256xf32>
    %17 = arith.cmpf oge, %15, %16 : vector<64x256xf32>
    %18 = vector.broadcast %2 : vector<1x256xf32> to vector<64x256xf32>
    %19 = arith.mulf %15, %18 : vector<64x256xf32>
    %20 = arith.select %17, %15, %19 : vector<64x256xi1>, vector<64x256xf32>
    %21 = vector.extract_strided_slice %20 {offsets = [0, 0], sizes = [16, 256], strides = [1, 1]} : vector<64x256xf32> to vector<16x256xf32>
    %22 = vector.extract_strided_slice %21 {offsets = [0, 0], sizes = [8, 256], strides = [1, 1]} : vector<16x256xf32> to vector<8x256xf32>
    %c1_16 = arith.constant 1 : index
    %c0_17 = arith.constant 0 : index
    %c0_18 = arith.constant 0 : index
    %23 = vector.load %arg7[%c1_16, %c0_17, %c0_18] : memref<18x18x256xf32, #tpu.memory_space<vmem>>, vector<1x8x256xf32>
    %24 = vector.shape_cast %23 : vector<1x8x256xf32> to vector<8x256xf32>
    %25 = vector.shape_cast %22 : vector<8x256xf32> to vector<1x8x256xf32>
    tpu.vector_store %arg7[%c1_16, %c0_17, %c0_18], %25 {strides = array<i32>} : memref<18x18x256xf32, #tpu.memory_space<vmem>>, vector<1x8x256xf32>,
    %26 = vector.extract_strided_slice %21 {offsets = [8, 0], sizes = [8, 256], strides = [1, 1]} : vector<16x256xf32> to vector<8x256xf32>
    %c1_19 = arith.constant 1 : index
    %c10 = arith.constant 10 : index
    %c0_20 = arith.constant 0 : index
    %27 = vector.load %arg7[%c1_19, %c10, %c0_20] : memref<18x18x256xf32, #tpu.memory_space<vmem>>, vector<1x8x256xf32>
    %28 = vector.shape_cast %27 : vector<1x8x256xf32> to vector<8x256xf32>
    %29 = vector.shape_cast %26 : vector<8x256xf32> to vector<1x8x256xf32>
    tpu.vector_store %arg7[%c1_19, %c10, %c0_20], %29 {strides = array<i32>} : memref<18x18x256xf32, #tpu.memory_space<vmem>>, vector<1x8x256xf32>,
    %30 = vector.extract_strided_slice %20 {offsets = [16, 0], sizes = [16, 256], strides = [1, 1]} : vector<64x256xf32> to vector<16x256xf32>
    %31 = vector.extract_strided_slice %30 {offsets = [0, 0], sizes = [8, 256], strides = [1, 1]} : vector<16x256xf32> to vector<8x256xf32>
    %c2_21 = arith.constant 2 : index
    %c0_22 = arith.constant 0 : index
    %c0_23 = arith.constant 0 : index
    %32 = vector.load %arg7[%c2_21, %c0_22, %c0_23] : memref<18x18x256xf32, #tpu.memory_space<vmem>>, vector<1x8x256xf32>
    %33 = vector.shape_cast %32 : vector<1x8x256xf32> to vector<8x256xf32>
    %34 = vector.shape_cast %31 : vector<8x256xf32> to vector<1x8x256xf32>
    tpu.vector_store %arg7[%c2_21, %c0_22, %c0_23], %34 {strides = array<i32>} : memref<18x18x256xf32, #tpu.memory_space<vmem>>, vector<1x8x256xf32>,
    %35 = vector.extract_strided_slice %30 {offsets = [8, 0], sizes = [8, 256], strides = [1, 1]} : vector<16x256xf32> to vector<8x256xf32>
    %c2_24 = arith.constant 2 : index
    %c10_25 = arith.constant 10 : index
    %c0_26 = arith.constant 0 : index
    %36 = vector.load %arg7[%c2_24, %c10_25, %c0_26] : memref<18x18x256xf32, #tpu.memory_space<vmem>>, vector<1x8x256xf32>
    %37 = vector.shape_cast %36 : vector<1x8x256xf32> to vector<8x256xf32>
    %38 = vector.shape_cast %35 : vector<8x256xf32> to vector<1x8x256xf32>
    tpu.vector_store %arg7[%c2_24, %c10_25, %c0_26], %38 {strides = array<i32>} : memref<18x18x256xf32, #tpu.memory_space<vmem>>, vector<1x8x256xf32>,
    %39 = vector.extract_strided_slice %20 {offsets = [32, 0], sizes = [16, 256], strides = [1, 1]} : vector<64x256xf32> to vector<16x256xf32>
    %40 = vector.extract_strided_slice %39 {offsets = [0, 0], sizes = [8, 256], strides = [1, 1]} : vector<16x256xf32> to vector<8x256xf32>
    %c3 = arith.constant 3 : index
    %c0_27 = arith.constant 0 : index
    %c0_28 = arith.constant 0 : index
    %41 = vector.load %arg7[%c3, %c0_27, %c0_28] : memref<18x18x256xf32, #tpu.memory_space<vmem>>, vector<1x8x256xf32>
    %42 = vector.shape_cast %41 : vector<1x8x256xf32> to vector<8x256xf32>
    %43 = vector.shape_cast %40 : vector<8x256xf32> to vector<1x8x256xf32>
    tpu.vector_store %arg7[%c3, %c0_27, %c0_28], %43 {strides = array<i32>} : memref<18x18x256xf32, #tpu.memory_space<vmem>>, vector<1x8x256xf32>,
    %44 = vector.extract_strided_slice %39 {offsets = [8, 0], sizes = [8, 256], strides = [1, 1]} : vector<16x256xf32> to vector<8x256xf32>
    %c3_29 = arith.constant 3 : index
    %c10_30 = arith.constant 10 : index
    %c0_31 = arith.constant 0 : index
    %45 = vector.load %arg7[%c3_29, %c10_30, %c0_31] : memref<18x18x256xf32, #tpu.memory_space<vmem>>, vector<1x8x256xf32>
    %46 = vector.shape_cast %45 : vector<1x8x256xf32> to vector<8x256xf32>
    %47 = vector.shape_cast %44 : vector<8x256xf32> to vector<1x8x256xf32>
    tpu.vector_store %arg7[%c3_29, %c10_30, %c0_31], %47 {strides = array<i32>} : memref<18x18x256xf32, #tpu.memory_space<vmem>>, vector<1x8x256xf32>,
    %48 = vector.extract_strided_slice %20 {offsets = [48, 0], sizes = [16, 256], strides = [1, 1]} : vector<64x256xf32> to vector<16x256xf32>
    %49 = vector.extract_strided_slice %48 {offsets = [0, 0], sizes = [8, 256], strides = [1, 1]} : vector<16x256xf32> to vector<8x256xf32>
    %c4 = arith.constant 4 : index
    %c0_32 = arith.constant 0 : index
    %c0_33 = arith.constant 0 : index
    %50 = vector.load %arg7[%c4, %c0_32, %c0_33] : memref<18x18x256xf32, #tpu.memory_space<vmem>>, vector<1x8x256xf32>
    %51 = vector.shape_cast %50 : vector<1x8x256xf32> to vector<8x256xf32>
    %52 = vector.shape_cast %49 : vector<8x256xf32> to vector<1x8x256xf32>
    tpu.vector_store %arg7[%c4, %c0_32, %c0_33], %52 {strides = array<i32>} : memref<18x18x256xf32, #tpu.memory_space<vmem>>, vector<1x8x256xf32>,
    %53 = vector.extract_strided_slice %48 {offsets = [8, 0], sizes = [8, 256], strides = [1, 1]} : vector<16x256xf32> to vector<8x256xf32>
    %c4_34 = arith.constant 4 : index
    %c10_35 = arith.constant 10 : index
    %c0_36 = arith.constant 0 : index
    %54 = vector.load %arg7[%c4_34, %c10_35, %c0_36] : memref<18x18x256xf32, #tpu.memory_space<vmem>>, vector<1x8x256xf32>
    %55 = vector.shape_cast %54 : vector<1x8x256xf32> to vector<8x256xf32>
    %56 = vector.shape_cast %53 : vector<8x256xf32> to vector<1x8x256xf32>
    tpu.vector_store %arg7[%c4_34, %c10_35, %c0_36], %56 {strides = array<i32>} : memref<18x18x256xf32, #tpu.memory_space<vmem>>, vector<1x8x256xf32>,
    %c0_37 = arith.constant 0 : index
    %c64 = arith.constant 64 : index
    %c0_38 = arith.constant 0 : index
    %57 = vector.load %arg1[%c0_37, %c64, %c0_38] : memref<1x256x128xf32, #tpu.memory_space<vmem>>, vector<1x64x128xf32>
    %58 = vector.shape_cast %57 : vector<1x64x128xf32> to vector<64x128xf32>
    %59 = arith.truncf %58 : vector<64x128xf32> to vector<64x128xbf16>
    %c0_39 = arith.constant 0 : index
    %c0_40 = arith.constant 0 : index
    %60 = vector.load %arg2[%c0_39, %c0_40] : memref<128x256xbf16, #tpu.memory_space<vmem>>, vector<128x256xbf16>
    %cst_41 = arith.constant dense<0.000000e+00> : vector<64x256xf32>
    %61 = tpu.matmul %59, %60, %cst_41 {dimension_numbers = #tpu.dot_dimension_numbers<[1], [0], [0], [1], [0, 0, 1, 1], [], []>} : vector<64x128xbf16>, vector<128x256xbf16>, vector<64x256xf32> -> vector<64x256xf32>
    %62 = vector.broadcast %0 : vector<1x256xf32> to vector<64x256xf32>
    %63 = arith.mulf %61, %62 : vector<64x256xf32>
    %64 = vector.broadcast %1 : vector<1x256xf32> to vector<64x256xf32>
    %65 = arith.addf %63, %64 : vector<64x256xf32>
    %cst_42 = arith.constant 0.000000e+00 : f32
    %66 = vector.broadcast %cst_42 : f32 to vector<64x256xf32>
    %67 = arith.cmpf oge, %65, %66 : vector<64x256xf32>
    %68 = vector.broadcast %2 : vector<1x256xf32> to vector<64x256xf32>
    %69 = arith.mulf %65, %68 : vector<64x256xf32>
    %70 = arith.select %67, %65, %69 : vector<64x256xi1>, vector<64x256xf32>
    %71 = vector.extract_strided_slice %70 {offsets = [0, 0], sizes = [16, 256], strides = [1, 1]} : vector<64x256xf32> to vector<16x256xf32>
    %72 = vector.extract_strided_slice %71 {offsets = [0, 0], sizes = [8, 256], strides = [1, 1]} : vector<16x256xf32> to vector<8x256xf32>
    %c5 = arith.constant 5 : index
    %c0_43 = arith.constant 0 : index
    %c0_44 = arith.constant 0 : index
    %73 = vector.load %arg7[%c5, %c0_43, %c0_44] : memref<18x18x256xf32, #tpu.memory_space<vmem>>, vector<1x8x256xf32>
    %74 = vector.shape_cast %73 : vector<1x8x256xf32> to vector<8x256xf32>
    %75 = vector.shape_cast %72 : vector<8x256xf32> to vector<1x8x256xf32>
    tpu.vector_store %arg7[%c5, %c0_43, %c0_44], %75 {strides = array<i32>} : memref<18x18x256xf32, #tpu.memory_space<vmem>>, vector<1x8x256xf32>,
    %76 = vector.extract_strided_slice %71 {offsets = [8, 0], sizes = [8, 256], strides = [1, 1]} : vector<16x256xf32> to vector<8x256xf32>
    %c5_45 = arith.constant 5 : index
    %c10_46 = arith.constant 10 : index
    %c0_47 = arith.constant 0 : index
    %77 = vector.load %arg7[%c5_45, %c10_46, %c0_47] : memref<18x18x256xf32, #tpu.memory_space<vmem>>, vector<1x8x256xf32>
    %78 = vector.shape_cast %77 : vector<1x8x256xf32> to vector<8x256xf32>
    %79 = vector.shape_cast %76 : vector<8x256xf32> to vector<1x8x256xf32>
    tpu.vector_store %arg7[%c5_45, %c10_46, %c0_47], %79 {strides = array<i32>} : memref<18x18x256xf32, #tpu.memory_space<vmem>>, vector<1x8x256xf32>,
    %80 = vector.extract_strided_slice %70 {offsets = [16, 0], sizes = [16, 256], strides = [1, 1]} : vector<64x256xf32> to vector<16x256xf32>
    %81 = vector.extract_strided_slice %80 {offsets = [0, 0], sizes = [8, 256], strides = [1, 1]} : vector<16x256xf32> to vector<8x256xf32>
    %c6 = arith.constant 6 : index
    %c0_48 = arith.constant 0 : index
    %c0_49 = arith.constant 0 : index
    %82 = vector.load %arg7[%c6, %c0_48, %c0_49] : memref<18x18x256xf32, #tpu.memory_space<vmem>>, vector<1x8x256xf32>
    %83 = vector.shape_cast %82 : vector<1x8x256xf32> to vector<8x256xf32>
    %84 = vector.shape_cast %81 : vector<8x256xf32> to vector<1x8x256xf32>
    tpu.vector_store %arg7[%c6, %c0_48, %c0_49], %84 {strides = array<i32>} : memref<18x18x256xf32, #tpu.memory_space<vmem>>, vector<1x8x256xf32>,
    %85 = vector.extract_strided_slice %80 {offsets = [8, 0], sizes = [8, 256], strides = [1, 1]} : vector<16x256xf32> to vector<8x256xf32>
    %c6_50 = arith.constant 6 : index
    %c10_51 = arith.constant 10 : index
    %c0_52 = arith.constant 0 : index
    %86 = vector.load %arg7[%c6_50, %c10_51, %c0_52] : memref<18x18x256xf32, #tpu.memory_space<vmem>>, vector<1x8x256xf32>
    %87 = vector.shape_cast %86 : vector<1x8x256xf32> to vector<8x256xf32>
    %88 = vector.shape_cast %85 : vector<8x256xf32> to vector<1x8x256xf32>
    tpu.vector_store %arg7[%c6_50, %c10_51, %c0_52], %88 {strides = array<i32>} : memref<18x18x256xf32, #tpu.memory_space<vmem>>, vector<1x8x256xf32>,
    %89 = vector.extract_strided_slice %70 {offsets = [32, 0], sizes = [16, 256], strides = [1, 1]} : vector<64x256xf32> to vector<16x256xf32>
    %90 = vector.extract_strided_slice %89 {offsets = [0, 0], sizes = [8, 256], strides = [1, 1]} : vector<16x256xf32> to vector<8x256xf32>
    %c7 = arith.constant 7 : index
    %c0_53 = arith.constant 0 : index
    %c0_54 = arith.constant 0 : index
    %91 = vector.load %arg7[%c7, %c0_53, %c0_54] : memref<18x18x256xf32, #tpu.memory_space<vmem>>, vector<1x8x256xf32>
    %92 = vector.shape_cast %91 : vector<1x8x256xf32> to vector<8x256xf32>
    %93 = vector.shape_cast %90 : vector<8x256xf32> to vector<1x8x256xf32>
    tpu.vector_store %arg7[%c7, %c0_53, %c0_54], %93 {strides = array<i32>} : memref<18x18x256xf32, #tpu.memory_space<vmem>>, vector<1x8x256xf32>,
    %94 = vector.extract_strided_slice %89 {offsets = [8, 0], sizes = [8, 256], strides = [1, 1]} : vector<16x256xf32> to vector<8x256xf32>
    %c7_55 = arith.constant 7 : index
    %c10_56 = arith.constant 10 : index
    %c0_57 = arith.constant 0 : index
    %95 = vector.load %arg7[%c7_55, %c10_56, %c0_57] : memref<18x18x256xf32, #tpu.memory_space<vmem>>, vector<1x8x256xf32>
    %96 = vector.shape_cast %95 : vector<1x8x256xf32> to vector<8x256xf32>
    %97 = vector.shape_cast %94 : vector<8x256xf32> to vector<1x8x256xf32>
    tpu.vector_store %arg7[%c7_55, %c10_56, %c0_57], %97 {strides = array<i32>} : memref<18x18x256xf32, #tpu.memory_space<vmem>>, vector<1x8x256xf32>,
    %98 = vector.extract_strided_slice %70 {offsets = [48, 0], sizes = [16, 256], strides = [1, 1]} : vector<64x256xf32> to vector<16x256xf32>
    %99 = vector.extract_strided_slice %98 {offsets = [0, 0], sizes = [8, 256], strides = [1, 1]} : vector<16x256xf32> to vector<8x256xf32>
    %c8 = arith.constant 8 : index
    %c0_58 = arith.constant 0 : index
    %c0_59 = arith.constant 0 : index
    %100 = vector.load %arg7[%c8, %c0_58, %c0_59] : memref<18x18x256xf32, #tpu.memory_space<vmem>>, vector<1x8x256xf32>
    %101 = vector.shape_cast %100 : vector<1x8x256xf32> to vector<8x256xf32>
    %102 = vector.shape_cast %99 : vector<8x256xf32> to vector<1x8x256xf32>
    tpu.vector_store %arg7[%c8, %c0_58, %c0_59], %102 {strides = array<i32>} : memref<18x18x256xf32, #tpu.memory_space<vmem>>, vector<1x8x256xf32>,
    %103 = vector.extract_strided_slice %98 {offsets = [8, 0], sizes = [8, 256], strides = [1, 1]} : vector<16x256xf32> to vector<8x256xf32>
    %c8_60 = arith.constant 8 : index
    %c10_61 = arith.constant 10 : index
    %c0_62 = arith.constant 0 : index
    %104 = vector.load %arg7[%c8_60, %c10_61, %c0_62] : memref<18x18x256xf32, #tpu.memory_space<vmem>>, vector<1x8x256xf32>
    %105 = vector.shape_cast %104 : vector<1x8x256xf32> to vector<8x256xf32>
    %106 = vector.shape_cast %103 : vector<8x256xf32> to vector<1x8x256xf32>
    tpu.vector_store %arg7[%c8_60, %c10_61, %c0_62], %106 {strides = array<i32>} : memref<18x18x256xf32, #tpu.memory_space<vmem>>, vector<1x8x256xf32>,
    %c0_63 = arith.constant 0 : index
    %c128 = arith.constant 128 : index
    %c0_64 = arith.constant 0 : index
    %107 = vector.load %arg1[%c0_63, %c128, %c0_64] : memref<1x256x128xf32, #tpu.memory_space<vmem>>, vector<1x64x128xf32>
    %108 = vector.shape_cast %107 : vector<1x64x128xf32> to vector<64x128xf32>
    %109 = arith.truncf %108 : vector<64x128xf32> to vector<64x128xbf16>
    %c0_65 = arith.constant 0 : index
    %c0_66 = arith.constant 0 : index
    %110 = vector.load %arg2[%c0_65, %c0_66] : memref<128x256xbf16, #tpu.memory_space<vmem>>, vector<128x256xbf16>
    %cst_67 = arith.constant dense<0.000000e+00> : vector<64x256xf32>
    %111 = tpu.matmul %109, %110, %cst_67 {dimension_numbers = #tpu.dot_dimension_numbers<[1], [0], [0], [1], [0, 0, 1, 1], [], []>} : vector<64x128xbf16>, vector<128x256xbf16>, vector<64x256xf32> -> vector<64x256xf32>
    %112 = vector.broadcast %0 : vector<1x256xf32> to vector<64x256xf32>
    %113 = arith.mulf %111, %112 : vector<64x256xf32>
    %114 = vector.broadcast %1 : vector<1x256xf32> to vector<64x256xf32>
    %115 = arith.addf %113, %114 : vector<64x256xf32>
    %cst_68 = arith.constant 0.000000e+00 : f32
    %116 = vector.broadcast %cst_68 : f32 to vector<64x256xf32>
    %117 = arith.cmpf oge, %115, %116 : vector<64x256xf32>
    %118 = vector.broadcast %2 : vector<1x256xf32> to vector<64x256xf32>
    %119 = arith.mulf %115, %118 : vector<64x256xf32>
    %120 = arith.select %117, %115, %119 : vector<64x256xi1>, vector<64x256xf32>
    %121 = vector.extract_strided_slice %120 {offsets = [0, 0], sizes = [16, 256], strides = [1, 1]} : vector<64x256xf32> to vector<16x256xf32>
    %122 = vector.extract_strided_slice %121 {offsets = [0, 0], sizes = [8, 256], strides = [1, 1]} : vector<16x256xf32> to vector<8x256xf32>
    %c9_69 = arith.constant 9 : index
    %c0_70 = arith.constant 0 : index
    %c0_71 = arith.constant 0 : index
    %123 = vector.load %arg7[%c9_69, %c0_70, %c0_71] : memref<18x18x256xf32, #tpu.memory_space<vmem>>, vector<1x8x256xf32>
    %124 = vector.shape_cast %123 : vector<1x8x256xf32> to vector<8x256xf32>
    %125 = vector.shape_cast %122 : vector<8x256xf32> to vector<1x8x256xf32>
    tpu.vector_store %arg7[%c9_69, %c0_70, %c0_71], %125 {strides = array<i32>} : memref<18x18x256xf32, #tpu.memory_space<vmem>>, vector<1x8x256xf32>,
    %126 = vector.extract_strided_slice %121 {offsets = [8, 0], sizes = [8, 256], strides = [1, 1]} : vector<16x256xf32> to vector<8x256xf32>
    %c9_72 = arith.constant 9 : index
    %c10_73 = arith.constant 10 : index
    %c0_74 = arith.constant 0 : index
    %127 = vector.load %arg7[%c9_72, %c10_73, %c0_74] : memref<18x18x256xf32, #tpu.memory_space<vmem>>, vector<1x8x256xf32>
    %128 = vector.shape_cast %127 : vector<1x8x256xf32> to vector<8x256xf32>
    %129 = vector.shape_cast %126 : vector<8x256xf32> to vector<1x8x256xf32>
    tpu.vector_store %arg7[%c9_72, %c10_73, %c0_74], %129 {strides = array<i32>} : memref<18x18x256xf32, #tpu.memory_space<vmem>>, vector<1x8x256xf32>,
    %130 = vector.extract_strided_slice %120 {offsets = [16, 0], sizes = [16, 256], strides = [1, 1]} : vector<64x256xf32> to vector<16x256xf32>
    %131 = vector.extract_strided_slice %130 {offsets = [0, 0], sizes = [8, 256], strides = [1, 1]} : vector<16x256xf32> to vector<8x256xf32>
    %c10_75 = arith.constant 10 : index
    %c0_76 = arith.constant 0 : index
    %c0_77 = arith.constant 0 : index
    %132 = vector.load %arg7[%c10_75, %c0_76, %c0_77] : memref<18x18x256xf32, #tpu.memory_space<vmem>>, vector<1x8x256xf32>
    %133 = vector.shape_cast %132 : vector<1x8x256xf32> to vector<8x256xf32>
    %134 = vector.shape_cast %131 : vector<8x256xf32> to vector<1x8x256xf32>
    tpu.vector_store %arg7[%c10_75, %c0_76, %c0_77], %134 {strides = array<i32>} : memref<18x18x256xf32, #tpu.memory_space<vmem>>, vector<1x8x256xf32>,
    %135 = vector.extract_strided_slice %130 {offsets = [8, 0], sizes = [8, 256], strides = [1, 1]} : vector<16x256xf32> to vector<8x256xf32>
    %c10_78 = arith.constant 10 : index
    %c10_79 = arith.constant 10 : index
    %c0_80 = arith.constant 0 : index
    %136 = vector.load %arg7[%c10_78, %c10_79, %c0_80] : memref<18x18x256xf32, #tpu.memory_space<vmem>>, vector<1x8x256xf32>
    %137 = vector.shape_cast %136 : vector<1x8x256xf32> to vector<8x256xf32>
    %138 = vector.shape_cast %135 : vector<8x256xf32> to vector<1x8x256xf32>
    tpu.vector_store %arg7[%c10_78, %c10_79, %c0_80], %138 {strides = array<i32>} : memref<18x18x256xf32, #tpu.memory_space<vmem>>, vector<1x8x256xf32>,
    %139 = vector.extract_strided_slice %120 {offsets = [32, 0], sizes = [16, 256], strides = [1, 1]} : vector<64x256xf32> to vector<16x256xf32>
    %140 = vector.extract_strided_slice %139 {offsets = [0, 0], sizes = [8, 256], strides = [1, 1]} : vector<16x256xf32> to vector<8x256xf32>
    %c11 = arith.constant 11 : index
    %c0_81 = arith.constant 0 : index
    %c0_82 = arith.constant 0 : index
    %141 = vector.load %arg7[%c11, %c0_81, %c0_82] : memref<18x18x256xf32, #tpu.memory_space<vmem>>, vector<1x8x256xf32>
    %142 = vector.shape_cast %141 : vector<1x8x256xf32> to vector<8x256xf32>
    %143 = vector.shape_cast %140 : vector<8x256xf32> to vector<1x8x256xf32>
    tpu.vector_store %arg7[%c11, %c0_81, %c0_82], %143 {strides = array<i32>} : memref<18x18x256xf32, #tpu.memory_space<vmem>>, vector<1x8x256xf32>,
    %144 = vector.extract_strided_slice %139 {offsets = [8, 0], sizes = [8, 256], strides = [1, 1]} : vector<16x256xf32> to vector<8x256xf32>
    %c11_83 = arith.constant 11 : index
    %c10_84 = arith.constant 10 : index
    %c0_85 = arith.constant 0 : index
    %145 = vector.load %arg7[%c11_83, %c10_84, %c0_85] : memref<18x18x256xf32, #tpu.memory_space<vmem>>, vector<1x8x256xf32>
    %146 = vector.shape_cast %145 : vector<1x8x256xf32> to vector<8x256xf32>
    %147 = vector.shape_cast %144 : vector<8x256xf32> to vector<1x8x256xf32>
    tpu.vector_store %arg7[%c11_83, %c10_84, %c0_85], %147 {strides = array<i32>} : memref<18x18x256xf32, #tpu.memory_space<vmem>>, vector<1x8x256xf32>,
    %148 = vector.extract_strided_slice %120 {offsets = [48, 0], sizes = [16, 256], strides = [1, 1]} : vector<64x256xf32> to vector<16x256xf32>
    %149 = vector.extract_strided_slice %148 {offsets = [0, 0], sizes = [8, 256], strides = [1, 1]} : vector<16x256xf32> to vector<8x256xf32>
    %c12 = arith.constant 12 : index
    %c0_86 = arith.constant 0 : index
    %c0_87 = arith.constant 0 : index
    %150 = vector.load %arg7[%c12, %c0_86, %c0_87] : memref<18x18x256xf32, #tpu.memory_space<vmem>>, vector<1x8x256xf32>
    %151 = vector.shape_cast %150 : vector<1x8x256xf32> to vector<8x256xf32>
    %152 = vector.shape_cast %149 : vector<8x256xf32> to vector<1x8x256xf32>
    tpu.vector_store %arg7[%c12, %c0_86, %c0_87], %152 {strides = array<i32>} : memref<18x18x256xf32, #tpu.memory_space<vmem>>, vector<1x8x256xf32>,
    %153 = vector.extract_strided_slice %148 {offsets = [8, 0], sizes = [8, 256], strides = [1, 1]} : vector<16x256xf32> to vector<8x256xf32>
    %c12_88 = arith.constant 12 : index
    %c10_89 = arith.constant 10 : index
    %c0_90 = arith.constant 0 : index
    %154 = vector.load %arg7[%c12_88, %c10_89, %c0_90] : memref<18x18x256xf32, #tpu.memory_space<vmem>>, vector<1x8x256xf32>
    %155 = vector.shape_cast %154 : vector<1x8x256xf32> to vector<8x256xf32>
    %156 = vector.shape_cast %153 : vector<8x256xf32> to vector<1x8x256xf32>
    tpu.vector_store %arg7[%c12_88, %c10_89, %c0_90], %156 {strides = array<i32>} : memref<18x18x256xf32, #tpu.memory_space<vmem>>, vector<1x8x256xf32>,
    %c0_91 = arith.constant 0 : index
    %c192 = arith.constant 192 : index
    %c0_92 = arith.constant 0 : index
    %157 = vector.load %arg1[%c0_91, %c192, %c0_92] : memref<1x256x128xf32, #tpu.memory_space<vmem>>, vector<1x64x128xf32>
    %158 = vector.shape_cast %157 : vector<1x64x128xf32> to vector<64x128xf32>
    %159 = arith.truncf %158 : vector<64x128xf32> to vector<64x128xbf16>
    %c0_93 = arith.constant 0 : index
    %c0_94 = arith.constant 0 : index
    %160 = vector.load %arg2[%c0_93, %c0_94] : memref<128x256xbf16, #tpu.memory_space<vmem>>, vector<128x256xbf16>
    %cst_95 = arith.constant dense<0.000000e+00> : vector<64x256xf32>
    %161 = tpu.matmul %159, %160, %cst_95 {dimension_numbers = #tpu.dot_dimension_numbers<[1], [0], [0], [1], [0, 0, 1, 1], [], []>} : vector<64x128xbf16>, vector<128x256xbf16>, vector<64x256xf32> -> vector<64x256xf32>
    %162 = vector.broadcast %0 : vector<1x256xf32> to vector<64x256xf32>
    %163 = arith.mulf %161, %162 : vector<64x256xf32>
    %164 = vector.broadcast %1 : vector<1x256xf32> to vector<64x256xf32>
    %165 = arith.addf %163, %164 : vector<64x256xf32>
    %cst_96 = arith.constant 0.000000e+00 : f32
    %166 = vector.broadcast %cst_96 : f32 to vector<64x256xf32>
    %167 = arith.cmpf oge, %165, %166 : vector<64x256xf32>
    %168 = vector.broadcast %2 : vector<1x256xf32> to vector<64x256xf32>
    %169 = arith.mulf %165, %168 : vector<64x256xf32>
    %170 = arith.select %167, %165, %169 : vector<64x256xi1>, vector<64x256xf32>
    %171 = vector.extract_strided_slice %170 {offsets = [0, 0], sizes = [16, 256], strides = [1, 1]} : vector<64x256xf32> to vector<16x256xf32>
    %172 = vector.extract_strided_slice %171 {offsets = [0, 0], sizes = [8, 256], strides = [1, 1]} : vector<16x256xf32> to vector<8x256xf32>
    %c13 = arith.constant 13 : index
    %c0_97 = arith.constant 0 : index
    %c0_98 = arith.constant 0 : index
    %173 = vector.load %arg7[%c13, %c0_97, %c0_98] : memref<18x18x256xf32, #tpu.memory_space<vmem>>, vector<1x8x256xf32>
    %174 = vector.shape_cast %173 : vector<1x8x256xf32> to vector<8x256xf32>
    %175 = vector.shape_cast %172 : vector<8x256xf32> to vector<1x8x256xf32>
    tpu.vector_store %arg7[%c13, %c0_97, %c0_98], %175 {strides = array<i32>} : memref<18x18x256xf32, #tpu.memory_space<vmem>>, vector<1x8x256xf32>,
    %176 = vector.extract_strided_slice %171 {offsets = [8, 0], sizes = [8, 256], strides = [1, 1]} : vector<16x256xf32> to vector<8x256xf32>
    %c13_99 = arith.constant 13 : index
    %c10_100 = arith.constant 10 : index
    %c0_101 = arith.constant 0 : index
    %177 = vector.load %arg7[%c13_99, %c10_100, %c0_101] : memref<18x18x256xf32, #tpu.memory_space<vmem>>, vector<1x8x256xf32>
    %178 = vector.shape_cast %177 : vector<1x8x256xf32> to vector<8x256xf32>
    %179 = vector.shape_cast %176 : vector<8x256xf32> to vector<1x8x256xf32>
    tpu.vector_store %arg7[%c13_99, %c10_100, %c0_101], %179 {strides = array<i32>} : memref<18x18x256xf32, #tpu.memory_space<vmem>>, vector<1x8x256xf32>,
    %180 = vector.extract_strided_slice %170 {offsets = [16, 0], sizes = [16, 256], strides = [1, 1]} : vector<64x256xf32> to vector<16x256xf32>
    %181 = vector.extract_strided_slice %180 {offsets = [0, 0], sizes = [8, 256], strides = [1, 1]} : vector<16x256xf32> to vector<8x256xf32>
    %c14 = arith.constant 14 : index
    %c0_102 = arith.constant 0 : index
    %c0_103 = arith.constant 0 : index
    %182 = vector.load %arg7[%c14, %c0_102, %c0_103] : memref<18x18x256xf32, #tpu.memory_space<vmem>>, vector<1x8x256xf32>
    %183 = vector.shape_cast %182 : vector<1x8x256xf32> to vector<8x256xf32>
    %184 = vector.shape_cast %181 : vector<8x256xf32> to vector<1x8x256xf32>
    tpu.vector_store %arg7[%c14, %c0_102, %c0_103], %184 {strides = array<i32>} : memref<18x18x256xf32, #tpu.memory_space<vmem>>, vector<1x8x256xf32>,
    %185 = vector.extract_strided_slice %180 {offsets = [8, 0], sizes = [8, 256], strides = [1, 1]} : vector<16x256xf32> to vector<8x256xf32>
    %c14_104 = arith.constant 14 : index
    %c10_105 = arith.constant 10 : index
    %c0_106 = arith.constant 0 : index
    %186 = vector.load %arg7[%c14_104, %c10_105, %c0_106] : memref<18x18x256xf32, #tpu.memory_space<vmem>>, vector<1x8x256xf32>
    %187 = vector.shape_cast %186 : vector<1x8x256xf32> to vector<8x256xf32>
    %188 = vector.shape_cast %185 : vector<8x256xf32> to vector<1x8x256xf32>
    tpu.vector_store %arg7[%c14_104, %c10_105, %c0_106], %188 {strides = array<i32>} : memref<18x18x256xf32, #tpu.memory_space<vmem>>, vector<1x8x256xf32>,
    %189 = vector.extract_strided_slice %170 {offsets = [32, 0], sizes = [16, 256], strides = [1, 1]} : vector<64x256xf32> to vector<16x256xf32>
    %190 = vector.extract_strided_slice %189 {offsets = [0, 0], sizes = [8, 256], strides = [1, 1]} : vector<16x256xf32> to vector<8x256xf32>
    %c15 = arith.constant 15 : index
    %c0_107 = arith.constant 0 : index
    %c0_108 = arith.constant 0 : index
    %191 = vector.load %arg7[%c15, %c0_107, %c0_108] : memref<18x18x256xf32, #tpu.memory_space<vmem>>, vector<1x8x256xf32>
    %192 = vector.shape_cast %191 : vector<1x8x256xf32> to vector<8x256xf32>
    %193 = vector.shape_cast %190 : vector<8x256xf32> to vector<1x8x256xf32>
    tpu.vector_store %arg7[%c15, %c0_107, %c0_108], %193 {strides = array<i32>} : memref<18x18x256xf32, #tpu.memory_space<vmem>>, vector<1x8x256xf32>,
    %194 = vector.extract_strided_slice %189 {offsets = [8, 0], sizes = [8, 256], strides = [1, 1]} : vector<16x256xf32> to vector<8x256xf32>
    %c15_109 = arith.constant 15 : index
    %c10_110 = arith.constant 10 : index
    %c0_111 = arith.constant 0 : index
    %195 = vector.load %arg7[%c15_109, %c10_110, %c0_111] : memref<18x18x256xf32, #tpu.memory_space<vmem>>, vector<1x8x256xf32>
    %196 = vector.shape_cast %195 : vector<1x8x256xf32> to vector<8x256xf32>
    %197 = vector.shape_cast %194 : vector<8x256xf32> to vector<1x8x256xf32>
    tpu.vector_store %arg7[%c15_109, %c10_110, %c0_111], %197 {strides = array<i32>} : memref<18x18x256xf32, #tpu.memory_space<vmem>>, vector<1x8x256xf32>,
    %198 = vector.extract_strided_slice %170 {offsets = [48, 0], sizes = [16, 256], strides = [1, 1]} : vector<64x256xf32> to vector<16x256xf32>
    %199 = vector.extract_strided_slice %198 {offsets = [0, 0], sizes = [8, 256], strides = [1, 1]} : vector<16x256xf32> to vector<8x256xf32>
    %c16 = arith.constant 16 : index
    %c0_112 = arith.constant 0 : index
    %c0_113 = arith.constant 0 : index
    %200 = vector.load %arg7[%c16, %c0_112, %c0_113] : memref<18x18x256xf32, #tpu.memory_space<vmem>>, vector<1x8x256xf32>
    %201 = vector.shape_cast %200 : vector<1x8x256xf32> to vector<8x256xf32>
    %202 = vector.shape_cast %199 : vector<8x256xf32> to vector<1x8x256xf32>
    tpu.vector_store %arg7[%c16, %c0_112, %c0_113], %202 {strides = array<i32>} : memref<18x18x256xf32, #tpu.memory_space<vmem>>, vector<1x8x256xf32>,
    %203 = vector.extract_strided_slice %198 {offsets = [8, 0], sizes = [8, 256], strides = [1, 1]} : vector<16x256xf32> to vector<8x256xf32>
    %c16_114 = arith.constant 16 : index
    %c10_115 = arith.constant 10 : index
    %c0_116 = arith.constant 0 : index
    %204 = vector.load %arg7[%c16_114, %c10_115, %c0_116] : memref<18x18x256xf32, #tpu.memory_space<vmem>>, vector<1x8x256xf32>
    %205 = vector.shape_cast %204 : vector<1x8x256xf32> to vector<8x256xf32>
    %206 = vector.shape_cast %203 : vector<8x256xf32> to vector<1x8x256xf32>
    tpu.vector_store %arg7[%c16_114, %c10_115, %c0_116], %206 {strides = array<i32>} : memref<18x18x256xf32, #tpu.memory_space<vmem>>, vector<1x8x256xf32>,
    %c6_117 = arith.constant 6 : index
    %c0_118 = arith.constant 0 : index
    %207 = vector.load %arg3[%c6_117, %c0_118] : memref<15x256xf32, #tpu.memory_space<vmem>>, vector<1x256xf32>
    %208 = vector.shape_cast %207 : vector<1x256xf32> to vector<1x256xf32>
    %209 = vector.broadcast %208 : vector<1x256xf32> to vector<8x256xf32>
    %c7_119 = arith.constant 7 : index
    %c0_120 = arith.constant 0 : index
    %210 = vector.load %arg3[%c7_119, %c0_120] : memref<15x256xf32, #tpu.memory_space<vmem>>, vector<1x256xf32>
    %211 = vector.shape_cast %210 : vector<1x256xf32> to vector<1x256xf32>
    %212 = vector.broadcast %211 : vector<1x256xf32> to vector<8x256xf32>
    %c8_121 = arith.constant 8 : index
    %c0_122 = arith.constant 0 : index
    %213 = vector.load %arg3[%c8_121, %c0_122] : memref<15x256xf32, #tpu.memory_space<vmem>>, vector<1x256xf32>
    %214 = vector.shape_cast %213 : vector<1x256xf32> to vector<1x256xf32>
    %215 = vector.broadcast %214 : vector<1x256xf32> to vector<8x256xf32>
    %c9_123 = arith.constant 9 : index
    %c0_124 = arith.constant 0 : index
    %216 = vector.load %arg3[%c9_123, %c0_124] : memref<15x256xf32, #tpu.memory_space<vmem>>, vector<1x256xf32>
    %217 = vector.shape_cast %216 : vector<1x256xf32> to vector<1x256xf32>
    %218 = vector.broadcast %217 : vector<1x256xf32> to vector<8x256xf32>
    %c10_125 = arith.constant 10 : index
    %c0_126 = arith.constant 0 : index
    %219 = vector.load %arg3[%c10_125, %c0_126] : memref<15x256xf32, #tpu.memory_space<vmem>>, vector<1x256xf32>
    %220 = vector.shape_cast %219 : vector<1x256xf32> to vector<1x256xf32>
    %221 = vector.broadcast %220 : vector<1x256xf32> to vector<8x256xf32>
    %c11_127 = arith.constant 11 : index
    %c0_128 = arith.constant 0 : index
    %222 = vector.load %arg3[%c11_127, %c0_128] : memref<15x256xf32, #tpu.memory_space<vmem>>, vector<1x256xf32>
    %223 = vector.shape_cast %222 : vector<1x256xf32> to vector<1x256xf32>
    %224 = vector.broadcast %223 : vector<1x256xf32> to vector<8x256xf32>
    %c12_129 = arith.constant 12 : index
    %c0_130 = arith.constant 0 : index
    %225 = vector.load %arg3[%c12_129, %c0_130] : memref<15x256xf32, #tpu.memory_space<vmem>>, vector<1x256xf32>
    %226 = vector.shape_cast %225 : vector<1x256xf32> to vector<1x256xf32>
    %227 = vector.broadcast %226 : vector<1x256xf32> to vector<8x256xf32>
    %c13_131 = arith.constant 13 : index
    %c0_132 = arith.constant 0 : index
    %228 = vector.load %arg3[%c13_131, %c0_132] : memref<15x256xf32, #tpu.memory_space<vmem>>, vector<1x256xf32>
    %229 = vector.shape_cast %228 : vector<1x256xf32> to vector<1x256xf32>
    %230 = vector.broadcast %229 : vector<1x256xf32> to vector<8x256xf32>
    %c14_133 = arith.constant 14 : index
    %c0_134 = arith.constant 0 : index
    %231 = vector.load %arg3[%c14_133, %c0_134] : memref<15x256xf32, #tpu.memory_space<vmem>>, vector<1x256xf32>
    %232 = vector.shape_cast %231 : vector<1x256xf32> to vector<1x256xf32>
    %233 = vector.broadcast %232 : vector<1x256xf32> to vector<8x256xf32>
    %c3_135 = arith.constant 3 : index
    %c0_136 = arith.constant 0 : index
    %234 = vector.load %arg3[%c3_135, %c0_136] : memref<15x256xf32, #tpu.memory_space<vmem>>, vector<1x256xf32>
    %235 = vector.shape_cast %234 : vector<1x256xf32> to vector<1x256xf32>
    %236 = vector.broadcast %235 : vector<1x256xf32> to vector<8x256xf32>
    %c4_137 = arith.constant 4 : index
    %c0_138 = arith.constant 0 : index
    %237 = vector.load %arg3[%c4_137, %c0_138] : memref<15x256xf32, #tpu.memory_space<vmem>>, vector<1x256xf32>
    %238 = vector.shape_cast %237 : vector<1x256xf32> to vector<1x256xf32>
    %239 = vector.broadcast %238 : vector<1x256xf32> to vector<8x256xf32>
    %c5_139 = arith.constant 5 : index
    %c0_140 = arith.constant 0 : index
    %240 = vector.load %arg3[%c5_139, %c0_140] : memref<15x256xf32, #tpu.memory_space<vmem>>, vector<1x256xf32>
    %241 = vector.shape_cast %240 : vector<1x256xf32> to vector<1x256xf32>
    %242 = vector.broadcast %241 : vector<1x256xf32> to vector<8x256xf32>
    %cst_141 = arith.constant 0.000000e+00 : f32
    %243 = vector.broadcast %cst_141 : f32 to vector<8x256xf32>
    %c0_142 = arith.constant 0 : index
    %c0_143 = arith.constant 0 : index
    %c0_144 = arith.constant 0 : index
    %244 = vector.load %arg7[%c0_142, %c0_143, %c0_144] : memref<18x18x256xf32, #tpu.memory_space<vmem>>, vector<1x18x256xf32>
    %245 = vector.shape_cast %244 : vector<1x18x256xf32> to vector<18x256xf32>
    %246 = vector.extract_strided_slice %245 {offsets = [9, 0], sizes = [8, 256], strides = [1, 1]} : vector<18x256xf32> to vector<8x256xf32>
    %247 = arith.mulf %246, %209 : vector<8x256xf32>
    %248 = arith.addf %243, %247 : vector<8x256xf32>
    %249 = vector.extract_strided_slice %245 {offsets = [0, 0], sizes = [8, 256], strides = [1, 1]} : vector<18x256xf32> to vector<8x256xf32>
    %250 = arith.mulf %249, %212 : vector<8x256xf32>
    %251 = arith.addf %248, %250 : vector<8x256xf32>
    %252 = vector.extract_strided_slice %245 {offsets = [10, 0], sizes = [8, 256], strides = [1, 1]} : vector<18x256xf32> to vector<8x256xf32>
    %253 = arith.mulf %252, %215 : vector<8x256xf32>
    %254 = arith.addf %251, %253 : vector<8x256xf32>
    %c1_145 = arith.constant 1 : index
    %c0_146 = arith.constant 0 : index
    %c0_147 = arith.constant 0 : index
    %255 = vector.load %arg7[%c1_145, %c0_146, %c0_147] : memref<18x18x256xf32, #tpu.memory_space<vmem>>, vector<1x18x256xf32>
    %256 = vector.shape_cast %255 : vector<1x18x256xf32> to vector<18x256xf32>
    %257 = vector.extract_strided_slice %256 {offsets = [9, 0], sizes = [8, 256], strides = [1, 1]} : vector<18x256xf32> to vector<8x256xf32>
    %258 = arith.mulf %257, %218 : vector<8x256xf32>
    %259 = arith.addf %254, %258 : vector<8x256xf32>
    %260 = vector.extract_strided_slice %256 {offsets = [0, 0], sizes = [8, 256], strides = [1, 1]} : vector<18x256xf32> to vector<8x256xf32>
    %261 = arith.mulf %260, %221 : vector<8x256xf32>
    %262 = arith.addf %259, %261 : vector<8x256xf32>
    %263 = vector.extract_strided_slice %256 {offsets = [10, 0], sizes = [8, 256], strides = [1, 1]} : vector<18x256xf32> to vector<8x256xf32>
    %264 = arith.mulf %263, %224 : vector<8x256xf32>
    %265 = arith.addf %262, %264 : vector<8x256xf32>
    %c2_148 = arith.constant 2 : index
    %c0_149 = arith.constant 0 : index
    %c0_150 = arith.constant 0 : index
    %266 = vector.load %arg7[%c2_148, %c0_149, %c0_150] : memref<18x18x256xf32, #tpu.memory_space<vmem>>, vector<1x18x256xf32>
    %267 = vector.shape_cast %266 : vector<1x18x256xf32> to vector<18x256xf32>
    %268 = vector.extract_strided_slice %267 {offsets = [9, 0], sizes = [8, 256], strides = [1, 1]} : vector<18x256xf32> to vector<8x256xf32>
    %269 = arith.mulf %268, %227 : vector<8x256xf32>
    %270 = arith.addf %265, %269 : vector<8x256xf32>
    %271 = vector.extract_strided_slice %267 {offsets = [0, 0], sizes = [8, 256], strides = [1, 1]} : vector<18x256xf32> to vector<8x256xf32>
    %272 = arith.mulf %271, %230 : vector<8x256xf32>
    %273 = arith.addf %270, %272 : vector<8x256xf32>
    %274 = vector.extract_strided_slice %267 {offsets = [10, 0], sizes = [8, 256], strides = [1, 1]} : vector<18x256xf32> to vector<8x256xf32>
    %275 = arith.mulf %274, %233 : vector<8x256xf32>
    %276 = arith.addf %273, %275 : vector<8x256xf32>
    %277 = arith.mulf %276, %236 : vector<8x256xf32>
    %278 = arith.addf %277, %239 : vector<8x256xf32>
    %cst_151 = arith.constant 0.000000e+00 : f32
    %279 = vector.broadcast %cst_151 : f32 to vector<8x256xf32>
    %280 = arith.cmpf oge, %278, %279 : vector<8x256xf32>
    %281 = arith.mulf %278, %242 : vector<8x256xf32>
    %282 = arith.select %280, %278, %281 : vector<8x256xi1>, vector<8x256xf32>
    %c0_152 = arith.constant 0 : index
    %c0_153 = arith.constant 0 : index
    %283 = vector.load %arg8[%c0_152, %c0_153] : memref<64x256xf32, #tpu.memory_space<vmem>>, vector<8x256xf32>
    tpu.vector_store %arg8[%c0_152, %c0_153], %282 {strides = array<i32>} : memref<64x256xf32, #tpu.memory_space<vmem>>, vector<8x256xf32>,
    %cst_154 = arith.constant 0.000000e+00 : f32
    %284 = vector.broadcast %cst_154 : f32 to vector<8x256xf32>
    %c2_155 = arith.constant 2 : index
    %c0_156 = arith.constant 0 : index
    %c0_157 = arith.constant 0 : index
    %285 = vector.load %arg7[%c2_155, %c0_156, %c0_157] : memref<18x18x256xf32, #tpu.memory_space<vmem>>, vector<1x18x256xf32>
    %286 = vector.shape_cast %285 : vector<1x18x256xf32> to vector<18x256xf32>
    %287 = vector.extract_strided_slice %286 {offsets = [9, 0], sizes = [8, 256], strides = [1, 1]} : vector<18x256xf32> to vector<8x256xf32>
    %288 = arith.mulf %287, %209 : vector<8x256xf32>
    %289 = arith.addf %284, %288 : vector<8x256xf32>
    %290 = vector.extract_strided_slice %286 {offsets = [0, 0], sizes = [8, 256], strides = [1, 1]} : vector<18x256xf32> to vector<8x256xf32>
    %291 = arith.mulf %290, %212 : vector<8x256xf32>
    %292 = arith.addf %289, %291 : vector<8x256xf32>
    %293 = vector.extract_strided_slice %286 {offsets = [10, 0], sizes = [8, 256], strides = [1, 1]} : vector<18x256xf32> to vector<8x256xf32>
    %294 = arith.mulf %293, %215 : vector<8x256xf32>
    %295 = arith.addf %292, %294 : vector<8x256xf32>
    %c3_158 = arith.constant 3 : index
    %c0_159 = arith.constant 0 : index
    %c0_160 = arith.constant 0 : index
    %296 = vector.load %arg7[%c3_158, %c0_159, %c0_160] : memref<18x18x256xf32, #tpu.memory_space<vmem>>, vector<1x18x256xf32>
    %297 = vector.shape_cast %296 : vector<1x18x256xf32> to vector<18x256xf32>
    %298 = vector.extract_strided_slice %297 {offsets = [9, 0], sizes = [8, 256], strides = [1, 1]} : vector<18x256xf32> to vector<8x256xf32>
    %299 = arith.mulf %298, %218 : vector<8x256xf32>
    %300 = arith.addf %295, %299 : vector<8x256xf32>
    %301 = vector.extract_strided_slice %297 {offsets = [0, 0], sizes = [8, 256], strides = [1, 1]} : vector<18x256xf32> to vector<8x256xf32>
    %302 = arith.mulf %301, %221 : vector<8x256xf32>
    %303 = arith.addf %300, %302 : vector<8x256xf32>
    %304 = vector.extract_strided_slice %297 {offsets = [10, 0], sizes = [8, 256], strides = [1, 1]} : vector<18x256xf32> to vector<8x256xf32>
    %305 = arith.mulf %304, %224 : vector<8x256xf32>
    %306 = arith.addf %303, %305 : vector<8x256xf32>
    %c4_161 = arith.constant 4 : index
    %c0_162 = arith.constant 0 : index
    %c0_163 = arith.constant 0 : index
    %307 = vector.load %arg7[%c4_161, %c0_162, %c0_163] : memref<18x18x256xf32, #tpu.memory_space<vmem>>, vector<1x18x256xf32>
    %308 = vector.shape_cast %307 : vector<1x18x256xf32> to vector<18x256xf32>
    %309 = vector.extract_strided_slice %308 {offsets = [9, 0], sizes = [8, 256], strides = [1, 1]} : vector<18x256xf32> to vector<8x256xf32>
    %310 = arith.mulf %309, %227 : vector<8x256xf32>
    %311 = arith.addf %306, %310 : vector<8x256xf32>
    %312 = vector.extract_strided_slice %308 {offsets = [0, 0], sizes = [8, 256], strides = [1, 1]} : vector<18x256xf32> to vector<8x256xf32>
    %313 = arith.mulf %312, %230 : vector<8x256xf32>
    %314 = arith.addf %311, %313 : vector<8x256xf32>
    %315 = vector.extract_strided_slice %308 {offsets = [10, 0], sizes = [8, 256], strides = [1, 1]} : vector<18x256xf32> to vector<8x256xf32>
    %316 = arith.mulf %315, %233 : vector<8x256xf32>
    %317 = arith.addf %314, %316 : vector<8x256xf32>
    %318 = arith.mulf %317, %236 : vector<8x256xf32>
    %319 = arith.addf %318, %239 : vector<8x256xf32>
    %cst_164 = arith.constant 0.000000e+00 : f32
    %320 = vector.broadcast %cst_164 : f32 to vector<8x256xf32>
    %321 = arith.cmpf oge, %319, %320 : vector<8x256xf32>
    %322 = arith.mulf %319, %242 : vector<8x256xf32>
    %323 = arith.select %321, %319, %322 : vector<8x256xi1>, vector<8x256xf32>
    %c8_165 = arith.constant 8 : index
    %c0_166 = arith.constant 0 : index
    %324 = vector.load %arg8[%c8_165, %c0_166] : memref<64x256xf32, #tpu.memory_space<vmem>>, vector<8x256xf32>
    tpu.vector_store %arg8[%c8_165, %c0_166], %323 {strides = array<i32>} : memref<64x256xf32, #tpu.memory_space<vmem>>, vector<8x256xf32>,
    %cst_167 = arith.constant 0.000000e+00 : f32
    %325 = vector.broadcast %cst_167 : f32 to vector<8x256xf32>
    %c4_168 = arith.constant 4 : index
    %c0_169 = arith.constant 0 : index
    %c0_170 = arith.constant 0 : index
    %326 = vector.load %arg7[%c4_168, %c0_169, %c0_170] : memref<18x18x256xf32, #tpu.memory_space<vmem>>, vector<1x18x256xf32>
    %327 = vector.shape_cast %326 : vector<1x18x256xf32> to vector<18x256xf32>
    %328 = vector.extract_strided_slice %327 {offsets = [9, 0], sizes = [8, 256], strides = [1, 1]} : vector<18x256xf32> to vector<8x256xf32>
    %329 = arith.mulf %328, %209 : vector<8x256xf32>
    %330 = arith.addf %325, %329 : vector<8x256xf32>
    %331 = vector.extract_strided_slice %327 {offsets = [0, 0], sizes = [8, 256], strides = [1, 1]} : vector<18x256xf32> to vector<8x256xf32>
    %332 = arith.mulf %331, %212 : vector<8x256xf32>
    %333 = arith.addf %330, %332 : vector<8x256xf32>
    %334 = vector.extract_strided_slice %327 {offsets = [10, 0], sizes = [8, 256], strides = [1, 1]} : vector<18x256xf32> to vector<8x256xf32>
    %335 = arith.mulf %334, %215 : vector<8x256xf32>
    %336 = arith.addf %333, %335 : vector<8x256xf32>
    %c5_171 = arith.constant 5 : index
    %c0_172 = arith.constant 0 : index
    %c0_173 = arith.constant 0 : index
    %337 = vector.load %arg7[%c5_171, %c0_172, %c0_173] : memref<18x18x256xf32, #tpu.memory_space<vmem>>, vector<1x18x256xf32>
    %338 = vector.shape_cast %337 : vector<1x18x256xf32> to vector<18x256xf32>
    %339 = vector.extract_strided_slice %338 {offsets = [9, 0], sizes = [8, 256], strides = [1, 1]} : vector<18x256xf32> to vector<8x256xf32>
    %340 = arith.mulf %339, %218 : vector<8x256xf32>
    %341 = arith.addf %336, %340 : vector<8x256xf32>
    %342 = vector.extract_strided_slice %338 {offsets = [0, 0], sizes = [8, 256], strides = [1, 1]} : vector<18x256xf32> to vector<8x256xf32>
    %343 = arith.mulf %342, %221 : vector<8x256xf32>
    %344 = arith.addf %341, %343 : vector<8x256xf32>
    %345 = vector.extract_strided_slice %338 {offsets = [10, 0], sizes = [8, 256], strides = [1, 1]} : vector<18x256xf32> to vector<8x256xf32>
    %346 = arith.mulf %345, %224 : vector<8x256xf32>
    %347 = arith.addf %344, %346 : vector<8x256xf32>
    %c6_174 = arith.constant 6 : index
    %c0_175 = arith.constant 0 : index
    %c0_176 = arith.constant 0 : index
    %348 = vector.load %arg7[%c6_174, %c0_175, %c0_176] : memref<18x18x256xf32, #tpu.memory_space<vmem>>, vector<1x18x256xf32>
    %349 = vector.shape_cast %348 : vector<1x18x256xf32> to vector<18x256xf32>
    %350 = vector.extract_strided_slice %349 {offsets = [9, 0], sizes = [8, 256], strides = [1, 1]} : vector<18x256xf32> to vector<8x256xf32>
    %351 = arith.mulf %350, %227 : vector<8x256xf32>
    %352 = arith.addf %347, %351 : vector<8x256xf32>
    %353 = vector.extract_strided_slice %349 {offsets = [0, 0], sizes = [8, 256], strides = [1, 1]} : vector<18x256xf32> to vector<8x256xf32>
    %354 = arith.mulf %353, %230 : vector<8x256xf32>
    %355 = arith.addf %352, %354 : vector<8x256xf32>
    %356 = vector.extract_strided_slice %349 {offsets = [10, 0], sizes = [8, 256], strides = [1, 1]} : vector<18x256xf32> to vector<8x256xf32>
    %357 = arith.mulf %356, %233 : vector<8x256xf32>
    %358 = arith.addf %355, %357 : vector<8x256xf32>
    %359 = arith.mulf %358, %236 : vector<8x256xf32>
    %360 = arith.addf %359, %239 : vector<8x256xf32>
    %cst_177 = arith.constant 0.000000e+00 : f32
    %361 = vector.broadcast %cst_177 : f32 to vector<8x256xf32>
    %362 = arith.cmpf oge, %360, %361 : vector<8x256xf32>
    %363 = arith.mulf %360, %242 : vector<8x256xf32>
    %364 = arith.select %362, %360, %363 : vector<8x256xi1>, vector<8x256xf32>
    %c16_178 = arith.constant 16 : index
    %c0_179 = arith.constant 0 : index
    %365 = vector.load %arg8[%c16_178, %c0_179] : memref<64x256xf32, #tpu.memory_space<vmem>>, vector<8x256xf32>
    tpu.vector_store %arg8[%c16_178, %c0_179], %364 {strides = array<i32>} : memref<64x256xf32, #tpu.memory_space<vmem>>, vector<8x256xf32>,
    %cst_180 = arith.constant 0.000000e+00 : f32
    %366 = vector.broadcast %cst_180 : f32 to vector<8x256xf32>
    %c6_181 = arith.constant 6 : index
    %c0_182 = arith.constant 0 : index
    %c0_183 = arith.constant 0 : index
    %367 = vector.load %arg7[%c6_181, %c0_182, %c0_183] : memref<18x18x256xf32, #tpu.memory_space<vmem>>, vector<1x18x256xf32>
    %368 = vector.shape_cast %367 : vector<1x18x256xf32> to vector<18x256xf32>
    %369 = vector.extract_strided_slice %368 {offsets = [9, 0], sizes = [8, 256], strides = [1, 1]} : vector<18x256xf32> to vector<8x256xf32>
    %370 = arith.mulf %369, %209 : vector<8x256xf32>
    %371 = arith.addf %366, %370 : vector<8x256xf32>
    %372 = vector.extract_strided_slice %368 {offsets = [0, 0], sizes = [8, 256], strides = [1, 1]} : vector<18x256xf32> to vector<8x256xf32>
    %373 = arith.mulf %372, %212 : vector<8x256xf32>
    %374 = arith.addf %371, %373 : vector<8x256xf32>
    %375 = vector.extract_strided_slice %368 {offsets = [10, 0], sizes = [8, 256], strides = [1, 1]} : vector<18x256xf32> to vector<8x256xf32>
    %376 = arith.mulf %375, %215 : vector<8x256xf32>
    %377 = arith.addf %374, %376 : vector<8x256xf32>
    %c7_184 = arith.constant 7 : index
    %c0_185 = arith.constant 0 : index
    %c0_186 = arith.constant 0 : index
    %378 = vector.load %arg7[%c7_184, %c0_185, %c0_186] : memref<18x18x256xf32, #tpu.memory_space<vmem>>, vector<1x18x256xf32>
    %379 = vector.shape_cast %378 : vector<1x18x256xf32> to vector<18x256xf32>
    %380 = vector.extract_strided_slice %379 {offsets = [9, 0], sizes = [8, 256], strides = [1, 1]} : vector<18x256xf32> to vector<8x256xf32>
    %381 = arith.mulf %380, %218 : vector<8x256xf32>
    %382 = arith.addf %377, %381 : vector<8x256xf32>
    %383 = vector.extract_strided_slice %379 {offsets = [0, 0], sizes = [8, 256], strides = [1, 1]} : vector<18x256xf32> to vector<8x256xf32>
    %384 = arith.mulf %383, %221 : vector<8x256xf32>
    %385 = arith.addf %382, %384 : vector<8x256xf32>
    %386 = vector.extract_strided_slice %379 {offsets = [10, 0], sizes = [8, 256], strides = [1, 1]} : vector<18x256xf32> to vector<8x256xf32>
    %387 = arith.mulf %386, %224 : vector<8x256xf32>
    %388 = arith.addf %385, %387 : vector<8x256xf32>
    %c8_187 = arith.constant 8 : index
    %c0_188 = arith.constant 0 : index
    %c0_189 = arith.constant 0 : index
    %389 = vector.load %arg7[%c8_187, %c0_188, %c0_189] : memref<18x18x256xf32, #tpu.memory_space<vmem>>, vector<1x18x256xf32>
    %390 = vector.shape_cast %389 : vector<1x18x256xf32> to vector<18x256xf32>
    %391 = vector.extract_strided_slice %390 {offsets = [9, 0], sizes = [8, 256], strides = [1, 1]} : vector<18x256xf32> to vector<8x256xf32>
    %392 = arith.mulf %391, %227 : vector<8x256xf32>
    %393 = arith.addf %388, %392 : vector<8x256xf32>
    %394 = vector.extract_strided_slice %390 {offsets = [0, 0], sizes = [8, 256], strides = [1, 1]} : vector<18x256xf32> to vector<8x256xf32>
    %395 = arith.mulf %394, %230 : vector<8x256xf32>
    %396 = arith.addf %393, %395 : vector<8x256xf32>
    %397 = vector.extract_strided_slice %390 {offsets = [10, 0], sizes = [8, 256], strides = [1, 1]} : vector<18x256xf32> to vector<8x256xf32>
    %398 = arith.mulf %397, %233 : vector<8x256xf32>
    %399 = arith.addf %396, %398 : vector<8x256xf32>
    %400 = arith.mulf %399, %236 : vector<8x256xf32>
    %401 = arith.addf %400, %239 : vector<8x256xf32>
    %cst_190 = arith.constant 0.000000e+00 : f32
    %402 = vector.broadcast %cst_190 : f32 to vector<8x256xf32>
    %403 = arith.cmpf oge, %401, %402 : vector<8x256xf32>
    %404 = arith.mulf %401, %242 : vector<8x256xf32>
    %405 = arith.select %403, %401, %404 : vector<8x256xi1>, vector<8x256xf32>
    %c24 = arith.constant 24 : index
    %c0_191 = arith.constant 0 : index
    %406 = vector.load %arg8[%c24, %c0_191] : memref<64x256xf32, #tpu.memory_space<vmem>>, vector<8x256xf32>
    tpu.vector_store %arg8[%c24, %c0_191], %405 {strides = array<i32>} : memref<64x256xf32, #tpu.memory_space<vmem>>, vector<8x256xf32>,
    %cst_192 = arith.constant 0.000000e+00 : f32
    %407 = vector.broadcast %cst_192 : f32 to vector<8x256xf32>
    %c8_193 = arith.constant 8 : index
    %c0_194 = arith.constant 0 : index
    %c0_195 = arith.constant 0 : index
    %408 = vector.load %arg7[%c8_193, %c0_194, %c0_195] : memref<18x18x256xf32, #tpu.memory_space<vmem>>, vector<1x18x256xf32>
    %409 = vector.shape_cast %408 : vector<1x18x256xf32> to vector<18x256xf32>
    %410 = vector.extract_strided_slice %409 {offsets = [9, 0], sizes = [8, 256], strides = [1, 1]} : vector<18x256xf32> to vector<8x256xf32>
    %411 = arith.mulf %410, %209 : vector<8x256xf32>
    %412 = arith.addf %407, %411 : vector<8x256xf32>
    %413 = vector.extract_strided_slice %409 {offsets = [0, 0], sizes = [8, 256], strides = [1, 1]} : vector<18x256xf32> to vector<8x256xf32>
    %414 = arith.mulf %413, %212 : vector<8x256xf32>
    %415 = arith.addf %412, %414 : vector<8x256xf32>
    %416 = vector.extract_strided_slice %409 {offsets = [10, 0], sizes = [8, 256], strides = [1, 1]} : vector<18x256xf32> to vector<8x256xf32>
    %417 = arith.mulf %416, %215 : vector<8x256xf32>
    %418 = arith.addf %415, %417 : vector<8x256xf32>
    %c9_196 = arith.constant 9 : index
    %c0_197 = arith.constant 0 : index
    %c0_198 = arith.constant 0 : index
    %419 = vector.load %arg7[%c9_196, %c0_197, %c0_198] : memref<18x18x256xf32, #tpu.memory_space<vmem>>, vector<1x18x256xf32>
    %420 = vector.shape_cast %419 : vector<1x18x256xf32> to vector<18x256xf32>
    %421 = vector.extract_strided_slice %420 {offsets = [9, 0], sizes = [8, 256], strides = [1, 1]} : vector<18x256xf32> to vector<8x256xf32>
    %422 = arith.mulf %421, %218 : vector<8x256xf32>
    %423 = arith.addf %418, %422 : vector<8x256xf32>
    %424 = vector.extract_strided_slice %420 {offsets = [0, 0], sizes = [8, 256], strides = [1, 1]} : vector<18x256xf32> to vector<8x256xf32>
    %425 = arith.mulf %424, %221 : vector<8x256xf32>
    %426 = arith.addf %423, %425 : vector<8x256xf32>
    %427 = vector.extract_strided_slice %420 {offsets = [10, 0], sizes = [8, 256], strides = [1, 1]} : vector<18x256xf32> to vector<8x256xf32>
    %428 = arith.mulf %427, %224 : vector<8x256xf32>
    %429 = arith.addf %426, %428 : vector<8x256xf32>
    %c10_199 = arith.constant 10 : index
    %c0_200 = arith.constant 0 : index
    %c0_201 = arith.constant 0 : index
    %430 = vector.load %arg7[%c10_199, %c0_200, %c0_201] : memref<18x18x256xf32, #tpu.memory_space<vmem>>, vector<1x18x256xf32>
    %431 = vector.shape_cast %430 : vector<1x18x256xf32> to vector<18x256xf32>
    %432 = vector.extract_strided_slice %431 {offsets = [9, 0], sizes = [8, 256], strides = [1, 1]} : vector<18x256xf32> to vector<8x256xf32>
    %433 = arith.mulf %432, %227 : vector<8x256xf32>
    %434 = arith.addf %429, %433 : vector<8x256xf32>
    %435 = vector.extract_strided_slice %431 {offsets = [0, 0], sizes = [8, 256], strides = [1, 1]} : vector<18x256xf32> to vector<8x256xf32>
    %436 = arith.mulf %435, %230 : vector<8x256xf32>
    %437 = arith.addf %434, %436 : vector<8x256xf32>
    %438 = vector.extract_strided_slice %431 {offsets = [10, 0], sizes = [8, 256], strides = [1, 1]} : vector<18x256xf32> to vector<8x256xf32>
    %439 = arith.mulf %438, %233 : vector<8x256xf32>
    %440 = arith.addf %437, %439 : vector<8x256xf32>
    %441 = arith.mulf %440, %236 : vector<8x256xf32>
    %442 = arith.addf %441, %239 : vector<8x256xf32>
    %cst_202 = arith.constant 0.000000e+00 : f32
    %443 = vector.broadcast %cst_202 : f32 to vector<8x256xf32>
    %444 = arith.cmpf oge, %442, %443 : vector<8x256xf32>
    %445 = arith.mulf %442, %242 : vector<8x256xf32>
    %446 = arith.select %444, %442, %445 : vector<8x256xi1>, vector<8x256xf32>
    %c32 = arith.constant 32 : index
    %c0_203 = arith.constant 0 : index
    %447 = vector.load %arg8[%c32, %c0_203] : memref<64x256xf32, #tpu.memory_space<vmem>>, vector<8x256xf32>
    tpu.vector_store %arg8[%c32, %c0_203], %446 {strides = array<i32>} : memref<64x256xf32, #tpu.memory_space<vmem>>, vector<8x256xf32>,
    %cst_204 = arith.constant 0.000000e+00 : f32
    %448 = vector.broadcast %cst_204 : f32 to vector<8x256xf32>
    %c10_205 = arith.constant 10 : index
    %c0_206 = arith.constant 0 : index
    %c0_207 = arith.constant 0 : index
    %449 = vector.load %arg7[%c10_205, %c0_206, %c0_207] : memref<18x18x256xf32, #tpu.memory_space<vmem>>, vector<1x18x256xf32>
    %450 = vector.shape_cast %449 : vector<1x18x256xf32> to vector<18x256xf32>
    %451 = vector.extract_strided_slice %450 {offsets = [9, 0], sizes = [8, 256], strides = [1, 1]} : vector<18x256xf32> to vector<8x256xf32>
    %452 = arith.mulf %451, %209 : vector<8x256xf32>
    %453 = arith.addf %448, %452 : vector<8x256xf32>
    %454 = vector.extract_strided_slice %450 {offsets = [0, 0], sizes = [8, 256], strides = [1, 1]} : vector<18x256xf32> to vector<8x256xf32>
    %455 = arith.mulf %454, %212 : vector<8x256xf32>
    %456 = arith.addf %453, %455 : vector<8x256xf32>
    %457 = vector.extract_strided_slice %450 {offsets = [10, 0], sizes = [8, 256], strides = [1, 1]} : vector<18x256xf32> to vector<8x256xf32>
    %458 = arith.mulf %457, %215 : vector<8x256xf32>
    %459 = arith.addf %456, %458 : vector<8x256xf32>
    %c11_208 = arith.constant 11 : index
    %c0_209 = arith.constant 0 : index
    %c0_210 = arith.constant 0 : index
    %460 = vector.load %arg7[%c11_208, %c0_209, %c0_210] : memref<18x18x256xf32, #tpu.memory_space<vmem>>, vector<1x18x256xf32>
    %461 = vector.shape_cast %460 : vector<1x18x256xf32> to vector<18x256xf32>
    %462 = vector.extract_strided_slice %461 {offsets = [9, 0], sizes = [8, 256], strides = [1, 1]} : vector<18x256xf32> to vector<8x256xf32>
    %463 = arith.mulf %462, %218 : vector<8x256xf32>
    %464 = arith.addf %459, %463 : vector<8x256xf32>
    %465 = vector.extract_strided_slice %461 {offsets = [0, 0], sizes = [8, 256], strides = [1, 1]} : vector<18x256xf32> to vector<8x256xf32>
    %466 = arith.mulf %465, %221 : vector<8x256xf32>
    %467 = arith.addf %464, %466 : vector<8x256xf32>
    %468 = vector.extract_strided_slice %461 {offsets = [10, 0], sizes = [8, 256], strides = [1, 1]} : vector<18x256xf32> to vector<8x256xf32>
    %469 = arith.mulf %468, %224 : vector<8x256xf32>
    %470 = arith.addf %467, %469 : vector<8x256xf32>
    %c12_211 = arith.constant 12 : index
    %c0_212 = arith.constant 0 : index
    %c0_213 = arith.constant 0 : index
    %471 = vector.load %arg7[%c12_211, %c0_212, %c0_213] : memref<18x18x256xf32, #tpu.memory_space<vmem>>, vector<1x18x256xf32>
    %472 = vector.shape_cast %471 : vector<1x18x256xf32> to vector<18x256xf32>
    %473 = vector.extract_strided_slice %472 {offsets = [9, 0], sizes = [8, 256], strides = [1, 1]} : vector<18x256xf32> to vector<8x256xf32>
    %474 = arith.mulf %473, %227 : vector<8x256xf32>
    %475 = arith.addf %470, %474 : vector<8x256xf32>
    %476 = vector.extract_strided_slice %472 {offsets = [0, 0], sizes = [8, 256], strides = [1, 1]} : vector<18x256xf32> to vector<8x256xf32>
    %477 = arith.mulf %476, %230 : vector<8x256xf32>
    %478 = arith.addf %475, %477 : vector<8x256xf32>
    %479 = vector.extract_strided_slice %472 {offsets = [10, 0], sizes = [8, 256], strides = [1, 1]} : vector<18x256xf32> to vector<8x256xf32>
    %480 = arith.mulf %479, %233 : vector<8x256xf32>
    %481 = arith.addf %478, %480 : vector<8x256xf32>
    %482 = arith.mulf %481, %236 : vector<8x256xf32>
    %483 = arith.addf %482, %239 : vector<8x256xf32>
    %cst_214 = arith.constant 0.000000e+00 : f32
    %484 = vector.broadcast %cst_214 : f32 to vector<8x256xf32>
    %485 = arith.cmpf oge, %483, %484 : vector<8x256xf32>
    %486 = arith.mulf %483, %242 : vector<8x256xf32>
    %487 = arith.select %485, %483, %486 : vector<8x256xi1>, vector<8x256xf32>
    %c40 = arith.constant 40 : index
    %c0_215 = arith.constant 0 : index
    %488 = vector.load %arg8[%c40, %c0_215] : memref<64x256xf32, #tpu.memory_space<vmem>>, vector<8x256xf32>
    tpu.vector_store %arg8[%c40, %c0_215], %487 {strides = array<i32>} : memref<64x256xf32, #tpu.memory_space<vmem>>, vector<8x256xf32>,
    %cst_216 = arith.constant 0.000000e+00 : f32
    %489 = vector.broadcast %cst_216 : f32 to vector<8x256xf32>
    %c12_217 = arith.constant 12 : index
    %c0_218 = arith.constant 0 : index
    %c0_219 = arith.constant 0 : index
    %490 = vector.load %arg7[%c12_217, %c0_218, %c0_219] : memref<18x18x256xf32, #tpu.memory_space<vmem>>, vector<1x18x256xf32>
    %491 = vector.shape_cast %490 : vector<1x18x256xf32> to vector<18x256xf32>
    %492 = vector.extract_strided_slice %491 {offsets = [9, 0], sizes = [8, 256], strides = [1, 1]} : vector<18x256xf32> to vector<8x256xf32>
    %493 = arith.mulf %492, %209 : vector<8x256xf32>
    %494 = arith.addf %489, %493 : vector<8x256xf32>
    %495 = vector.extract_strided_slice %491 {offsets = [0, 0], sizes = [8, 256], strides = [1, 1]} : vector<18x256xf32> to vector<8x256xf32>
    %496 = arith.mulf %495, %212 : vector<8x256xf32>
    %497 = arith.addf %494, %496 : vector<8x256xf32>
    %498 = vector.extract_strided_slice %491 {offsets = [10, 0], sizes = [8, 256], strides = [1, 1]} : vector<18x256xf32> to vector<8x256xf32>
    %499 = arith.mulf %498, %215 : vector<8x256xf32>
    %500 = arith.addf %497, %499 : vector<8x256xf32>
    %c13_220 = arith.constant 13 : index
    %c0_221 = arith.constant 0 : index
    %c0_222 = arith.constant 0 : index
    %501 = vector.load %arg7[%c13_220, %c0_221, %c0_222] : memref<18x18x256xf32, #tpu.memory_space<vmem>>, vector<1x18x256xf32>
    %502 = vector.shape_cast %501 : vector<1x18x256xf32> to vector<18x256xf32>
    %503 = vector.extract_strided_slice %502 {offsets = [9, 0], sizes = [8, 256], strides = [1, 1]} : vector<18x256xf32> to vector<8x256xf32>
    %504 = arith.mulf %503, %218 : vector<8x256xf32>
    %505 = arith.addf %500, %504 : vector<8x256xf32>
    %506 = vector.extract_strided_slice %502 {offsets = [0, 0], sizes = [8, 256], strides = [1, 1]} : vector<18x256xf32> to vector<8x256xf32>
    %507 = arith.mulf %506, %221 : vector<8x256xf32>
    %508 = arith.addf %505, %507 : vector<8x256xf32>
    %509 = vector.extract_strided_slice %502 {offsets = [10, 0], sizes = [8, 256], strides = [1, 1]} : vector<18x256xf32> to vector<8x256xf32>
    %510 = arith.mulf %509, %224 : vector<8x256xf32>
    %511 = arith.addf %508, %510 : vector<8x256xf32>
    %c14_223 = arith.constant 14 : index
    %c0_224 = arith.constant 0 : index
    %c0_225 = arith.constant 0 : index
    %512 = vector.load %arg7[%c14_223, %c0_224, %c0_225] : memref<18x18x256xf32, #tpu.memory_space<vmem>>, vector<1x18x256xf32>
    %513 = vector.shape_cast %512 : vector<1x18x256xf32> to vector<18x256xf32>
    %514 = vector.extract_strided_slice %513 {offsets = [9, 0], sizes = [8, 256], strides = [1, 1]} : vector<18x256xf32> to vector<8x256xf32>
    %515 = arith.mulf %514, %227 : vector<8x256xf32>
    %516 = arith.addf %511, %515 : vector<8x256xf32>
    %517 = vector.extract_strided_slice %513 {offsets = [0, 0], sizes = [8, 256], strides = [1, 1]} : vector<18x256xf32> to vector<8x256xf32>
    %518 = arith.mulf %517, %230 : vector<8x256xf32>
    %519 = arith.addf %516, %518 : vector<8x256xf32>
    %520 = vector.extract_strided_slice %513 {offsets = [10, 0], sizes = [8, 256], strides = [1, 1]} : vector<18x256xf32> to vector<8x256xf32>
    %521 = arith.mulf %520, %233 : vector<8x256xf32>
    %522 = arith.addf %519, %521 : vector<8x256xf32>
    %523 = arith.mulf %522, %236 : vector<8x256xf32>
    %524 = arith.addf %523, %239 : vector<8x256xf32>
    %cst_226 = arith.constant 0.000000e+00 : f32
    %525 = vector.broadcast %cst_226 : f32 to vector<8x256xf32>
    %526 = arith.cmpf oge, %524, %525 : vector<8x256xf32>
    %527 = arith.mulf %524, %242 : vector<8x256xf32>
    %528 = arith.select %526, %524, %527 : vector<8x256xi1>, vector<8x256xf32>
    %c48 = arith.constant 48 : index
    %c0_227 = arith.constant 0 : index
    %529 = vector.load %arg8[%c48, %c0_227] : memref<64x256xf32, #tpu.memory_space<vmem>>, vector<8x256xf32>
    tpu.vector_store %arg8[%c48, %c0_227], %528 {strides = array<i32>} : memref<64x256xf32, #tpu.memory_space<vmem>>, vector<8x256xf32>,
    %cst_228 = arith.constant 0.000000e+00 : f32
    %530 = vector.broadcast %cst_228 : f32 to vector<8x256xf32>
    %c14_229 = arith.constant 14 : index
    %c0_230 = arith.constant 0 : index
    %c0_231 = arith.constant 0 : index
    %531 = vector.load %arg7[%c14_229, %c0_230, %c0_231] : memref<18x18x256xf32, #tpu.memory_space<vmem>>, vector<1x18x256xf32>
    %532 = vector.shape_cast %531 : vector<1x18x256xf32> to vector<18x256xf32>
    %533 = vector.extract_strided_slice %532 {offsets = [9, 0], sizes = [8, 256], strides = [1, 1]} : vector<18x256xf32> to vector<8x256xf32>
    %534 = arith.mulf %533, %209 : vector<8x256xf32>
    %535 = arith.addf %530, %534 : vector<8x256xf32>
    %536 = vector.extract_strided_slice %532 {offsets = [0, 0], sizes = [8, 256], strides = [1, 1]} : vector<18x256xf32> to vector<8x256xf32>
    %537 = arith.mulf %536, %212 : vector<8x256xf32>
    %538 = arith.addf %535, %537 : vector<8x256xf32>
    %539 = vector.extract_strided_slice %532 {offsets = [10, 0], sizes = [8, 256], strides = [1, 1]} : vector<18x256xf32> to vector<8x256xf32>
    %540 = arith.mulf %539, %215 : vector<8x256xf32>
    %541 = arith.addf %538, %540 : vector<8x256xf32>
    %c15_232 = arith.constant 15 : index
    %c0_233 = arith.constant 0 : index
    %c0_234 = arith.constant 0 : index
    %542 = vector.load %arg7[%c15_232, %c0_233, %c0_234] : memref<18x18x256xf32, #tpu.memory_space<vmem>>, vector<1x18x256xf32>
    %543 = vector.shape_cast %542 : vector<1x18x256xf32> to vector<18x256xf32>
    %544 = vector.extract_strided_slice %543 {offsets = [9, 0], sizes = [8, 256], strides = [1, 1]} : vector<18x256xf32> to vector<8x256xf32>
    %545 = arith.mulf %544, %218 : vector<8x256xf32>
    %546 = arith.addf %541, %545 : vector<8x256xf32>
    %547 = vector.extract_strided_slice %543 {offsets = [0, 0], sizes = [8, 256], strides = [1, 1]} : vector<18x256xf32> to vector<8x256xf32>
    %548 = arith.mulf %547, %221 : vector<8x256xf32>
    %549 = arith.addf %546, %548 : vector<8x256xf32>
    %550 = vector.extract_strided_slice %543 {offsets = [10, 0], sizes = [8, 256], strides = [1, 1]} : vector<18x256xf32> to vector<8x256xf32>
    %551 = arith.mulf %550, %224 : vector<8x256xf32>
    %552 = arith.addf %549, %551 : vector<8x256xf32>
    %c16_235 = arith.constant 16 : index
    %c0_236 = arith.constant 0 : index
    %c0_237 = arith.constant 0 : index
    %553 = vector.load %arg7[%c16_235, %c0_236, %c0_237] : memref<18x18x256xf32, #tpu.memory_space<vmem>>, vector<1x18x256xf32>
    %554 = vector.shape_cast %553 : vector<1x18x256xf32> to vector<18x256xf32>
    %555 = vector.extract_strided_slice %554 {offsets = [9, 0], sizes = [8, 256], strides = [1, 1]} : vector<18x256xf32> to vector<8x256xf32>
    %556 = arith.mulf %555, %227 : vector<8x256xf32>
    %557 = arith.addf %552, %556 : vector<8x256xf32>
    %558 = vector.extract_strided_slice %554 {offsets = [0, 0], sizes = [8, 256], strides = [1, 1]} : vector<18x256xf32> to vector<8x256xf32>
    %559 = arith.mulf %558, %230 : vector<8x256xf32>
    %560 = arith.addf %557, %559 : vector<8x256xf32>
    %561 = vector.extract_strided_slice %554 {offsets = [10, 0], sizes = [8, 256], strides = [1, 1]} : vector<18x256xf32> to vector<8x256xf32>
    %562 = arith.mulf %561, %233 : vector<8x256xf32>
    %563 = arith.addf %560, %562 : vector<8x256xf32>
    %564 = arith.mulf %563, %236 : vector<8x256xf32>
    %565 = arith.addf %564, %239 : vector<8x256xf32>
    %cst_238 = arith.constant 0.000000e+00 : f32
    %566 = vector.broadcast %cst_238 : f32 to vector<8x256xf32>
    %567 = arith.cmpf oge, %565, %566 : vector<8x256xf32>
    %568 = arith.mulf %565, %242 : vector<8x256xf32>
    %569 = arith.select %567, %565, %568 : vector<8x256xi1>, vector<8x256xf32>
    %c56 = arith.constant 56 : index
    %c0_239 = arith.constant 0 : index
    %570 = vector.load %arg8[%c56, %c0_239] : memref<64x256xf32, #tpu.memory_space<vmem>>, vector<8x256xf32>
    tpu.vector_store %arg8[%c56, %c0_239], %569 {strides = array<i32>} : memref<64x256xf32, #tpu.memory_space<vmem>>, vector<8x256xf32>,
    %c0_240 = arith.constant 0 : index
    %c0_241 = arith.constant 0 : index
    %571 = vector.load %arg5[%c0_240, %c0_241] : memref<2x128xf32, #tpu.memory_space<vmem>>, vector<1x128xf32>
    %c1_242 = arith.constant 1 : index
    %c0_243 = arith.constant 0 : index
    %572 = vector.load %arg5[%c1_242, %c0_243] : memref<2x128xf32, #tpu.memory_space<vmem>>, vector<1x128xf32>
    %c0_244 = arith.constant 0 : index
    %c0_245 = arith.constant 0 : index
    %573 = vector.load %arg8[%c0_244, %c0_245] : memref<64x256xf32, #tpu.memory_space<vmem>>, vector<64x256xf32>
    %574 = arith.truncf %573 : vector<64x256xf32> to vector<64x256xbf16>
    %c0_246 = arith.constant 0 : index
    %c0_247 = arith.constant 0 : index
    %575 = vector.load %arg4[%c0_246, %c0_247] : memref<256x128xbf16, #tpu.memory_space<vmem>>, vector<256x128xbf16>
    %cst_248 = arith.constant dense<0.000000e+00> : vector<64x128xf32>
    %576 = tpu.matmul %574, %575, %cst_248 {dimension_numbers = #tpu.dot_dimension_numbers<[1], [0], [0], [1], [0, 0, 1, 1], [], []>} : vector<64x256xbf16>, vector<256x128xbf16>, vector<64x128xf32> -> vector<64x128xf32>
    %577 = vector.broadcast %571 : vector<1x128xf32> to vector<64x128xf32>
    %578 = arith.mulf %576, %577 : vector<64x128xf32>
    %579 = vector.broadcast %572 : vector<1x128xf32> to vector<64x128xf32>
    %580 = arith.addf %578, %579 : vector<64x128xf32>
    %c0_249 = arith.constant 0 : index
    %c0_250 = arith.constant 0 : index
    %c0_251 = arith.constant 0 : index
    %581 = vector.load %arg6[%c0_249, %c0_250, %c0_251] : memref<1x64x128xf32, #tpu.memory_space<vmem>>, vector<1x64x128xf32>
    %582 = vector.shape_cast %581 : vector<1x64x128xf32> to vector<64x128xf32>
    %583 = vector.shape_cast %580 : vector<64x128xf32> to vector<1x64x128xf32>
    tpu.vector_store %arg6[%c0_249, %c0_250, %c0_251], %583 {strides = array<i32>} : memref<1x64x128xf32, #tpu.memory_space<vmem>>, vector<1x64x128xf32>,
    return
  }
  func.func @transform_0(%arg0: i32) -> (i32, i32, i32) {
    %c0_i32 = arith.constant 0 : i32
    %c0_i32_0 = arith.constant 0 : i32
    %c0_i32_1 = arith.constant 0 : i32
    return %arg0, %c0_i32, %c0_i32_0 : i32, i32, i32
  }
  func.func @transform_1(%arg0: i32) -> (i32, i32) {
    %c0_i32 = arith.constant 0 : i32
    %c0_i32_0 = arith.constant 0 : i32
    %c0_i32_1 = arith.constant 0 : i32
    return %c0_i32, %c0_i32_0 : i32, i32
  }
  func.func @transform_2(%arg0: i32) -> (i32, i32) {
    %c0_i32 = arith.constant 0 : i32
    %c0_i32_0 = arith.constant 0 : i32
    %c0_i32_1 = arith.constant 0 : i32
    return %c0_i32, %c0_i32_0 : i32, i32
  }
  func.func @transform_3(%arg0: i32) -> (i32, i32) {
    %c0_i32 = arith.constant 0 : i32
    %c0_i32_0 = arith.constant 0 : i32
    %c0_i32_1 = arith.constant 0 : i32
    return %c0_i32, %c0_i32_0 : i32, i32
  }
  func.func @transform_4(%arg0: i32) -> (i32, i32) {
    %c0_i32 = arith.constant 0 : i32
    %c0_i32_0 = arith.constant 0 : i32
    %c0_i32_1 = arith.constant 0 : i32
    return %c0_i32, %c0_i32_0 : i32, i32
  }
  func.func @transform_5(%arg0: i32) -> (i32, i32, i32) {
    %c0_i32 = arith.constant 0 : i32
    %c0_i32_0 = arith.constant 0 : i32
    %c0_i32_1 = arith.constant 0 : i32
    return %arg0, %c0_i32, %c0_i32_0 : i32, i32, i32
  }
}

</mosaic_0001>

<llo_original>
// kernel: depth_wise_forward.1
$region0: #{depth_wise_forward.1}
  #allocation0 [shape = 'u32[]', space=smem, size = 0x4, offset = 0x4, fixed_abs, tag = 'smem constant byte address 0x4 - core index']
  #allocation1 [shape = 'u32[144,128]{1,0:T(1,128)}', space=vmem, size = 0x12000, scoped, tag = 'internal scratch']
  #allocation2 [shape = 'f32[18,18,256]{2,1,0:T(8,128)}', space=vmem, size = 0x6c000, scoped, tag = 'scratch operand']
  #allocation3 [shape = 'f32[64,256]{1,0:T(8,128)}', space=vmem, size = 0x10000, scoped, tag = 'scratch operand']
  %s0 = inlined_call_operand.vmem [shape: f32[2,256,128], index: 0, kind: input, shape index: {}]
  %s1 = inlined_call_operand.vmem [shape: bf16[128,256], index: 1, kind: input, shape index: {}]
  %s2 = inlined_call_operand.vmem [shape: f32[15,256], index: 2, kind: input, shape index: {}]
  %s3 = inlined_call_operand.vmem [shape: bf16[256,128], index: 3, kind: input, shape index: {}]
  %s4 = inlined_call_operand.vmem [shape: f32[2,128], index: 4, kind: input, shape index: {}]
  %s5 = inlined_call_operand.hbm [shape: f32[2,64,128], index: 5, kind: output, shape index: {}]
  %s6 = sld [smem:[#allocation0]]
  $region53: #{depth_wise_forward.1} parent=0
    _
  %s8 = ssub.s32 1, %s6
  %s9 = scalar_select 0, %s8, %s6
  $region1: #{depth_wise_forward.1} parent=0
    #allocation4 [shape = 'u8[65536]{0}', space=vmem, size = 0x10000, scoped, tag = 'output window, operand 0']
    #allocation5 [shape = 's32[2]{0}', space=sflag, size = 0x8, scoped, tag = 'scoped memory for depth_wise_forward.1']
    %10 = vsyncpa [#allocation5], 0
    %s11 = scalar_lea.sflag [#allocation5], 1
    %12 = vsyncpa %s11, 0
    loop: start=0, step=1, limit=4
    $region2: #{depth_wise_forward.1} parent=1 // loop_pre_header
      _
    $region3: #{depth_wise_forward.1} parent=1 // loop_header
      %s14 = sphi 0, %s18
      %p15 = scmp.ge.s32.totalorder %s14, 4
      %s24 = sphi 0, %s26
      %s27 = sphi 0, %s24
      %s28 = sphi 0, %s27
      %s44 = sphi 0, %s28
      %s48 = sphi 0, %s48
      %s50 = sphi 0, %s48
      %s51 = sphi 0, %s50
      %s65 = sphi 0, %s51
      %s69 = sphi 0, %s69
      %s71 = sphi 0, %s69
      %s72 = sphi 0, %s71
      %s86 = sphi 0, %s72
      %s90 = sphi 0, %s90
      %s92 = sphi 0, %s90
      %s93 = sphi 0, %s92
      %s107 = sphi 0, %s93
      %s111 = sphi 0, %s111
      %s113 = sphi 0, %s111
      %s114 = sphi 0, %s113
      %s128 = sphi 0, %s114
      %s134 = sphi 0, %s136
      %s137 = sphi 0, %s134
      %s138 = sphi 0, %s137
      %s154 = sphi 0, %s138
    $region4: #{depth_wise_forward.1} parent=1 // loop_header_branch
      %17 = sbr.rel (%p15) target = $region8
    $region5: #{depth_wise_forward.1} parent=1 // loop_body
      %s19 = ssub.s32 %s14, 1
      %s20 = ssub.s32 %s14, 2
      %s21 = sadd.s32 %s14, 1
      %s22 = ssub.s32 %s14, %s21
      %p23 = scmp.eq.s32.totalorder %s22, 0
      %s25 = sadd.s32 %s24, 1
      %s26 = scalar_select %p23, %s24, %s25
      %p29 = pneg %p23
      %p30 = scmp.eq.s32.totalorder %s14, 1
      %p31 = por %p29, %p30
      %p32 = scmp.ne.s32.totalorder %s24, %s27
      %p33 = scmp.eq.s32.totalorder %s14, 0
      %p34 = por %p32, %p33
      %p35 = scmp.ne.s32.totalorder %s24, %s27
      %p36 = scmp.eq.s32.totalorder %s19, 1
      %p37 = por %p35, %p36
      %p38 = scmp.ne.s32.totalorder %s27, %s28
      %p39 = scmp.eq.s32.totalorder %s19, 0
      %p40 = por %p38, %p39
      %p41 = scmp.ne.s32.totalorder %s27, %s28
      %p42 = scmp.eq.s32.totalorder %s20, 1
      %p43 = por %p41, %p42
      %p45 = scmp.ne.s32.totalorder %s28, %s44
      %p46 = scmp.eq.s32.totalorder %s20, 0
      %p47 = por %p45, %p46
      %s49 = sadd.s32 %s48, 1
      %p52 = scmp.eq.s32.totalorder %s14, 1
      %p53 = scmp.ne.s32.totalorder %s48, %s50
      %p54 = scmp.eq.s32.totalorder %s14, 0
      %p55 = por %p53, %p54
      %p56 = scmp.ne.s32.totalorder %s48, %s50
      %p57 = scmp.eq.s32.totalorder %s19, 1
      %p58 = por %p56, %p57
      %p59 = scmp.ne.s32.totalorder %s50, %s51
      %p60 = scmp.eq.s32.totalorder %s19, 0
      %p61 = por %p59, %p60
      %p62 = scmp.ne.s32.totalorder %s50, %s51
      %p63 = scmp.eq.s32.totalorder %s20, 1
      %p64 = por %p62, %p63
      %p66 = scmp.ne.s32.totalorder %s51, %s65
      %p67 = scmp.eq.s32.totalorder %s20, 0
      %p68 = por %p66, %p67
      %s70 = sadd.s32 %s69, 1
      %p73 = scmp.eq.s32.totalorder %s14, 1
      %p74 = scmp.ne.s32.totalorder %s69, %s71
      %p75 = scmp.eq.s32.totalorder %s14, 0
      %p76 = por %p74, %p75
      %p77 = scmp.ne.s32.totalorder %s69, %s71
      %p78 = scmp.eq.s32.totalorder %s19, 1
      %p79 = por %p77, %p78
      %p80 = scmp.ne.s32.totalorder %s71, %s72
      %p81 = scmp.eq.s32.totalorder %s19, 0
      %p82 = por %p80, %p81
      %p83 = scmp.ne.s32.totalorder %s71, %s72
      %p84 = scmp.eq.s32.totalorder %s20, 1
      %p85 = por %p83, %p84
      %p87 = scmp.ne.s32.totalorder %s72, %s86
      %p88 = scmp.eq.s32.totalorder %s20, 0
      %p89 = por %p87, %p88
      %s91 = sadd.s32 %s90, 1
      %p94 = scmp.eq.s32.totalorder %s14, 1
      %p95 = scmp.ne.s32.totalorder %s90, %s92
      %p96 = scmp.eq.s32.totalorder %s14, 0
      %p97 = por %p95, %p96
      %p98 = scmp.ne.s32.totalorder %s90, %s92
      %p99 = scmp.eq.s32.totalorder %s19, 1
      %p100 = por %p98, %p99
      %p101 = scmp.ne.s32.totalorder %s92, %s93
      %p102 = scmp.eq.s32.totalorder %s19, 0
      %p103 = por %p101, %p102
      %p104 = scmp.ne.s32.totalorder %s92, %s93
      %p105 = scmp.eq.s32.totalorder %s20, 1
      %p106 = por %p104, %p105
      %p108 = scmp.ne.s32.totalorder %s93, %s107
      %p109 = scmp.eq.s32.totalorder %s20, 0
      %p110 = por %p108, %p109
      %s112 = sadd.s32 %s111, 1
      %p115 = scmp.eq.s32.totalorder %s14, 1
      %p116 = scmp.ne.s32.totalorder %s111, %s113
      %p117 = scmp.eq.s32.totalorder %s14, 0
      %p118 = por %p116, %p117
      %p119 = scmp.ne.s32.totalorder %s111, %s113
      %p120 = scmp.eq.s32.totalorder %s19, 1
      %p121 = por %p119, %p120
      %p122 = scmp.ne.s32.totalorder %s113, %s114
      %p123 = scmp.eq.s32.totalorder %s19, 0
      %p124 = por %p122, %p123
      %p125 = scmp.ne.s32.totalorder %s113, %s114
      %p126 = scmp.eq.s32.totalorder %s20, 1
      %p127 = por %p125, %p126
      %p129 = scmp.ne.s32.totalorder %s114, %s128
      %p130 = scmp.eq.s32.totalorder %s20, 0
      %p131 = por %p129, %p130
      %s132 = ssub.s32 %s14, %s21
      %p133 = scmp.eq.s32.totalorder %s132, 0
      %s135 = sadd.s32 %s134, 1
      %s136 = scalar_select %p133, %s134, %s135
      %p139 = pneg %p133
      %p140 = scmp.eq.s32.totalorder %s14, 1
      %p141 = por %p139, %p140
      %p142 = scmp.ne.s32.totalorder %s134, %s137
      %p143 = scmp.eq.s32.totalorder %s14, 0
      %p144 = por %p142, %p143
      %p145 = scmp.ne.s32.totalorder %s134, %s137
      %p146 = scmp.eq.s32.totalorder %s19, 1
      %p147 = por %p145, %p146
      %p148 = scmp.ne.s32.totalorder %s137, %s138
      %p149 = scmp.eq.s32.totalorder %s19, 0
      %p150 = por %p148, %p149
      %p151 = scmp.ne.s32.totalorder %s137, %s138
      %p152 = scmp.eq.s32.totalorder %s20, 1
      %p153 = por %p151, %p152
      %p155 = scmp.ne.s32.totalorder %s138, %s154
      %p156 = scmp.eq.s32.totalorder %s20, 0
      %p157 = por %p155, %p156
      %p158 = scmp.le.s32.totalorder 1, %s14
      %p159 = scmp.lt.s32.totalorder %s14, 3
      %p160 = pnand %p158, %p159
      %p161 = pneg %p160
      // Predicated region
      $region9: #{depth_wise_forward.1} parent=5 // pred_check
        _
      $region10: #{depth_wise_forward.1} parent=5 // pred_check_branch
        %163 = sbr.rel (%p160) target = $region12
      $region11: #{depth_wise_forward.1} parent=5 // pred_region
        %s164 = ssub.s32 %s14, 1
        // Predicated region
        $region13: #{depth_wise_forward.1} parent=11 // pred_check
          %p165 = pneg %p61
        $region14: #{depth_wise_forward.1} parent=11 // pred_check_branch
          %167 = sbr.rel (%p165) target = $region16
        $region15: #{depth_wise_forward.1} parent=11 // pred_region
          _
        $region16: #{depth_wise_forward.1} parent=11 // pred_fallthru
          _
        // Predicated region
        $region17: #{depth_wise_forward.1} parent=11 // pred_check
          %p168 = pneg %p82
        $region18: #{depth_wise_forward.1} parent=11 // pred_check_branch
          %170 = sbr.rel (%p168) target = $region20
        $region19: #{depth_wise_forward.1} parent=11 // pred_region
          _
        $region20: #{depth_wise_forward.1} parent=11 // pred_fallthru
          _
        // Predicated region
        $region21: #{depth_wise_forward.1} parent=11 // pred_check
          %p171 = pneg %p103
        $region22: #{depth_wise_forward.1} parent=11 // pred_check_branch
          %173 = sbr.rel (%p171) target = $region24
        $region23: #{depth_wise_forward.1} parent=11 // pred_region
          _
        $region24: #{depth_wise_forward.1} parent=11 // pred_fallthru
          _
        // Predicated region
        $region25: #{depth_wise_forward.1} parent=11 // pred_check
          %p174 = pneg %p124
        $region26: #{depth_wise_forward.1} parent=11 // pred_check_branch
          %176 = sbr.rel (%p174) target = $region28
        $region27: #{depth_wise_forward.1} parent=11 // pred_region
          _
        $region28: #{depth_wise_forward.1} parent=11 // pred_fallthru
          _
      $region12: #{depth_wise_forward.1} parent=5 // pred_fallthru
        _
      %p177 = scmp.lt.s32.totalorder %s14, 2
      // Predicated region
      $region29: #{depth_wise_forward.1} parent=5 // pred_check
        %p178 = pneg %p177
      $region30: #{depth_wise_forward.1} parent=5 // pred_check_branch
        %180 = sbr.rel (%p178) target = $region32
      $region31: #{depth_wise_forward.1} parent=5 // pred_region
        // Predicated region
        $region33: #{depth_wise_forward.1} parent=31 // pred_check
          %p181 = pneg %p34
        $region34: #{depth_wise_forward.1} parent=31 // pred_check_branch
          %183 = sbr.rel (%p181) target = $region36
        $region35: #{depth_wise_forward.1} parent=31 // pred_region
          %p184 = scmp.lt.s32.totalorder %s14, 1
          %s185 = scalar_select %p184, %s14, 1
          %s186 = smul.addr %s185, 32
          %s187 = smul.addr %s186, 8
          %s188 = scalar_lea.vmem %s0, %s187
        $region36: #{depth_wise_forward.1} parent=31 // pred_fallthru
          _
      $region32: #{depth_wise_forward.1} parent=5 // pred_fallthru
        _
      %p189 = scmp.le.s32.totalorder 1, %s14
      %p190 = scmp.lt.s32.totalorder %s14, 3
      %p191 = pnand %p189, %p190
      %p192 = pneg %p191
      // Predicated region
      $region37: #{depth_wise_forward.1} parent=5 // pred_check
        _
      $region38: #{depth_wise_forward.1} parent=5 // pred_check_branch
        %194 = sbr.rel (%p191) target = $region40
      $region39: #{depth_wise_forward.1} parent=5 // pred_region
        %s195 = ssub.s32 %s14, 1
        %p196 = scmp.lt.s32.totalorder %s19, 1
        %s197 = scalar_select %p196, %s19, 1
        %s198 = smul.addr %s197, 32
        %s199 = smul.addr %s198, 8
        %s200 = scalar_lea.vmem %s0, %s199
        %p201 = pneg %p40
        %p202 = pneg %p37
        %p203 = pneg %p61
        %p204 = pneg %p58
        %p205 = pneg %p82
        %p206 = pneg %p79
        %p207 = pneg %p103
        %p208 = pneg %p100
        %p209 = pneg %p124
        %p210 = pneg %p121
        %p211 = pneg %p150
        %p212 = pneg %p147
        %s213 = sand.u32 %s137, 1
        %s214 = scalar_lea.sflag [#allocation5], %s213
        %s215 = sand.u32 %s137, 1
        %s216 = smul.addr %s215, 64
        %s217 = scalar_lea.vmem [#allocation4], %s216
        %p218 = scmp.lt.s32.totalorder %s19, 1
        %s219 = scalar_select %p218, %s19, 1
        %s220 = smul.addr %s219, 32
        %s221 = smul.addr %s220, 8
        %s222 = scalar_lea.vmem %s0, %s221
        %v224 = vld [vmem:[%s2] ss:$8 sm:$0x3]
        %s225 = scalar_lea.vmem %s2, 1
        %v226 = vld [vmem:[%s225] ss:$8 sm:$0x3]
        %s227 = scalar_lea.vmem %s2, 2
        %v228 = vld [vmem:[%s227] ss:$8 sm:$0x3]
        %229 = vst [vmem:[#allocation2] sm:$0xff] 0.0
        %230 = vst [vmem:[#allocation2 + $0x8] sm:$0xff] 0.0
        %231 = vst [vmem:[#allocation2 + $0x10] sm:$0xff] 0.0
        %232 = vst [vmem:[#allocation2 + $0x18] sm:$0xff] 0.0
        %233 = vst [vmem:[#allocation2 + $0x20] sm:$0x3] 0.0
        %234 = vst [vmem:[#allocation2 + $0x28] sm:$0x3] 0.0
        %v235 = vlaneseq
        %vm236 = vcmp.ge.s32.totalorder %v235, 0
        %vm237 = vcmp.lt.s32.totalorder %v235, 256
        %vm238 = vmand %vm236, %vm237
        %s239 = scalar_lea.vmem [#allocation2], 17
        %240 = vst.msk [vmem:[%s239] ss:$8 sm:$0x3] %vm238, 0.0
        %241 = vst.msk [vmem:[%s239] ss:$8 sm:$0x0] %vm238, 0.0
        %s242 = scalar_lea.vmem [#allocation2], 65
        %243 = vst.msk [vmem:[%s242] ss:$8 sm:$0x3] %vm238, 0.0
        %244 = vst.msk [vmem:[%s242] ss:$8 sm:$0x0] %vm238, 0.0
        %s245 = scalar_lea.vmem [#allocation2], 113
        %246 = vst.msk [vmem:[%s245] ss:$8 sm:$0x3] %vm238, 0.0
        %247 = vst.msk [vmem:[%s245] ss:$8 sm:$0x0] %vm238, 0.0
        %s248 = scalar_lea.vmem [#allocation2], 161
        %249 = vst.msk [vmem:[%s248] ss:$8 sm:$0x3] %vm238, 0.0
        %250 = vst.msk [vmem:[%s248] ss:$8 sm:$0x0] %vm238, 0.0
        %s251 = scalar_lea.vmem [#allocation2], 209
        %252 = vst.msk [vmem:[%s251] ss:$8 sm:$0x3] %vm238, 0.0
        %253 = vst.msk [vmem:[%s251] ss:$8 sm:$0x0] %vm238, 0.0
        %s254 = scalar_lea.vmem [#allocation2], 257
        %255 = vst.msk [vmem:[%s254] ss:$8 sm:$0x3] %vm238, 0.0
        %256 = vst.msk [vmem:[%s254] ss:$8 sm:$0x0] %vm238, 0.0
        %s257 = scalar_lea.vmem [#allocation2], 305
        %258 = vst.msk [vmem:[%s257] ss:$8 sm:$0x3] %vm238, 0.0
        %259 = vst.msk [vmem:[%s257] ss:$8 sm:$0x0] %vm238, 0.0
        %s260 = scalar_lea.vmem [#allocation2], 353
        %261 = vst.msk [vmem:[%s260] ss:$8 sm:$0x3] %vm238, 0.0
        %262 = vst.msk [vmem:[%s260] ss:$8 sm:$0x0] %vm238, 0.0
        %s263 = scalar_lea.vmem [#allocation2], 401
        %264 = vst.msk [vmem:[%s263] ss:$8 sm:$0x3] %vm238, 0.0
        %265 = vst.msk [vmem:[%s263] ss:$8 sm:$0x0] %vm238, 0.0
        %s266 = scalar_lea.vmem [#allocation2], 449
        %267 = vst.msk [vmem:[%s266] ss:$8 sm:$0x3] %vm238, 0.0
        %268 = vst.msk [vmem:[%s266] ss:$8 sm:$0x0] %vm238, 0.0
        %s269 = scalar_lea.vmem [#allocation2], 497
        %270 = vst.msk [vmem:[%s269] ss:$8 sm:$0x3] %vm238, 0.0
        %271 = vst.msk [vmem:[%s269] ss:$8 sm:$0x0] %vm238, 0.0
        %s272 = scalar_lea.vmem [#allocation2], 545
        %273 = vst.msk [vmem:[%s272] ss:$8 sm:$0x3] %vm238, 0.0
        %274 = vst.msk [vmem:[%s272] ss:$8 sm:$0x0] %vm238, 0.0
        %s275 = scalar_lea.vmem [#allocation2], 593
        %276 = vst.msk [vmem:[%s275] ss:$8 sm:$0x3] %vm238, 0.0
        %277 = vst.msk [vmem:[%s275] ss:$8 sm:$0x0] %vm238, 0.0
        %s278 = scalar_lea.vmem [#allocation2], 641
        %279 = vst.msk [vmem:[%s278] ss:$8 sm:$0x3] %vm238, 0.0
        %280 = vst.msk [vmem:[%s278] ss:$8 sm:$0x0] %vm238, 0.0
        %s281 = scalar_lea.vmem [#allocation2], 689
        %282 = vst.msk [vmem:[%s281] ss:$8 sm:$0x3] %vm238, 0.0
        %283 = vst.msk [vmem:[%s281] ss:$8 sm:$0x0] %vm238, 0.0
        %s284 = scalar_lea.vmem [#allocation2], 737
        %285 = vst.msk [vmem:[%s284] ss:$8 sm:$0x3] %vm238, 0.0
        %286 = vst.msk [vmem:[%s284] ss:$8 sm:$0x0] %vm238, 0.0
        %s287 = scalar_lea.vmem [#allocation2], 785
        %288 = vst.msk [vmem:[%s287] ss:$8 sm:$0x3] %vm238, 0.0
        %289 = vst.msk [vmem:[%s287] ss:$8 sm:$0x0] %vm238, 0.0
        %s290 = scalar_lea.vmem [#allocation2], 833
        %291 = vst.msk [vmem:[%s290] ss:$8 sm:$0x3] %vm238, 0.0
        %292 = vst.msk [vmem:[%s290] ss:$8 sm:$0x0] %vm238, 0.0
        %v293 = vld [vmem:[%s222] sm:$0xff]
        %v294 = vld [vmem:[%s222 + $0x8] sm:$0xff]
        %v295 = vld [vmem:[%s222 + $0x10] sm:$0xff]
        %v296 = vld [vmem:[%s222 + $0x18] sm:$0xff]
        %v297 = vld [vmem:[%s222 + $0x20] sm:$0xff]
        %v298 = vld [vmem:[%s222 + $0x28] sm:$0xff]
        %v299 = vld [vmem:[%s222 + $0x30] sm:$0xff]
        %v300 = vld [vmem:[%s222 + $0x38] sm:$0xff]
        %v301 = vpack.c.bf16 %v294, %v293
        %v302 = vpack.c.bf16 %v296, %v295
        %v303 = vpack.c.bf16 %v298, %v297
        %v304 = vpack.c.bf16 %v300, %v299
        %v305 = vld [vmem:[%s1] sm:$0xff]
        %v306 = vld [vmem:[%s1 + $0x8] sm:$0xff]
        %v307 = vld [vmem:[%s1 + $0x10] sm:$0xff]
        %v308 = vld [vmem:[%s1 + $0x18] sm:$0xff]
        %v309 = vld [vmem:[%s1 + $0x20] sm:$0xff]
        %v310 = vld [vmem:[%s1 + $0x28] sm:$0xff]
        %v311 = vld [vmem:[%s1 + $0x30] sm:$0xff]
        %v312 = vld [vmem:[%s1 + $0x38] sm:$0xff]
        %v313 = vld [vmem:[%s1 + $0x40] sm:$0xff]
        %v314 = vld [vmem:[%s1 + $0x48] sm:$0xff]
        %v315 = vld [vmem:[%s1 + $0x50] sm:$0xff]
        %v316 = vld [vmem:[%s1 + $0x58] sm:$0xff]
        %v317 = vld [vmem:[%s1 + $0x60] sm:$0xff]
        %v318 = vld [vmem:[%s1 + $0x68] sm:$0xff]
        %v319 = vld [vmem:[%s1 + $0x70] sm:$0xff]
        %v320 = vld [vmem:[%s1 + $0x78] sm:$0xff]
        %v337 = vunpack.c.l.b16 %v305
        %v338 = vunpack.c.h.b16 %v305
        %v339 = vunpack.c.l.b16 %v306
        %v340 = vunpack.c.h.b16 %v306
        %v341 = vunpack.c.l.b16 %v307
        %v342 = vunpack.c.h.b16 %v307
        %v343 = vunpack.c.l.b16 %v308
        %v344 = vunpack.c.h.b16 %v308
        %v345 = vunpack.c.l.b16 %v309
        %v346 = vunpack.c.h.b16 %v309
        %v347 = vunpack.c.l.b16 %v310
        %v348 = vunpack.c.h.b16 %v310
        %v349 = vunpack.c.l.b16 %v311
        %v350 = vunpack.c.h.b16 %v311
        %v351 = vunpack.c.l.b16 %v312
        %v352 = vunpack.c.h.b16 %v312
        %v353 = vunpack.c.l.b16 %v313
        %v354 = vunpack.c.h.b16 %v313
        %v355 = vunpack.c.l.b16 %v314
        %v356 = vunpack.c.h.b16 %v314
        %v357 = vunpack.c.l.b16 %v315
        %v358 = vunpack.c.h.b16 %v315
        %v359 = vunpack.c.l.b16 %v316
        %v360 = vunpack.c.h.b16 %v316
        %v361 = vunpack.c.l.b16 %v317
        %v362 = vunpack.c.h.b16 %v317
        %v363 = vunpack.c.l.b16 %v318
        %v364 = vunpack.c.h.b16 %v318
        %v365 = vunpack.c.l.b16 %v319
        %v366 = vunpack.c.h.b16 %v319
        %v367 = vunpack.c.l.b16 %v320
        %v368 = vunpack.c.h.b16 %v320
        %v369 = vpack.c.b16 %v339, %v337
        %v370 = vpack.c.b16 %v340, %v338
        %v371 = vpack.c.b16 %v343, %v341
        %v372 = vpack.c.b16 %v344, %v342
        %v373 = vpack.c.b16 %v347, %v345
        %v374 = vpack.c.b16 %v348, %v346
        %v375 = vpack.c.b16 %v351, %v349
        %v376 = vpack.c.b16 %v352, %v350
        %v377 = vpack.c.b16 %v355, %v353
        %v378 = vpack.c.b16 %v356, %v354
        %v379 = vpack.c.b16 %v359, %v357
        %v380 = vpack.c.b16 %v360, %v358
        %v381 = vpack.c.b16 %v363, %v361
        %v382 = vpack.c.b16 %v364, %v362
        %v383 = vpack.c.b16 %v367, %v365
        %v384 = vpack.c.b16 %v368, %v366
        %401 = vmatprep.subr.bf16.mxu0 %v384
        %402 = vmatpush1.bf16.msra.mxu0 %v383
        %403 = vmatprep.subr.bf16.mxu0 %v382
        %404 = vmatpush1.bf16.msra.mxu0 %v381
        %405 = vmatprep.subr.bf16.mxu0 %v380
        %406 = vmatpush1.bf16.msra.mxu0 %v379
        %407 = vmatprep.subr.bf16.mxu0 %v378
        %408 = vmatpush1.bf16.msra.mxu0 %v377
        %409 = vmatprep.subr.bf16.mxu0 %v376
        %410 = vmatpush1.bf16.msra.mxu0 %v375
        %411 = vmatprep.subr.bf16.mxu0 %v374
        %412 = vmatpush1.bf16.msra.mxu0 %v373
        %413 = vmatprep.subr.bf16.mxu0 %v372
        %414 = vmatpush1.bf16.msra.mxu0 %v371
        %415 = vmatprep.subr.bf16.mxu0 %v370
        %416 = vmatpush1.bf16.msra.mxu0 %v369
        %417 = vmatprep.subr.bf16.mxu0 0
        %418 = vmatpush2.bf16.msra.mxu0 0
        %419 = vmatprep.subr.bf16.mxu0 0
        %420 = vmatpush2.bf16.msra.mxu0 0
        %421 = vmatprep.subr.bf16.mxu0 0
        %422 = vmatpush2.bf16.msra.mxu0 0
        %423 = vmatprep.subr.bf16.mxu0 0
        %424 = vmatpush2.bf16.msra.mxu0 0
        %425 = vmatprep.subr.bf16.mxu0 0
        %426 = vmatpush2.bf16.msra.mxu0 0
        %427 = vmatprep.subr.bf16.mxu0 0
        %428 = vmatpush2.bf16.msra.mxu0 0
        %429 = vmatprep.subr.bf16.mxu0 0
        %430 = vmatpush2.bf16.msra.mxu0 0
        %431 = vmatprep.subr.bf16.mxu0 0
        %432 = vmatpush2.bf16.msra.mxu0 0
        %433 = vmatprep.mubr.bf16.mxu0 0
        %434 = vmatmul.mubr.bf16.gmra.mxu0 %v301
        %v435 = vpop.f32.mrf.mxu0
        %v436 = vadd.f32 0.0, %v435
        %v437 = vpop.f32.mrf.mxu0
        %v438 = vadd.f32 0.0, %v437
        %v439 = vpop.f32.mrf.mxu0
        %v440 = vadd.f32 0.0, %v439
        %v441 = vpop.f32.mrf.mxu0
        %v442 = vadd.f32 0.0, %v441
        %443 = vmatprep.mubr.bf16.mxu0 0
        %444 = vmatmul.mubr.bf16.gmra.mxu0 %v302
        %v445 = vpop.f32.mrf.mxu0
        %v446 = vadd.f32 0.0, %v445
        %v447 = vpop.f32.mrf.mxu0
        %v448 = vadd.f32 0.0, %v447
        %v449 = vpop.f32.mrf.mxu0
        %v450 = vadd.f32 0.0, %v449
        %v451 = vpop.f32.mrf.mxu0
        %v452 = vadd.f32 0.0, %v451
        %453 = vmatprep.mubr.bf16.mxu0 0
        %454 = vmatmul.mubr.bf16.gmra.mxu0 %v303
        %v455 = vpop.f32.mrf.mxu0
        %v456 = vadd.f32 0.0, %v455
        %v457 = vpop.f32.mrf.mxu0
        %v458 = vadd.f32 0.0, %v457
        %v459 = vpop.f32.mrf.mxu0
        %v460 = vadd.f32 0.0, %v459
        %v461 = vpop.f32.mrf.mxu0
        %v462 = vadd.f32 0.0, %v461
        %463 = vmatprep.mubr.bf16.mxu0 0
        %464 = vmatmul.mubr.bf16.gmra.mxu0 %v304
        %v465 = vpop.f32.mrf.mxu0
        %v466 = vadd.f32 0.0, %v465
        %v467 = vpop.f32.mrf.mxu0
        %v468 = vadd.f32 0.0, %v467
        %v469 = vpop.f32.mrf.mxu0
        %v470 = vadd.f32 0.0, %v469
        %v471 = vpop.f32.mrf.mxu0
        %v472 = vadd.f32 0.0, %v471
        %473 = vdwg.mxu0
        %v475 = vlaneseq
        %v476 = vshrl.u32 %v475, 7
        %v477 = vsub.s32 0, %v476
        %v478 = vrot.slane %v224, %v477
        %v479 = vlaneseq
        %v480 = vshrl.u32 %v479, 7
        %v481 = vsub.s32 1, %v480
        %v482 = vrot.slane %v224, %v481
        %v485 = vmul.f32 %v436, %v478
        %v486 = vmul.f32 %v438, %v482
        %v487 = vmul.f32 %v440, %v478
        %v488 = vmul.f32 %v442, %v482
        %v489 = vmul.f32 %v446, %v478
        %v490 = vmul.f32 %v448, %v482
        %v491 = vmul.f32 %v450, %v478
        %v492 = vmul.f32 %v452, %v482
        %v493 = vmul.f32 %v456, %v478
        %v494 = vmul.f32 %v458, %v482
        %v495 = vmul.f32 %v460, %v478
        %v496 = vmul.f32 %v462, %v482
        %v497 = vmul.f32 %v466, %v478
        %v498 = vmul.f32 %v468, %v482
        %v499 = vmul.f32 %v470, %v478
        %v500 = vmul.f32 %v472, %v482
        %v502 = vlaneseq
        %v503 = vshrl.u32 %v502, 7
        %v504 = vsub.s32 0, %v503
        %v505 = vrot.slane %v226, %v504
        %v506 = vlaneseq
        %v507 = vshrl.u32 %v506, 7
        %v508 = vsub.s32 1, %v507
        %v509 = vrot.slane %v226, %v508
        %v512 = vadd.f32 %v485, %v505
        %v513 = vadd.f32 %v486, %v509
        %v514 = vadd.f32 %v487, %v505
        %v515 = vadd.f32 %v488, %v509
        %v516 = vadd.f32 %v489, %v505
        %v517 = vadd.f32 %v490, %v509
        %v518 = vadd.f32 %v491, %v505
        %v519 = vadd.f32 %v492, %v509
        %v520 = vadd.f32 %v493, %v505
        %v521 = vadd.f32 %v494, %v509
        %v522 = vadd.f32 %v495, %v505
        %v523 = vadd.f32 %v496, %v509
        %v524 = vadd.f32 %v497, %v505
        %v525 = vadd.f32 %v498, %v509
        %v526 = vadd.f32 %v499, %v505
        %v527 = vadd.f32 %v500, %v509
        %vm528 = vcmp.ge.f32.partialorder %v512, 0.0
        %vm529 = vcmp.ge.f32.partialorder %v513, 0.0
        %vm530 = vcmp.ge.f32.partialorder %v514, 0.0
        %vm531 = vcmp.ge.f32.partialorder %v515, 0.0
        %vm532 = vcmp.ge.f32.partialorder %v516, 0.0
        %vm533 = vcmp.ge.f32.partialorder %v517, 0.0
        %vm534 = vcmp.ge.f32.partialorder %v518, 0.0
        %vm535 = vcmp.ge.f32.partialorder %v519, 0.0
        %vm536 = vcmp.ge.f32.partialorder %v520, 0.0
        %vm537 = vcmp.ge.f32.partialorder %v521, 0.0
        %vm538 = vcmp.ge.f32.partialorder %v522, 0.0
        %vm539 = vcmp.ge.f32.partialorder %v523, 0.0
        %vm540 = vcmp.ge.f32.partialorder %v524, 0.0
        %vm541 = vcmp.ge.f32.partialorder %v525, 0.0
        %vm542 = vcmp.ge.f32.partialorder %v526, 0.0
        %vm543 = vcmp.ge.f32.partialorder %v527, 0.0
        %v545 = vlaneseq
        %v546 = vshrl.u32 %v545, 7
        %v547 = vsub.s32 0, %v546
        %v548 = vrot.slane %v228, %v547
        %v549 = vlaneseq
        %v550 = vshrl.u32 %v549, 7
        %v551 = vsub.s32 1, %v550
        %v552 = vrot.slane %v228, %v551
        %v555 = vmul.f32 %v512, %v548
        %v556 = vmul.f32 %v513, %v552
        %v557 = vmul.f32 %v514, %v548
        %v558 = vmul.f32 %v515, %v552
        %v559 = vmul.f32 %v516, %v548
        %v560 = vmul.f32 %v517, %v552
        %v561 = vmul.f32 %v518, %v548
        %v562 = vmul.f32 %v519, %v552
        %v563 = vmul.f32 %v520, %v548
        %v564 = vmul.f32 %v521, %v552
        %v565 = vmul.f32 %v522, %v548
        %v566 = vmul.f32 %v523, %v552
        %v567 = vmul.f32 %v524, %v548
        %v568 = vmul.f32 %v525, %v552
        %v569 = vmul.f32 %v526, %v548
        %v570 = vmul.f32 %v527, %v552
        %v571 = vsel %vm528, %v512, %v555
        %v572 = vsel %vm529, %v513, %v556
        %v573 = vsel %vm530, %v514, %v557
        %v574 = vsel %vm531, %v515, %v558
        %v575 = vsel %vm532, %v516, %v559
        %v576 = vsel %vm533, %v517, %v560
        %v577 = vsel %vm534, %v518, %v561
        %v578 = vsel %vm535, %v519, %v562
        %v579 = vsel %vm536, %v520, %v563
        %v580 = vsel %vm537, %v521, %v564
        %v581 = vsel %vm538, %v522, %v565
        %v582 = vsel %vm539, %v523, %v566
        %v583 = vsel %vm540, %v524, %v567
        %v584 = vsel %vm541, %v525, %v568
        %v585 = vsel %vm542, %v526, %v569
        %v586 = vsel %vm543, %v527, %v570
        %s587 = scalar_lea.vmem [#allocation2], 48
        %588 = vst [vmem:[%s587] sm:$0xff] %v571
        %589 = vst [vmem:[%s587 + $0x8] sm:$0xff] %v572
        %v592 = vrot.slane %v573, 6
        %v593 = vrot.slane %v574, 6
        %596 = vst [vmem:[%s587 + $0x10] sm:$0xfc] %v592
        %597 = vst [vmem:[%s587 + $0x18] sm:$0xfc] %v593
        %598 = vst [vmem:[%s587 + $0x20] sm:$0x3] %v592
        %599 = vst [vmem:[%s587 + $0x28] sm:$0x3] %v593
        %s600 = scalar_lea.vmem [#allocation2], 96
        %601 = vst [vmem:[%s600] sm:$0xff] %v575
        %602 = vst [vmem:[%s600 + $0x8] sm:$0xff] %v576
        %v605 = vrot.slane %v577, 6
        %v606 = vrot.slane %v578, 6
        %609 = vst [vmem:[%s600 + $0x10] sm:$0xfc] %v605
        %610 = vst [vmem:[%s600 + $0x18] sm:$0xfc] %v606
        %611 = vst [vmem:[%s600 + $0x20] sm:$0x3] %v605
        %612 = vst [vmem:[%s600 + $0x28] sm:$0x3] %v606
        %s613 = scalar_lea.vmem [#allocation2], 144
        %614 = vst [vmem:[%s613] sm:$0xff] %v579
        %615 = vst [vmem:[%s613 + $0x8] sm:$0xff] %v580
        %v618 = vrot.slane %v581, 6
        %v619 = vrot.slane %v582, 6
        %622 = vst [vmem:[%s613 + $0x10] sm:$0xfc] %v618
        %623 = vst [vmem:[%s613 + $0x18] sm:$0xfc] %v619
        %624 = vst [vmem:[%s613 + $0x20] sm:$0x3] %v618
        %625 = vst [vmem:[%s613 + $0x28] sm:$0x3] %v619
        %s626 = scalar_lea.vmem [#allocation2], 192
        %627 = vst [vmem:[%s626] sm:$0xff] %v583
        %628 = vst [vmem:[%s626 + $0x8] sm:$0xff] %v584
        %v631 = vrot.slane %v585, 6
        %v632 = vrot.slane %v586, 6
        %635 = vst [vmem:[%s626 + $0x10] sm:$0xfc] %v631
        %636 = vst [vmem:[%s626 + $0x18] sm:$0xfc] %v632
        %637 = vst [vmem:[%s626 + $0x20] sm:$0x3] %v631
        %638 = vst [vmem:[%s626 + $0x28] sm:$0x3] %v632
        %v639 = vld [vmem:[%s222 + $0x40] sm:$0xff]
        %v640 = vld [vmem:[%s222 + $0x48] sm:$0xff]
        %v641 = vld [vmem:[%s222 + $0x50] sm:$0xff]
        %v642 = vld [vmem:[%s222 + $0x58] sm:$0xff]
        %v643 = vld [vmem:[%s222 + $0x60] sm:$0xff]
        %v644 = vld [vmem:[%s222 + $0x68] sm:$0xff]
        %v645 = vld [vmem:[%s222 + $0x70] sm:$0xff]
        %v646 = vld [vmem:[%s222 + $0x78] sm:$0xff]
        %v647 = vpack.c.bf16 %v640, %v639
        %v648 = vpack.c.bf16 %v642, %v641
        %v649 = vpack.c.bf16 %v644, %v643
        %v650 = vpack.c.bf16 %v646, %v645
        %v651 = vld [vmem:[%s1] sm:$0xff]
        %v652 = vld [vmem:[%s1 + $0x8] sm:$0xff]
        %v653 = vld [vmem:[%s1 + $0x10] sm:$0xff]
        %v654 = vld [vmem:[%s1 + $0x18] sm:$0xff]
        %v655 = vld [vmem:[%s1 + $0x20] sm:$0xff]
        %v656 = vld [vmem:[%s1 + $0x28] sm:$0xff]
        %v657 = vld [vmem:[%s1 + $0x30] sm:$0xff]
        %v658 = vld [vmem:[%s1 + $0x38] sm:$0xff]
        %v659 = vld [vmem:[%s1 + $0x40] sm:$0xff]
        %v660 = vld [vmem:[%s1 + $0x48] sm:$0xff]
        %v661 = vld [vmem:[%s1 + $0x50] sm:$0xff]
        %v662 = vld [vmem:[%s1 + $0x58] sm:$0xff]
        %v663 = vld [vmem:[%s1 + $0x60] sm:$0xff]
        %v664 = vld [vmem:[%s1 + $0x68] sm:$0xff]
        %v665 = vld [vmem:[%s1 + $0x70] sm:$0xff]
        %v666 = vld [vmem:[%s1 + $0x78] sm:$0xff]
        %v683 = vunpack.c.l.b16 %v651
        %v684 = vunpack.c.h.b16 %v651
        %v685 = vunpack.c.l.b16 %v652
        %v686 = vunpack.c.h.b16 %v652
        %v687 = vunpack.c.l.b16 %v653
        %v688 = vunpack.c.h.b16 %v653
        %v689 = vunpack.c.l.b16 %v654
        %v690 = vunpack.c.h.b16 %v654
        %v691 = vunpack.c.l.b16 %v655
        %v692 = vunpack.c.h.b16 %v655
        %v693 = vunpack.c.l.b16 %v656
        %v694 = vunpack.c.h.b16 %v656
        %v695 = vunpack.c.l.b16 %v657
        %v696 = vunpack.c.h.b16 %v657
        %v697 = vunpack.c.l.b16 %v658
        %v698 = vunpack.c.h.b16 %v658
        %v699 = vunpack.c.l.b16 %v659
        %v700 = vunpack.c.h.b16 %v659
        %v701 = vunpack.c.l.b16 %v660
        %v702 = vunpack.c.h.b16 %v660
        %v703 = vunpack.c.l.b16 %v661
        %v704 = vunpack.c.h.b16 %v661
        %v705 = vunpack.c.l.b16 %v662
        %v706 = vunpack.c.h.b16 %v662
        %v707 = vunpack.c.l.b16 %v663
        %v708 = vunpack.c.h.b16 %v663
        %v709 = vunpack.c.l.b16 %v664
        %v710 = vunpack.c.h.b16 %v664
        %v711 = vunpack.c.l.b16 %v665
        %v712 = vunpack.c.h.b16 %v665
        %v713 = vunpack.c.l.b16 %v666
        %v714 = vunpack.c.h.b16 %v666
        %v715 = vpack.c.b16 %v685, %v683
        %v716 = vpack.c.b16 %v686, %v684
        %v717 = vpack.c.b16 %v689, %v687
        %v718 = vpack.c.b16 %v690, %v688
        %v719 = vpack.c.b16 %v693, %v691
        %v720 = vpack.c.b16 %v694, %v692
        %v721 = vpack.c.b16 %v697, %v695
        %v722 = vpack.c.b16 %v698, %v696
        %v723 = vpack.c.b16 %v701, %v699
        %v724 = vpack.c.b16 %v702, %v700
        %v725 = vpack.c.b16 %v705, %v703
        %v726 = vpack.c.b16 %v706, %v704
        %v727 = vpack.c.b16 %v709, %v707
        %v728 = vpack.c.b16 %v710, %v708
        %v729 = vpack.c.b16 %v713, %v711
        %v730 = vpack.c.b16 %v714, %v712
        %747 = vmatprep.subr.bf16.mxu0 %v730
        %748 = vmatpush1.bf16.msra.mxu0 %v729
        %749 = vmatprep.subr.bf16.mxu0 %v728
        %750 = vmatpush1.bf16.msra.mxu0 %v727
        %751 = vmatprep.subr.bf16.mxu0 %v726
        %752 = vmatpush1.bf16.msra.mxu0 %v725
        %753 = vmatprep.subr.bf16.mxu0 %v724
        %754 = vmatpush1.bf16.msra.mxu0 %v723
        %755 = vmatprep.subr.bf16.mxu0 %v722
        %756 = vmatpush1.bf16.msra.mxu0 %v721
        %757 = vmatprep.subr.bf16.mxu0 %v720
        %758 = vmatpush1.bf16.msra.mxu0 %v719
        %759 = vmatprep.subr.bf16.mxu0 %v718
        %760 = vmatpush1.bf16.msra.mxu0 %v717
        %761 = vmatprep.subr.bf16.mxu0 %v716
        %762 = vmatpush1.bf16.msra.mxu0 %v715
        %763 = vmatprep.subr.bf16.mxu0 0
        %764 = vmatpush2.bf16.msra.mxu0 0
        %765 = vmatprep.subr.bf16.mxu0 0
        %766 = vmatpush2.bf16.msra.mxu0 0
        %767 = vmatprep.subr.bf16.mxu0 0
        %768 = vmatpush2.bf16.msra.mxu0 0
        %769 = vmatprep.subr.bf16.mxu0 0
        %770 = vmatpush2.bf16.msra.mxu0 0
        %771 = vmatprep.subr.bf16.mxu0 0
        %772 = vmatpush2.bf16.msra.mxu0 0
        %773 = vmatprep.subr.bf16.mxu0 0
        %774 = vmatpush2.bf16.msra.mxu0 0
        %775 = vmatprep.subr.bf16.mxu0 0
        %776 = vmatpush2.bf16.msra.mxu0 0
        %777 = vmatprep.subr.bf16.mxu0 0
        %778 = vmatpush2.bf16.msra.mxu0 0
        %779 = vmatprep.mubr.bf16.mxu0 0
        %780 = vmatmul.mubr.bf16.gmra.mxu0 %v647
        %v781 = vpop.f32.mrf.mxu0
        %v782 = vadd.f32 0.0, %v781
        %v783 = vpop.f32.mrf.mxu0
        %v784 = vadd.f32 0.0, %v783
        %v785 = vpop.f32.mrf.mxu0
        %v786 = vadd.f32 0.0, %v785
        %v787 = vpop.f32.mrf.mxu0
        %v788 = vadd.f32 0.0, %v787
        %789 = vmatprep.mubr.bf16.mxu0 0
        %790 = vmatmul.mubr.bf16.gmra.mxu0 %v648
        %v791 = vpop.f32.mrf.mxu0
        %v792 = vadd.f32 0.0, %v791
        %v793 = vpop.f32.mrf.mxu0
        %v794 = vadd.f32 0.0, %v793
        %v795 = vpop.f32.mrf.mxu0
        %v796 = vadd.f32 0.0, %v795
        %v797 = vpop.f32.mrf.mxu0
        %v798 = vadd.f32 0.0, %v797
        %799 = vmatprep.mubr.bf16.mxu0 0
        %800 = vmatmul.mubr.bf16.gmra.mxu0 %v649
        %v801 = vpop.f32.mrf.mxu0
        %v802 = vadd.f32 0.0, %v801
        %v803 = vpop.f32.mrf.mxu0
        %v804 = vadd.f32 0.0, %v803
        %v805 = vpop.f32.mrf.mxu0
        %v806 = vadd.f32 0.0, %v805
        %v807 = vpop.f32.mrf.mxu0
        %v808 = vadd.f32 0.0, %v807
        %809 = vmatprep.mubr.bf16.mxu0 0
        %810 = vmatmul.mubr.bf16.gmra.mxu0 %v650
        %v811 = vpop.f32.mrf.mxu0
        %v812 = vadd.f32 0.0, %v811
        %v813 = vpop.f32.mrf.mxu0
        %v814 = vadd.f32 0.0, %v813
        %v815 = vpop.f32.mrf.mxu0
        %v816 = vadd.f32 0.0, %v815
        %v817 = vpop.f32.mrf.mxu0
        %v818 = vadd.f32 0.0, %v817
        %819 = vdwg.mxu0
        %v820 = vmul.f32 %v782, %v478
        %v821 = vmul.f32 %v784, %v482
        %v822 = vmul.f32 %v786, %v478
        %v823 = vmul.f32 %v788, %v482
        %v824 = vmul.f32 %v792, %v478
        %v825 = vmul.f32 %v794, %v482
        %v826 = vmul.f32 %v796, %v478
        %v827 = vmul.f32 %v798, %v482
        %v828 = vmul.f32 %v802, %v478
        %v829 = vmul.f32 %v804, %v482
        %v830 = vmul.f32 %v806, %v478
        %v831 = vmul.f32 %v808, %v482
        %v832 = vmul.f32 %v812, %v478
        %v833 = vmul.f32 %v814, %v482
        %v834 = vmul.f32 %v816, %v478
        %v835 = vmul.f32 %v818, %v482
        %v836 = vadd.f32 %v820, %v505
        %v837 = vadd.f32 %v821, %v509
        %v838 = vadd.f32 %v822, %v505
        %v839 = vadd.f32 %v823, %v509
        %v840 = vadd.f32 %v824, %v505
        %v841 = vadd.f32 %v825, %v509
        %v842 = vadd.f32 %v826, %v505
        %v843 = vadd.f32 %v827, %v509
        %v844 = vadd.f32 %v828, %v505
        %v845 = vadd.f32 %v829, %v509
        %v846 = vadd.f32 %v830, %v505
        %v847 = vadd.f32 %v831, %v509
        %v848 = vadd.f32 %v832, %v505
        %v849 = vadd.f32 %v833, %v509
        %v850 = vadd.f32 %v834, %v505
        %v851 = vadd.f32 %v835, %v509
        %vm852 = vcmp.ge.f32.partialorder %v836, 0.0
        %vm853 = vcmp.ge.f32.partialorder %v837, 0.0
        %vm854 = vcmp.ge.f32.partialorder %v838, 0.0
        %vm855 = vcmp.ge.f32.partialorder %v839, 0.0
        %vm856 = vcmp.ge.f32.partialorder %v840, 0.0
        %vm857 = vcmp.ge.f32.partialorder %v841, 0.0
        %vm858 = vcmp.ge.f32.partialorder %v842, 0.0
        %vm859 = vcmp.ge.f32.partialorder %v843, 0.0
        %vm860 = vcmp.ge.f32.partialorder %v844, 0.0
        %vm861 = vcmp.ge.f32.partialorder %v845, 0.0
        %vm862 = vcmp.ge.f32.partialorder %v846, 0.0
        %vm863 = vcmp.ge.f32.partialorder %v847, 0.0
        %vm864 = vcmp.ge.f32.partialorder %v848, 0.0
        %vm865 = vcmp.ge.f32.partialorder %v849, 0.0
        %vm866 = vcmp.ge.f32.partialorder %v850, 0.0
        %vm867 = vcmp.ge.f32.partialorder %v851, 0.0
        %v868 = vmul.f32 %v836, %v548
        %v869 = vmul.f32 %v837, %v552
        %v870 = vmul.f32 %v838, %v548
        %v871 = vmul.f32 %v839, %v552
        %v872 = vmul.f32 %v840, %v548
        %v873 = vmul.f32 %v841, %v552
        %v874 = vmul.f32 %v842, %v548
        %v875 = vmul.f32 %v843, %v552
        %v876 = vmul.f32 %v844, %v548
        %v877 = vmul.f32 %v845, %v552
        %v878 = vmul.f32 %v846, %v548
        %v879 = vmul.f32 %v847, %v552
        %v880 = vmul.f32 %v848, %v548
        %v881 = vmul.f32 %v849, %v552
        %v882 = vmul.f32 %v850, %v548
        %v883 = vmul.f32 %v851, %v552
        %v884 = vsel %vm852, %v836, %v868
        %v885 = vsel %vm853, %v837, %v869
        %v886 = vsel %vm854, %v838, %v870
        %v887 = vsel %vm855, %v839, %v871
        %v888 = vsel %vm856, %v840, %v872
        %v889 = vsel %vm857, %v841, %v873
        %v890 = vsel %vm858, %v842, %v874
        %v891 = vsel %vm859, %v843, %v875
        %v892 = vsel %vm860, %v844, %v876
        %v893 = vsel %vm861, %v845, %v877
        %v894 = vsel %vm862, %v846, %v878
        %v895 = vsel %vm863, %v847, %v879
        %v896 = vsel %vm864, %v848, %v880
        %v897 = vsel %vm865, %v849, %v881
        %v898 = vsel %vm866, %v850, %v882
        %v899 = vsel %vm867, %v851, %v883
        %s900 = scalar_lea.vmem [#allocation2], 240
        %901 = vst [vmem:[%s900] sm:$0xff] %v884
        %902 = vst [vmem:[%s900 + $0x8] sm:$0xff] %v885
        %v905 = vrot.slane %v886, 6
        %v906 = vrot.slane %v887, 6
        %909 = vst [vmem:[%s900 + $0x10] sm:$0xfc] %v905
        %910 = vst [vmem:[%s900 + $0x18] sm:$0xfc] %v906
        %911 = vst [vmem:[%s900 + $0x20] sm:$0x3] %v905
        %912 = vst [vmem:[%s900 + $0x28] sm:$0x3] %v906
        %s913 = scalar_lea.vmem [#allocation2], 288
        %914 = vst [vmem:[%s913] sm:$0xff] %v888
        %915 = vst [vmem:[%s913 + $0x8] sm:$0xff] %v889
        %v918 = vrot.slane %v890, 6
        %v919 = vrot.slane %v891, 6
        %922 = vst [vmem:[%s913 + $0x10] sm:$0xfc] %v918
        %923 = vst [vmem:[%s913 + $0x18] sm:$0xfc] %v919
        %924 = vst [vmem:[%s913 + $0x20] sm:$0x3] %v918
        %925 = vst [vmem:[%s913 + $0x28] sm:$0x3] %v919
        %s926 = scalar_lea.vmem [#allocation2], 336
        %927 = vst [vmem:[%s926] sm:$0xff] %v892
        %928 = vst [vmem:[%s926 + $0x8] sm:$0xff] %v893
        %v931 = vrot.slane %v894, 6
        %v932 = vrot.slane %v895, 6
        %935 = vst [vmem:[%s926 + $0x10] sm:$0xfc] %v931
        %936 = vst [vmem:[%s926 + $0x18] sm:$0xfc] %v932
        %937 = vst [vmem:[%s926 + $0x20] sm:$0x3] %v931
        %938 = vst [vmem:[%s926 + $0x28] sm:$0x3] %v932
        %s939 = scalar_lea.vmem [#allocation2], 384
        %940 = vst [vmem:[%s939] sm:$0xff] %v896
        %941 = vst [vmem:[%s939 + $0x8] sm:$0xff] %v897
        %v944 = vrot.slane %v898, 6
        %v945 = vrot.slane %v899, 6
        %948 = vst [vmem:[%s939 + $0x10] sm:$0xfc] %v944
        %949 = vst [vmem:[%s939 + $0x18] sm:$0xfc] %v945
        %950 = vst [vmem:[%s939 + $0x20] sm:$0x3] %v944
        %951 = vst [vmem:[%s939 + $0x28] sm:$0x3] %v945
        %v952 = vld [vmem:[%s222 + $0x80] sm:$0xff]
        %v953 = vld [vmem:[%s222 + $0x88] sm:$0xff]
        %v954 = vld [vmem:[%s222 + $0x90] sm:$0xff]
        %v955 = vld [vmem:[%s222 + $0x98] sm:$0xff]
        %v956 = vld [vmem:[%s222 + $0xa0] sm:$0xff]
        %v957 = vld [vmem:[%s222 + $0xa8] sm:$0xff]
        %v958 = vld [vmem:[%s222 + $0xb0] sm:$0xff]
        %v959 = vld [vmem:[%s222 + $0xb8] sm:$0xff]
        %v960 = vpack.c.bf16 %v953, %v952
        %v961 = vpack.c.bf16 %v955, %v954
        %v962 = vpack.c.bf16 %v957, %v956
        %v963 = vpack.c.bf16 %v959, %v958
        %v964 = vld [vmem:[%s1] sm:$0xff]
        %v965 = vld [vmem:[%s1 + $0x8] sm:$0xff]
        %v966 = vld [vmem:[%s1 + $0x10] sm:$0xff]
        %v967 = vld [vmem:[%s1 + $0x18] sm:$0xff]
        %v968 = vld [vmem:[%s1 + $0x20] sm:$0xff]
        %v969 = vld [vmem:[%s1 + $0x28] sm:$0xff]
        %v970 = vld [vmem:[%s1 + $0x30] sm:$0xff]
        %v971 = vld [vmem:[%s1 + $0x38] sm:$0xff]
        %v972 = vld [vmem:[%s1 + $0x40] sm:$0xff]
        %v973 = vld [vmem:[%s1 + $0x48] sm:$0xff]
        %v974 = vld [vmem:[%s1 + $0x50] sm:$0xff]
        %v975 = vld [vmem:[%s1 + $0x58] sm:$0xff]
        %v976 = vld [vmem:[%s1 + $0x60] sm:$0xff]
        %v977 = vld [vmem:[%s1 + $0x68] sm:$0xff]
        %v978 = vld [vmem:[%s1 + $0x70] sm:$0xff]
        %v979 = vld [vmem:[%s1 + $0x78] sm:$0xff]
        %v996 = vunpack.c.l.b16 %v964
        %v997 = vunpack.c.h.b16 %v964
        %v998 = vunpack.c.l.b16 %v965
        %v999 = vunpack.c.h.b16 %v965
        %v1000 = vunpack.c.l.b16 %v966
        %v1001 = vunpack.c.h.b16 %v966
        %v1002 = vunpack.c.l.b16 %v967
        %v1003 = vunpack.c.h.b16 %v967
        %v1004 = vunpack.c.l.b16 %v968
        %v1005 = vunpack.c.h.b16 %v968
        %v1006 = vunpack.c.l.b16 %v969
        %v1007 = vunpack.c.h.b16 %v969
        %v1008 = vunpack.c.l.b16 %v970
        %v1009 = vunpack.c.h.b16 %v970
        %v1010 = vunpack.c.l.b16 %v971
        %v1011 = vunpack.c.h.b16 %v971
        %v1012 = vunpack.c.l.b16 %v972
        %v1013 = vunpack.c.h.b16 %v972
        %v1014 = vunpack.c.l.b16 %v973
        %v1015 = vunpack.c.h.b16 %v973
        %v1016 = vunpack.c.l.b16 %v974
        %v1017 = vunpack.c.h.b16 %v974
        %v1018 = vunpack.c.l.b16 %v975
        %v1019 = vunpack.c.h.b16 %v975
        %v1020 = vunpack.c.l.b16 %v976
        %v1021 = vunpack.c.h.b16 %v976
        %v1022 = vunpack.c.l.b16 %v977
        %v1023 = vunpack.c.h.b16 %v977
        %v1024 = vunpack.c.l.b16 %v978
        %v1025 = vunpack.c.h.b16 %v978
        %v1026 = vunpack.c.l.b16 %v979
        %v1027 = vunpack.c.h.b16 %v979
        %v1028 = vpack.c.b16 %v998, %v996
        %v1029 = vpack.c.b16 %v999, %v997
        %v1030 = vpack.c.b16 %v1002, %v1000
        %v1031 = vpack.c.b16 %v1003, %v1001
        %v1032 = vpack.c.b16 %v1006, %v1004
        %v1033 = vpack.c.b16 %v1007, %v1005
        %v1034 = vpack.c.b16 %v1010, %v1008
        %v1035 = vpack.c.b16 %v1011, %v1009
        %v1036 = vpack.c.b16 %v1014, %v1012
        %v1037 = vpack.c.b16 %v1015, %v1013
        %v1038 = vpack.c.b16 %v1018, %v1016
        %v1039 = vpack.c.b16 %v1019, %v1017
        %v1040 = vpack.c.b16 %v1022, %v1020
        %v1041 = vpack.c.b16 %v1023, %v1021
        %v1042 = vpack.c.b16 %v1026, %v1024
        %v1043 = vpack.c.b16 %v1027, %v1025
        %1060 = vmatprep.subr.bf16.mxu0 %v1043
        %1061 = vmatpush1.bf16.msra.mxu0 %v1042
        %1062 = vmatprep.subr.bf16.mxu0 %v1041
        %1063 = vmatpush1.bf16.msra.mxu0 %v1040
        %1064 = vmatprep.subr.bf16.mxu0 %v1039
        %1065 = vmatpush1.bf16.msra.mxu0 %v1038
        %1066 = vmatprep.subr.bf16.mxu0 %v1037
        %1067 = vmatpush1.bf16.msra.mxu0 %v1036
        %1068 = vmatprep.subr.bf16.mxu0 %v1035
        %1069 = vmatpush1.bf16.msra.mxu0 %v1034
        %1070 = vmatprep.subr.bf16.mxu0 %v1033
        %1071 = vmatpush1.bf16.msra.mxu0 %v1032
        %1072 = vmatprep.subr.bf16.mxu0 %v1031
        %1073 = vmatpush1.bf16.msra.mxu0 %v1030
        %1074 = vmatprep.subr.bf16.mxu0 %v1029
        %1075 = vmatpush1.bf16.msra.mxu0 %v1028
        %1076 = vmatprep.subr.bf16.mxu0 0
        %1077 = vmatpush2.bf16.msra.mxu0 0
        %1078 = vmatprep.subr.bf16.mxu0 0
        %1079 = vmatpush2.bf16.msra.mxu0 0
        %1080 = vmatprep.subr.bf16.mxu0 0
        %1081 = vmatpush2.bf16.msra.mxu0 0
        %1082 = vmatprep.subr.bf16.mxu0 0
        %1083 = vmatpush2.bf16.msra.mxu0 0
        %1084 = vmatprep.subr.bf16.mxu0 0
        %1085 = vmatpush2.bf16.msra.mxu0 0
        %1086 = vmatprep.subr.bf16.mxu0 0
        %1087 = vmatpush2.bf16.msra.mxu0 0
        %1088 = vmatprep.subr.bf16.mxu0 0
        %1089 = vmatpush2.bf16.msra.mxu0 0
        %1090 = vmatprep.subr.bf16.mxu0 0
        %1091 = vmatpush2.bf16.msra.mxu0 0
        %1092 = vmatprep.mubr.bf16.mxu0 0
        %1093 = vmatmul.mubr.bf16.gmra.mxu0 %v960
        %v1094 = vpop.f32.mrf.mxu0
        %v1095 = vadd.f32 0.0, %v1094
        %v1096 = vpop.f32.mrf.mxu0
        %v1097 = vadd.f32 0.0, %v1096
        %v1098 = vpop.f32.mrf.mxu0
        %v1099 = vadd.f32 0.0, %v1098
        %v1100 = vpop.f32.mrf.mxu0
        %v1101 = vadd.f32 0.0, %v1100
        %1102 = vmatprep.mubr.bf16.mxu0 0
        %1103 = vmatmul.mubr.bf16.gmra.mxu0 %v961
        %v1104 = vpop.f32.mrf.mxu0
        %v1105 = vadd.f32 0.0, %v1104
        %v1106 = vpop.f32.mrf.mxu0
        %v1107 = vadd.f32 0.0, %v1106
        %v1108 = vpop.f32.mrf.mxu0
        %v1109 = vadd.f32 0.0, %v1108
        %v1110 = vpop.f32.mrf.mxu0
        %v1111 = vadd.f32 0.0, %v1110
        %1112 = vmatprep.mubr.bf16.mxu0 0
        %1113 = vmatmul.mubr.bf16.gmra.mxu0 %v962
        %v1114 = vpop.f32.mrf.mxu0
        %v1115 = vadd.f32 0.0, %v1114
        %v1116 = vpop.f32.mrf.mxu0
        %v1117 = vadd.f32 0.0, %v1116
        %v1118 = vpop.f32.mrf.mxu0
        %v1119 = vadd.f32 0.0, %v1118
        %v1120 = vpop.f32.mrf.mxu0
        %v1121 = vadd.f32 0.0, %v1120
        %1122 = vmatprep.mubr.bf16.mxu0 0
        %1123 = vmatmul.mubr.bf16.gmra.mxu0 %v963
        %v1124 = vpop.f32.mrf.mxu0
        %v1125 = vadd.f32 0.0, %v1124
        %v1126 = vpop.f32.mrf.mxu0
        %v1127 = vadd.f32 0.0, %v1126
        %v1128 = vpop.f32.mrf.mxu0
        %v1129 = vadd.f32 0.0, %v1128
        %v1130 = vpop.f32.mrf.mxu0
        %v1131 = vadd.f32 0.0, %v1130
        %1132 = vdwg.mxu0
        %v1133 = vmul.f32 %v1095, %v478
        %v1134 = vmul.f32 %v1097, %v482
        %v1135 = vmul.f32 %v1099, %v478
        %v1136 = vmul.f32 %v1101, %v482
        %v1137 = vmul.f32 %v1105, %v478
        %v1138 = vmul.f32 %v1107, %v482
        %v1139 = vmul.f32 %v1109, %v478
        %v1140 = vmul.f32 %v1111, %v482
        %v1141 = vmul.f32 %v1115, %v478
        %v1142 = vmul.f32 %v1117, %v482
        %v1143 = vmul.f32 %v1119, %v478
        %v1144 = vmul.f32 %v1121, %v482
        %v1145 = vmul.f32 %v1125, %v478
        %v1146 = vmul.f32 %v1127, %v482
        %v1147 = vmul.f32 %v1129, %v478
        %v1148 = vmul.f32 %v1131, %v482
        %v1149 = vadd.f32 %v1133, %v505
        %v1150 = vadd.f32 %v1134, %v509
        %v1151 = vadd.f32 %v1135, %v505
        %v1152 = vadd.f32 %v1136, %v509
        %v1153 = vadd.f32 %v1137, %v505
        %v1154 = vadd.f32 %v1138, %v509
        %v1155 = vadd.f32 %v1139, %v505
        %v1156 = vadd.f32 %v1140, %v509
        %v1157 = vadd.f32 %v1141, %v505
        %v1158 = vadd.f32 %v1142, %v509
        %v1159 = vadd.f32 %v1143, %v505
        %v1160 = vadd.f32 %v1144, %v509
        %v1161 = vadd.f32 %v1145, %v505
        %v1162 = vadd.f32 %v1146, %v509
        %v1163 = vadd.f32 %v1147, %v505
        %v1164 = vadd.f32 %v1148, %v509
        %vm1165 = vcmp.ge.f32.partialorder %v1149, 0.0
        %vm1166 = vcmp.ge.f32.partialorder %v1150, 0.0
        %vm1167 = vcmp.ge.f32.partialorder %v1151, 0.0
        %vm1168 = vcmp.ge.f32.partialorder %v1152, 0.0
        %vm1169 = vcmp.ge.f32.partialorder %v1153, 0.0
        %vm1170 = vcmp.ge.f32.partialorder %v1154, 0.0
        %vm1171 = vcmp.ge.f32.partialorder %v1155, 0.0
        %vm1172 = vcmp.ge.f32.partialorder %v1156, 0.0
        %vm1173 = vcmp.ge.f32.partialorder %v1157, 0.0
        %vm1174 = vcmp.ge.f32.partialorder %v1158, 0.0
        %vm1175 = vcmp.ge.f32.partialorder %v1159, 0.0
        %vm1176 = vcmp.ge.f32.partialorder %v1160, 0.0
        %vm1177 = vcmp.ge.f32.partialorder %v1161, 0.0
        %vm1178 = vcmp.ge.f32.partialorder %v1162, 0.0
        %vm1179 = vcmp.ge.f32.partialorder %v1163, 0.0
        %vm1180 = vcmp.ge.f32.partialorder %v1164, 0.0
        %v1181 = vmul.f32 %v1149, %v548
        %v1182 = vmul.f32 %v1150, %v552
        %v1183 = vmul.f32 %v1151, %v548
        %v1184 = vmul.f32 %v1152, %v552
        %v1185 = vmul.f32 %v1153, %v548
        %v1186 = vmul.f32 %v1154, %v552
        %v1187 = vmul.f32 %v1155, %v548
        %v1188 = vmul.f32 %v1156, %v552
        %v1189 = vmul.f32 %v1157, %v548
        %v1190 = vmul.f32 %v1158, %v552
        %v1191 = vmul.f32 %v1159, %v548
        %v1192 = vmul.f32 %v1160, %v552
        %v1193 = vmul.f32 %v1161, %v548
        %v1194 = vmul.f32 %v1162, %v552
        %v1195 = vmul.f32 %v1163, %v548
        %v1196 = vmul.f32 %v1164, %v552
        %v1197 = vsel %vm1165, %v1149, %v1181
        %v1198 = vsel %vm1166, %v1150, %v1182
        %v1199 = vsel %vm1167, %v1151, %v1183
        %v1200 = vsel %vm1168, %v1152, %v1184
        %v1201 = vsel %vm1169, %v1153, %v1185
        %v1202 = vsel %vm1170, %v1154, %v1186
        %v1203 = vsel %vm1171, %v1155, %v1187
        %v1204 = vsel %vm1172, %v1156, %v1188
        %v1205 = vsel %vm1173, %v1157, %v1189
        %v1206 = vsel %vm1174, %v1158, %v1190
        %v1207 = vsel %vm1175, %v1159, %v1191
        %v1208 = vsel %vm1176, %v1160, %v1192
        %v1209 = vsel %vm1177, %v1161, %v1193
        %v1210 = vsel %vm1178, %v1162, %v1194
        %v1211 = vsel %vm1179, %v1163, %v1195
        %v1212 = vsel %vm1180, %v1164, %v1196
        %s1213 = scalar_lea.vmem [#allocation2], 432
        %1214 = vst [vmem:[%s1213] sm:$0xff] %v1197
        %1215 = vst [vmem:[%s1213 + $0x8] sm:$0xff] %v1198
        %v1218 = vrot.slane %v1199, 6
        %v1219 = vrot.slane %v1200, 6
        %1222 = vst [vmem:[%s1213 + $0x10] sm:$0xfc] %v1218
        %1223 = vst [vmem:[%s1213 + $0x18] sm:$0xfc] %v1219
        %1224 = vst [vmem:[%s1213 + $0x20] sm:$0x3] %v1218
        %1225 = vst [vmem:[%s1213 + $0x28] sm:$0x3] %v1219
        %s1226 = scalar_lea.vmem [#allocation2], 480
        %1227 = vst [vmem:[%s1226] sm:$0xff] %v1201
        %1228 = vst [vmem:[%s1226 + $0x8] sm:$0xff] %v1202
        %v1231 = vrot.slane %v1203, 6
        %v1232 = vrot.slane %v1204, 6
        %1235 = vst [vmem:[%s1226 + $0x10] sm:$0xfc] %v1231
        %1236 = vst [vmem:[%s1226 + $0x18] sm:$0xfc] %v1232
        %1237 = vst [vmem:[%s1226 + $0x20] sm:$0x3] %v1231
        %1238 = vst [vmem:[%s1226 + $0x28] sm:$0x3] %v1232
        %s1239 = scalar_lea.vmem [#allocation2], 528
        %1240 = vst [vmem:[%s1239] sm:$0xff] %v1205
        %1241 = vst [vmem:[%s1239 + $0x8] sm:$0xff] %v1206
        %v1244 = vrot.slane %v1207, 6
        %v1245 = vrot.slane %v1208, 6
        %1248 = vst [vmem:[%s1239 + $0x10] sm:$0xfc] %v1244
        %1249 = vst [vmem:[%s1239 + $0x18] sm:$0xfc] %v1245
        %1250 = vst [vmem:[%s1239 + $0x20] sm:$0x3] %v1244
        %1251 = vst [vmem:[%s1239 + $0x28] sm:$0x3] %v1245
        %s1252 = scalar_lea.vmem [#allocation2], 576
        %1253 = vst [vmem:[%s1252] sm:$0xff] %v1209
        %1254 = vst [vmem:[%s1252 + $0x8] sm:$0xff] %v1210
        %v1257 = vrot.slane %v1211, 6
        %v1258 = vrot.slane %v1212, 6
        %1261 = vst [vmem:[%s1252 + $0x10] sm:$0xfc] %v1257
        %1262 = vst [vmem:[%s1252 + $0x18] sm:$0xfc] %v1258
        %1263 = vst [vmem:[%s1252 + $0x20] sm:$0x3] %v1257
        %1264 = vst [vmem:[%s1252 + $0x28] sm:$0x3] %v1258
        %v1265 = vld [vmem:[%s222 + $0xc0] sm:$0xff]
        %v1266 = vld [vmem:[%s222 + $0xc8] sm:$0xff]
        %v1267 = vld [vmem:[%s222 + $0xd0] sm:$0xff]
        %v1268 = vld [vmem:[%s222 + $0xd8] sm:$0xff]
        %v1269 = vld [vmem:[%s222 + $0xe0] sm:$0xff]
        %v1270 = vld [vmem:[%s222 + $0xe8] sm:$0xff]
        %v1271 = vld [vmem:[%s222 + $0xf0] sm:$0xff]
        %v1272 = vld [vmem:[%s222 + $0xf8] sm:$0xff]
        %v1273 = vpack.c.bf16 %v1266, %v1265
        %v1274 = vpack.c.bf16 %v1268, %v1267
        %v1275 = vpack.c.bf16 %v1270, %v1269
        %v1276 = vpack.c.bf16 %v1272, %v1271
        %v1277 = vld [vmem:[%s1] sm:$0xff]
        %v1278 = vld [vmem:[%s1 + $0x8] sm:$0xff]
        %v1279 = vld [vmem:[%s1 + $0x10] sm:$0xff]
        %v1280 = vld [vmem:[%s1 + $0x18] sm:$0xff]
        %v1281 = vld [vmem:[%s1 + $0x20] sm:$0xff]
        %v1282 = vld [vmem:[%s1 + $0x28] sm:$0xff]
        %v1283 = vld [vmem:[%s1 + $0x30] sm:$0xff]
        %v1284 = vld [vmem:[%s1 + $0x38] sm:$0xff]
        %v1285 = vld [vmem:[%s1 + $0x40] sm:$0xff]
        %v1286 = vld [vmem:[%s1 + $0x48] sm:$0xff]
        %v1287 = vld [vmem:[%s1 + $0x50] sm:$0xff]
        %v1288 = vld [vmem:[%s1 + $0x58] sm:$0xff]
        %v1289 = vld [vmem:[%s1 + $0x60] sm:$0xff]
        %v1290 = vld [vmem:[%s1 + $0x68] sm:$0xff]
        %v1291 = vld [vmem:[%s1 + $0x70] sm:$0xff]
        %v1292 = vld [vmem:[%s1 + $0x78] sm:$0xff]
        %v1309 = vunpack.c.l.b16 %v1277
        %v1310 = vunpack.c.h.b16 %v1277
        %v1311 = vunpack.c.l.b16 %v1278
        %v1312 = vunpack.c.h.b16 %v1278
        %v1313 = vunpack.c.l.b16 %v1279
        %v1314 = vunpack.c.h.b16 %v1279
        %v1315 = vunpack.c.l.b16 %v1280
        %v1316 = vunpack.c.h.b16 %v1280
        %v1317 = vunpack.c.l.b16 %v1281
        %v1318 = vunpack.c.h.b16 %v1281
        %v1319 = vunpack.c.l.b16 %v1282
        %v1320 = vunpack.c.h.b16 %v1282
        %v1321 = vunpack.c.l.b16 %v1283
        %v1322 = vunpack.c.h.b16 %v1283
        %v1323 = vunpack.c.l.b16 %v1284
        %v1324 = vunpack.c.h.b16 %v1284
        %v1325 = vunpack.c.l.b16 %v1285
        %v1326 = vunpack.c.h.b16 %v1285
        %v1327 = vunpack.c.l.b16 %v1286
        %v1328 = vunpack.c.h.b16 %v1286
        %v1329 = vunpack.c.l.b16 %v1287
        %v1330 = vunpack.c.h.b16 %v1287
        %v1331 = vunpack.c.l.b16 %v1288
        %v1332 = vunpack.c.h.b16 %v1288
        %v1333 = vunpack.c.l.b16 %v1289
        %v1334 = vunpack.c.h.b16 %v1289
        %v1335 = vunpack.c.l.b16 %v1290
        %v1336 = vunpack.c.h.b16 %v1290
        %v1337 = vunpack.c.l.b16 %v1291
        %v1338 = vunpack.c.h.b16 %v1291
        %v1339 = vunpack.c.l.b16 %v1292
        %v1340 = vunpack.c.h.b16 %v1292
        %v1341 = vpack.c.b16 %v1311, %v1309
        %v1342 = vpack.c.b16 %v1312, %v1310
        %v1343 = vpack.c.b16 %v1315, %v1313
        %v1344 = vpack.c.b16 %v1316, %v1314
        %v1345 = vpack.c.b16 %v1319, %v1317
        %v1346 = vpack.c.b16 %v1320, %v1318
        %v1347 = vpack.c.b16 %v1323, %v1321
        %v1348 = vpack.c.b16 %v1324, %v1322
        %v1349 = vpack.c.b16 %v1327, %v1325
        %v1350 = vpack.c.b16 %v1328, %v1326
        %v1351 = vpack.c.b16 %v1331, %v1329
        %v1352 = vpack.c.b16 %v1332, %v1330
        %v1353 = vpack.c.b16 %v1335, %v1333
        %v1354 = vpack.c.b16 %v1336, %v1334
        %v1355 = vpack.c.b16 %v1339, %v1337
        %v1356 = vpack.c.b16 %v1340, %v1338
        %1373 = vmatprep.subr.bf16.mxu0 %v1356
        %1374 = vmatpush1.bf16.msra.mxu0 %v1355
        %1375 = vmatprep.subr.bf16.mxu0 %v1354
        %1376 = vmatpush1.bf16.msra.mxu0 %v1353
        %1377 = vmatprep.subr.bf16.mxu0 %v1352
        %1378 = vmatpush1.bf16.msra.mxu0 %v1351
        %1379 = vmatprep.subr.bf16.mxu0 %v1350
        %1380 = vmatpush1.bf16.msra.mxu0 %v1349
        %1381 = vmatprep.subr.bf16.mxu0 %v1348
        %1382 = vmatpush1.bf16.msra.mxu0 %v1347
        %1383 = vmatprep.subr.bf16.mxu0 %v1346
        %1384 = vmatpush1.bf16.msra.mxu0 %v1345
        %1385 = vmatprep.subr.bf16.mxu0 %v1344
        %1386 = vmatpush1.bf16.msra.mxu0 %v1343
        %1387 = vmatprep.subr.bf16.mxu0 %v1342
        %1388 = vmatpush1.bf16.msra.mxu0 %v1341
        %1389 = vmatprep.subr.bf16.mxu0 0
        %1390 = vmatpush2.bf16.msra.mxu0 0
        %1391 = vmatprep.subr.bf16.mxu0 0
        %1392 = vmatpush2.bf16.msra.mxu0 0
        %1393 = vmatprep.subr.bf16.mxu0 0
        %1394 = vmatpush2.bf16.msra.mxu0 0
        %1395 = vmatprep.subr.bf16.mxu0 0
        %1396 = vmatpush2.bf16.msra.mxu0 0
        %1397 = vmatprep.subr.bf16.mxu0 0
        %1398 = vmatpush2.bf16.msra.mxu0 0
        %1399 = vmatprep.subr.bf16.mxu0 0
        %1400 = vmatpush2.bf16.msra.mxu0 0
        %1401 = vmatprep.subr.bf16.mxu0 0
        %1402 = vmatpush2.bf16.msra.mxu0 0
        %1403 = vmatprep.subr.bf16.mxu0 0
        %1404 = vmatpush2.bf16.msra.mxu0 0
        %1405 = vmatprep.mubr.bf16.mxu0 0
        %1406 = vmatmul.mubr.bf16.gmra.mxu0 %v1273
        %v1407 = vpop.f32.mrf.mxu0
        %v1408 = vadd.f32 0.0, %v1407
        %v1409 = vpop.f32.mrf.mxu0
        %v1410 = vadd.f32 0.0, %v1409
        %v1411 = vpop.f32.mrf.mxu0
        %v1412 = vadd.f32 0.0, %v1411
        %v1413 = vpop.f32.mrf.mxu0
        %v1414 = vadd.f32 0.0, %v1413
        %1415 = vmatprep.mubr.bf16.mxu0 0
        %1416 = vmatmul.mubr.bf16.gmra.mxu0 %v1274
        %v1417 = vpop.f32.mrf.mxu0
        %v1418 = vadd.f32 0.0, %v1417
        %v1419 = vpop.f32.mrf.mxu0
        %v1420 = vadd.f32 0.0, %v1419
        %v1421 = vpop.f32.mrf.mxu0
        %v1422 = vadd.f32 0.0, %v1421
        %v1423 = vpop.f32.mrf.mxu0
        %v1424 = vadd.f32 0.0, %v1423
        %1425 = vmatprep.mubr.bf16.mxu0 0
        %1426 = vmatmul.mubr.bf16.gmra.mxu0 %v1275
        %v1427 = vpop.f32.mrf.mxu0
        %v1428 = vadd.f32 0.0, %v1427
        %v1429 = vpop.f32.mrf.mxu0
        %v1430 = vadd.f32 0.0, %v1429
        %v1431 = vpop.f32.mrf.mxu0
        %v1432 = vadd.f32 0.0, %v1431
        %v1433 = vpop.f32.mrf.mxu0
        %v1434 = vadd.f32 0.0, %v1433
        %1435 = vmatprep.mubr.bf16.mxu0 0
        %1436 = vmatmul.mubr.bf16.gmra.mxu0 %v1276
        %v1437 = vpop.f32.mrf.mxu0
        %v1438 = vadd.f32 0.0, %v1437
        %v1439 = vpop.f32.mrf.mxu0
        %v1440 = vadd.f32 0.0, %v1439
        %v1441 = vpop.f32.mrf.mxu0
        %v1442 = vadd.f32 0.0, %v1441
        %v1443 = vpop.f32.mrf.mxu0
        %v1444 = vadd.f32 0.0, %v1443
        %1445 = vdwg.mxu0
        %v1446 = vmul.f32 %v1408, %v478
        %v1447 = vmul.f32 %v1410, %v482
        %v1448 = vmul.f32 %v1412, %v478
        %v1449 = vmul.f32 %v1414, %v482
        %v1450 = vmul.f32 %v1418, %v478
        %v1451 = vmul.f32 %v1420, %v482
        %v1452 = vmul.f32 %v1422, %v478
        %v1453 = vmul.f32 %v1424, %v482
        %v1454 = vmul.f32 %v1428, %v478
        %v1455 = vmul.f32 %v1430, %v482
        %v1456 = vmul.f32 %v1432, %v478
        %v1457 = vmul.f32 %v1434, %v482
        %v1458 = vmul.f32 %v1438, %v478
        %v1459 = vmul.f32 %v1440, %v482
        %v1460 = vmul.f32 %v1442, %v478
        %v1461 = vmul.f32 %v1444, %v482
        %v1462 = vadd.f32 %v1446, %v505
        %v1463 = vadd.f32 %v1447, %v509
        %v1464 = vadd.f32 %v1448, %v505
        %v1465 = vadd.f32 %v1449, %v509
        %v1466 = vadd.f32 %v1450, %v505
        %v1467 = vadd.f32 %v1451, %v509
        %v1468 = vadd.f32 %v1452, %v505
        %v1469 = vadd.f32 %v1453, %v509
        %v1470 = vadd.f32 %v1454, %v505
        %v1471 = vadd.f32 %v1455, %v509
        %v1472 = vadd.f32 %v1456, %v505
        %v1473 = vadd.f32 %v1457, %v509
        %v1474 = vadd.f32 %v1458, %v505
        %v1475 = vadd.f32 %v1459, %v509
        %v1476 = vadd.f32 %v1460, %v505
        %v1477 = vadd.f32 %v1461, %v509
        %vm1478 = vcmp.ge.f32.partialorder %v1462, 0.0
        %vm1479 = vcmp.ge.f32.partialorder %v1463, 0.0
        %vm1480 = vcmp.ge.f32.partialorder %v1464, 0.0
        %vm1481 = vcmp.ge.f32.partialorder %v1465, 0.0
        %vm1482 = vcmp.ge.f32.partialorder %v1466, 0.0
        %vm1483 = vcmp.ge.f32.partialorder %v1467, 0.0
        %vm1484 = vcmp.ge.f32.partialorder %v1468, 0.0
        %vm1485 = vcmp.ge.f32.partialorder %v1469, 0.0
        %vm1486 = vcmp.ge.f32.partialorder %v1470, 0.0
        %vm1487 = vcmp.ge.f32.partialorder %v1471, 0.0
        %vm1488 = vcmp.ge.f32.partialorder %v1472, 0.0
        %vm1489 = vcmp.ge.f32.partialorder %v1473, 0.0
        %vm1490 = vcmp.ge.f32.partialorder %v1474, 0.0
        %vm1491 = vcmp.ge.f32.partialorder %v1475, 0.0
        %vm1492 = vcmp.ge.f32.partialorder %v1476, 0.0
        %vm1493 = vcmp.ge.f32.partialorder %v1477, 0.0
        %v1494 = vmul.f32 %v1462, %v548
        %v1495 = vmul.f32 %v1463, %v552
        %v1496 = vmul.f32 %v1464, %v548
        %v1497 = vmul.f32 %v1465, %v552
        %v1498 = vmul.f32 %v1466, %v548
        %v1499 = vmul.f32 %v1467, %v552
        %v1500 = vmul.f32 %v1468, %v548
        %v1501 = vmul.f32 %v1469, %v552
        %v1502 = vmul.f32 %v1470, %v548
        %v1503 = vmul.f32 %v1471, %v552
        %v1504 = vmul.f32 %v1472, %v548
        %v1505 = vmul.f32 %v1473, %v552
        %v1506 = vmul.f32 %v1474, %v548
        %v1507 = vmul.f32 %v1475, %v552
        %v1508 = vmul.f32 %v1476, %v548
        %v1509 = vmul.f32 %v1477, %v552
        %v1510 = vsel %vm1478, %v1462, %v1494
        %v1511 = vsel %vm1479, %v1463, %v1495
        %v1512 = vsel %vm1480, %v1464, %v1496
        %v1513 = vsel %vm1481, %v1465, %v1497
        %v1514 = vsel %vm1482, %v1466, %v1498
        %v1515 = vsel %vm1483, %v1467, %v1499
        %v1516 = vsel %vm1484, %v1468, %v1500
        %v1517 = vsel %vm1485, %v1469, %v1501
        %v1518 = vsel %vm1486, %v1470, %v1502
        %v1519 = vsel %vm1487, %v1471, %v1503
        %v1520 = vsel %vm1488, %v1472, %v1504
        %v1521 = vsel %vm1489, %v1473, %v1505
        %v1522 = vsel %vm1490, %v1474, %v1506
        %v1523 = vsel %vm1491, %v1475, %v1507
        %v1524 = vsel %vm1492, %v1476, %v1508
        %v1525 = vsel %vm1493, %v1477, %v1509
        %s1526 = scalar_lea.vmem [#allocation2], 624
        %1527 = vst [vmem:[%s1526] sm:$0xff] %v1510
        %1528 = vst [vmem:[%s1526 + $0x8] sm:$0xff] %v1511
        %v1531 = vrot.slane %v1512, 6
        %v1532 = vrot.slane %v1513, 6
        %1535 = vst [vmem:[%s1526 + $0x10] sm:$0xfc] %v1531
        %1536 = vst [vmem:[%s1526 + $0x18] sm:$0xfc] %v1532
        %1537 = vst [vmem:[%s1526 + $0x20] sm:$0x3] %v1531
        %1538 = vst [vmem:[%s1526 + $0x28] sm:$0x3] %v1532
        %s1539 = scalar_lea.vmem [#allocation2], 672
        %1540 = vst [vmem:[%s1539] sm:$0xff] %v1514
        %1541 = vst [vmem:[%s1539 + $0x8] sm:$0xff] %v1515
        %v1544 = vrot.slane %v1516, 6
        %v1545 = vrot.slane %v1517, 6
        %1548 = vst [vmem:[%s1539 + $0x10] sm:$0xfc] %v1544
        %1549 = vst [vmem:[%s1539 + $0x18] sm:$0xfc] %v1545
        %1550 = vst [vmem:[%s1539 + $0x20] sm:$0x3] %v1544
        %1551 = vst [vmem:[%s1539 + $0x28] sm:$0x3] %v1545
        %s1552 = scalar_lea.vmem [#allocation2], 720
        %1553 = vst [vmem:[%s1552] sm:$0xff] %v1518
        %1554 = vst [vmem:[%s1552 + $0x8] sm:$0xff] %v1519
        %v1557 = vrot.slane %v1520, 6
        %v1558 = vrot.slane %v1521, 6
        %1561 = vst [vmem:[%s1552 + $0x10] sm:$0xfc] %v1557
        %1562 = vst [vmem:[%s1552 + $0x18] sm:$0xfc] %v1558
        %1563 = vst [vmem:[%s1552 + $0x20] sm:$0x3] %v1557
        %1564 = vst [vmem:[%s1552 + $0x28] sm:$0x3] %v1558
        %s1565 = scalar_lea.vmem [#allocation2], 768
        %1566 = vst [vmem:[%s1565] sm:$0xff] %v1522
        %1567 = vst [vmem:[%s1565 + $0x8] sm:$0xff] %v1523
        %v1570 = vrot.slane %v1524, 6
        %v1571 = vrot.slane %v1525, 6
        %1574 = vst [vmem:[%s1565 + $0x10] sm:$0xfc] %v1570
        %1575 = vst [vmem:[%s1565 + $0x18] sm:$0xfc] %v1571
        %1576 = vst [vmem:[%s1565 + $0x20] sm:$0x3] %v1570
        %1577 = vst [vmem:[%s1565 + $0x28] sm:$0x3] %v1571
        %s1578 = scalar_lea.vmem %s2, 6
        %v1579 = vld [vmem:[%s1578] ss:$8 sm:$0x3]
        %v1581 = vlaneseq
        %v1582 = vshrl.u32 %v1581, 7
        %v1583 = vsub.s32 0, %v1582
        %v1584 = vrot.slane %v1579, %v1583
        %v1585 = vlaneseq
        %v1586 = vshrl.u32 %v1585, 7
        %v1587 = vsub.s32 1, %v1586
        %v1588 = vrot.slane %v1579, %v1587
        %s1591 = scalar_lea.vmem %s2, 7
        %v1592 = vld [vmem:[%s1591] ss:$8 sm:$0x3]
        %v1594 = vlaneseq
        %v1595 = vshrl.u32 %v1594, 7
        %v1596 = vsub.s32 0, %v1595
        %v1597 = vrot.slane %v1592, %v1596
        %v1598 = vlaneseq
        %v1599 = vshrl.u32 %v1598, 7
        %v1600 = vsub.s32 1, %v1599
        %v1601 = vrot.slane %v1592, %v1600
        %s1604 = scalar_lea.vmem %s2, 16
        %v1605 = vld [vmem:[%s1604] ss:$8 sm:$0x3]
        %v1607 = vlaneseq
        %v1608 = vshrl.u32 %v1607, 7
        %v1609 = vsub.s32 0, %v1608
        %v1610 = vrot.slane %v1605, %v1609
        %v1611 = vlaneseq
        %v1612 = vshrl.u32 %v1611, 7
        %v1613 = vsub.s32 1, %v1612
        %v1614 = vrot.slane %v1605, %v1613
        %s1617 = scalar_lea.vmem %s2, 17
        %v1618 = vld [vmem:[%s1617] ss:$8 sm:$0x3]
        %v1620 = vlaneseq
        %v1621 = vshrl.u32 %v1620, 7
        %v1622 = vsub.s32 0, %v1621
        %v1623 = vrot.slane %v1618, %v1622
        %v1624 = vlaneseq
        %v1625 = vshrl.u32 %v1624, 7
        %v1626 = vsub.s32 1, %v1625
        %v1627 = vrot.slane %v1618, %v1626
        %s1630 = scalar_lea.vmem %s2, 18
        %v1631 = vld [vmem:[%s1630] ss:$8 sm:$0x3]
        %v1633 = vlaneseq
        %v1634 = vshrl.u32 %v1633, 7
        %v1635 = vsub.s32 0, %v1634
        %v1636 = vrot.slane %v1631, %v1635
        %v1637 = vlaneseq
        %v1638 = vshrl.u32 %v1637, 7
        %v1639 = vsub.s32 1, %v1638
        %v1640 = vrot.slane %v1631, %v1639
        %s1643 = scalar_lea.vmem %s2, 19
        %v1644 = vld [vmem:[%s1643] ss:$8 sm:$0x3]
        %v1646 = vlaneseq
        %v1647 = vshrl.u32 %v1646, 7
        %v1648 = vsub.s32 0, %v1647
        %v1649 = vrot.slane %v1644, %v1648
        %v1650 = vlaneseq
        %v1651 = vshrl.u32 %v1650, 7
        %v1652 = vsub.s32 1, %v1651
        %v1653 = vrot.slane %v1644, %v1652
        %s1656 = scalar_lea.vmem %s2, 20
        %v1657 = vld [vmem:[%s1656] ss:$8 sm:$0x3]
        %v1659 = vlaneseq
        %v1660 = vshrl.u32 %v1659, 7
        %v1661 = vsub.s32 0, %v1660
        %v1662 = vrot.slane %v1657, %v1661
        %v1663 = vlaneseq
        %v1664 = vshrl.u32 %v1663, 7
        %v1665 = vsub.s32 1, %v1664
        %v1666 = vrot.slane %v1657, %v1665
        %s1669 = scalar_lea.vmem %s2, 21
        %v1670 = vld [vmem:[%s1669] ss:$8 sm:$0x3]
        %v1672 = vlaneseq
        %v1673 = vshrl.u32 %v1672, 7
        %v1674 = vsub.s32 0, %v1673
        %v1675 = vrot.slane %v1670, %v1674
        %v1676 = vlaneseq
        %v1677 = vshrl.u32 %v1676, 7
        %v1678 = vsub.s32 1, %v1677
        %v1679 = vrot.slane %v1670, %v1678
        %s1682 = scalar_lea.vmem %s2, 22
        %v1683 = vld [vmem:[%s1682] ss:$8 sm:$0x3]
        %v1685 = vlaneseq
        %v1686 = vshrl.u32 %v1685, 7
        %v1687 = vsub.s32 0, %v1686
        %v1688 = vrot.slane %v1683, %v1687
        %v1689 = vlaneseq
        %v1690 = vshrl.u32 %v1689, 7
        %v1691 = vsub.s32 1, %v1690
        %v1692 = vrot.slane %v1683, %v1691
        %s1695 = scalar_lea.vmem %s2, 3
        %v1696 = vld [vmem:[%s1695] ss:$8 sm:$0x3]
        %v1698 = vlaneseq
        %v1699 = vshrl.u32 %v1698, 7
        %v1700 = vsub.s32 0, %v1699
        %v1701 = vrot.slane %v1696, %v1700
        %v1702 = vlaneseq
        %v1703 = vshrl.u32 %v1702, 7
        %v1704 = vsub.s32 1, %v1703
        %v1705 = vrot.slane %v1696, %v1704
        %s1708 = scalar_lea.vmem %s2, 4
        %v1709 = vld [vmem:[%s1708] ss:$8 sm:$0x3]
        %v1711 = vlaneseq
        %v1712 = vshrl.u32 %v1711, 7
        %v1713 = vsub.s32 0, %v1712
        %v1714 = vrot.slane %v1709, %v1713
        %v1715 = vlaneseq
        %v1716 = vshrl.u32 %v1715, 7
        %v1717 = vsub.s32 1, %v1716
        %v1718 = vrot.slane %v1709, %v1717
        %s1721 = scalar_lea.vmem %s2, 5
        %v1722 = vld [vmem:[%s1721] ss:$8 sm:$0x3]
        %v1724 = vlaneseq
        %v1725 = vshrl.u32 %v1724, 7
        %v1726 = vsub.s32 0, %v1725
        %v1727 = vrot.slane %v1722, %v1726
        %v1728 = vlaneseq
        %v1729 = vshrl.u32 %v1728, 7
        %v1730 = vsub.s32 1, %v1729
        %v1731 = vrot.slane %v1722, %v1730
        %v1734 = vld [vmem:[#allocation2] sm:$0xff]
        %v1735 = vld [vmem:[#allocation2 + $0x8] sm:$0xff]
        %v1736 = vld [vmem:[#allocation2 + $0x10] sm:$0xff]
        %v1737 = vld [vmem:[#allocation2 + $0x18] sm:$0xff]
        %v1738 = vld [vmem:[#allocation2 + $0x20] sm:$0x3]
        %v1739 = vld [vmem:[#allocation2 + $0x28] sm:$0x3]
        %v1740 = vmul.f32 %v1736, %v1584
        %v1741 = vmul.f32 %v1737, %v1588
        %v1742 = vmul.f32 %v1738, %v1584
        %v1743 = vmul.f32 %v1739, %v1588
        %v1744 = vadd.f32 %v1740, 0.0
        %v1745 = vadd.f32 %v1741, 0.0
        %v1746 = vadd.f32 %v1742, 0.0
        %v1747 = vadd.f32 %v1743, 0.0
        %v1748 = vmul.f32 %v1734, %v1597
        %v1749 = vmul.f32 %v1735, %v1601
        %v1752 = vrot.slane %v1748, 7
        %v1753 = vrot.slane %v1749, 7
        %v1756 = vadd.f32 %v1744, %v1752
        %v1757 = vadd.f32 %v1745, %v1753
        %v1758 = vadd.f32 %v1746, %v1752
        %v1759 = vadd.f32 %v1747, %v1753
        %v1760 = vmul.f32 %v1736, %v1610
        %v1761 = vmul.f32 %v1737, %v1614
        %v1762 = vmul.f32 %v1738, %v1610
        %v1763 = vmul.f32 %v1739, %v1614
        %vm1768 = vcmask 1046528
        %v1769 = vrot.slane %v1760, 1
        %v1770 = vrot.slane %v1762, 1
        %v1771 = vsel %vm1768, %v1769, %v1770
        %v1772 = vrot.slane %v1761, 1
        %v1773 = vrot.slane %v1763, 1
        %v1774 = vsel %vm1768, %v1772, %v1773
        %v1779 = vadd.f32 %v1756, %v1771
        %v1780 = vadd.f32 %v1757, %v1774
        %v1781 = vadd.f32 %v1758, %v1770
        %v1782 = vadd.f32 %v1759, %v1773
        %v1783 = vld [vmem:[%s587] sm:$0xff]
        %v1784 = vld [vmem:[%s587 + $0x8] sm:$0xff]
        %v1785 = vld [vmem:[%s587 + $0x10] sm:$0xff]
        %v1786 = vld [vmem:[%s587 + $0x18] sm:$0xff]
        %v1787 = vld [vmem:[%s587 + $0x20] sm:$0x3]
        %v1788 = vld [vmem:[%s587 + $0x28] sm:$0x3]
        %v1789 = vmul.f32 %v1785, %v1623
        %v1790 = vmul.f32 %v1786, %v1627
        %v1791 = vmul.f32 %v1787, %v1623
        %v1792 = vmul.f32 %v1788, %v1627
        %v1793 = vadd.f32 %v1779, %v1789
        %v1794 = vadd.f32 %v1780, %v1790
        %v1795 = vadd.f32 %v1781, %v1791
        %v1796 = vadd.f32 %v1782, %v1792
        %v1797 = vmul.f32 %v1783, %v1636
        %v1798 = vmul.f32 %v1784, %v1640
        %v1801 = vrot.slane %v1797, 7
        %v1802 = vrot.slane %v1798, 7
        %v1805 = vadd.f32 %v1793, %v1801
        %v1806 = vadd.f32 %v1794, %v1802
        %v1807 = vadd.f32 %v1795, %v1801
        %v1808 = vadd.f32 %v1796, %v1802
        %v1809 = vmul.f32 %v1785, %v1649
        %v1810 = vmul.f32 %v1786, %v1653
        %v1811 = vmul.f32 %v1787, %v1649
        %v1812 = vmul.f32 %v1788, %v1653
        %v1817 = vrot.slane %v1809, 1
        %v1818 = vrot.slane %v1811, 1
        %v1819 = vsel %vm1768, %v1817, %v1818
        %v1820 = vrot.slane %v1810, 1
        %v1821 = vrot.slane %v1812, 1
        %v1822 = vsel %vm1768, %v1820, %v1821
        %v1827 = vadd.f32 %v1805, %v1819
        %v1828 = vadd.f32 %v1806, %v1822
        %v1829 = vadd.f32 %v1807, %v1818
        %v1830 = vadd.f32 %v1808, %v1821
        %v1831 = vld [vmem:[%s600] sm:$0xff]
        %v1832 = vld [vmem:[%s600 + $0x8] sm:$0xff]
        %v1833 = vld [vmem:[%s600 + $0x10] sm:$0xff]
        %v1834 = vld [vmem:[%s600 + $0x18] sm:$0xff]
        %v1835 = vld [vmem:[%s600 + $0x20] sm:$0x3]
        %v1836 = vld [vmem:[%s600 + $0x28] sm:$0x3]
        %v1837 = vmul.f32 %v1833, %v1662
        %v1838 = vmul.f32 %v1834, %v1666
        %v1839 = vmul.f32 %v1835, %v1662
        %v1840 = vmul.f32 %v1836, %v1666
        %v1841 = vadd.f32 %v1827, %v1837
        %v1842 = vadd.f32 %v1828, %v1838
        %v1843 = vadd.f32 %v1829, %v1839
        %v1844 = vadd.f32 %v1830, %v1840
        %v1845 = vmul.f32 %v1831, %v1675
        %v1846 = vmul.f32 %v1832, %v1679
        %v1849 = vrot.slane %v1845, 7
        %v1850 = vrot.slane %v1846, 7
        %v1853 = vadd.f32 %v1841, %v1849
        %v1854 = vadd.f32 %v1842, %v1850
        %v1855 = vadd.f32 %v1843, %v1849
        %v1856 = vadd.f32 %v1844, %v1850
        %v1857 = vmul.f32 %v1833, %v1688
        %v1858 = vmul.f32 %v1834, %v1692
        %v1859 = vmul.f32 %v1835, %v1688
        %v1860 = vmul.f32 %v1836, %v1692
        %v1865 = vrot.slane %v1857, 1
        %v1866 = vrot.slane %v1859, 1
        %v1867 = vsel %vm1768, %v1865, %v1866
        %v1868 = vrot.slane %v1858, 1
        %v1869 = vrot.slane %v1860, 1
        %v1870 = vsel %vm1768, %v1868, %v1869
        %v1875 = vadd.f32 %v1853, %v1867
        %v1876 = vadd.f32 %v1854, %v1870
        %v1877 = vadd.f32 %v1855, %v1866
        %v1878 = vadd.f32 %v1856, %v1869
        %v1879 = vmul.f32 %v1875, %v1701
        %v1880 = vmul.f32 %v1876, %v1705
        %v1881 = vmul.f32 %v1877, %v1701
        %v1882 = vmul.f32 %v1878, %v1705
        %v1883 = vadd.f32 %v1879, %v1714
        %v1884 = vadd.f32 %v1880, %v1718
        %v1885 = vadd.f32 %v1881, %v1714
        %v1886 = vadd.f32 %v1882, %v1718
        %vm1887 = vcmp.ge.f32.partialorder %v1883, 0.0
        %vm1888 = vcmp.ge.f32.partialorder %v1884, 0.0
        %vm1889 = vcmp.ge.f32.partialorder %v1885, 0.0
        %vm1890 = vcmp.ge.f32.partialorder %v1886, 0.0
        %v1891 = vmul.f32 %v1883, %v1727
        %v1892 = vmul.f32 %v1884, %v1731
        %v1893 = vmul.f32 %v1885, %v1727
        %v1894 = vmul.f32 %v1886, %v1731
        %v1895 = vsel %vm1887, %v1883, %v1891
        %v1896 = vsel %vm1888, %v1884, %v1892
        %v1897 = vsel %vm1889, %v1885, %v1893
        %v1898 = vsel %vm1890, %v1886, %v1894
        %v1903 = vrot.slane %v1895, 1
        %v1904 = vrot.slane %v1897, 1
        %v1905 = vsel %vm1768, %v1903, %v1904
        %v1906 = vrot.slane %v1896, 1
        %v1907 = vrot.slane %v1898, 1
        %v1908 = vsel %vm1768, %v1906, %v1907
        %1911 = vst [vmem:[#allocation3] sm:$0xff] %v1905
        %1912 = vst [vmem:[#allocation3 + $0x8] sm:$0xff] %v1908
        %v1913 = vld [vmem:[%s600] sm:$0xff]
        %v1914 = vld [vmem:[%s600 + $0x8] sm:$0xff]
        %v1915 = vld [vmem:[%s600 + $0x10] sm:$0xff]
        %v1916 = vld [vmem:[%s600 + $0x18] sm:$0xff]
        %v1917 = vld [vmem:[%s600 + $0x20] sm:$0x3]
        %v1918 = vld [vmem:[%s600 + $0x28] sm:$0x3]
        %v1919 = vmul.f32 %v1915, %v1584
        %v1920 = vmul.f32 %v1916, %v1588
        %v1921 = vmul.f32 %v1917, %v1584
        %v1922 = vmul.f32 %v1918, %v1588
        %v1923 = vadd.f32 %v1919, 0.0
        %v1924 = vadd.f32 %v1920, 0.0
        %v1925 = vadd.f32 %v1921, 0.0
        %v1926 = vadd.f32 %v1922, 0.0
        %v1927 = vmul.f32 %v1913, %v1597
        %v1928 = vmul.f32 %v1914, %v1601
        %v1931 = vrot.slane %v1927, 7
        %v1932 = vrot.slane %v1928, 7
        %v1935 = vadd.f32 %v1923, %v1931
        %v1936 = vadd.f32 %v1924, %v1932
        %v1937 = vadd.f32 %v1925, %v1931
        %v1938 = vadd.f32 %v1926, %v1932
        %v1939 = vmul.f32 %v1915, %v1610
        %v1940 = vmul.f32 %v1916, %v1614
        %v1941 = vmul.f32 %v1917, %v1610
        %v1942 = vmul.f32 %v1918, %v1614
        %v1947 = vrot.slane %v1939, 1
        %v1948 = vrot.slane %v1941, 1
        %v1949 = vsel %vm1768, %v1947, %v1948
        %v1950 = vrot.slane %v1940, 1
        %v1951 = vrot.slane %v1942, 1
        %v1952 = vsel %vm1768, %v1950, %v1951
        %v1957 = vadd.f32 %v1935, %v1949
        %v1958 = vadd.f32 %v1936, %v1952
        %v1959 = vadd.f32 %v1937, %v1948
        %v1960 = vadd.f32 %v1938, %v1951
        %v1961 = vld [vmem:[%s613] sm:$0xff]
        %v1962 = vld [vmem:[%s613 + $0x8] sm:$0xff]
        %v1963 = vld [vmem:[%s613 + $0x10] sm:$0xff]
        %v1964 = vld [vmem:[%s613 + $0x18] sm:$0xff]
        %v1965 = vld [vmem:[%s613 + $0x20] sm:$0x3]
        %v1966 = vld [vmem:[%s613 + $0x28] sm:$0x3]
        %v1967 = vmul.f32 %v1963, %v1623
        %v1968 = vmul.f32 %v1964, %v1627
        %v1969 = vmul.f32 %v1965, %v1623
        %v1970 = vmul.f32 %v1966, %v1627
        %v1971 = vadd.f32 %v1957, %v1967
        %v1972 = vadd.f32 %v1958, %v1968
        %v1973 = vadd.f32 %v1959, %v1969
        %v1974 = vadd.f32 %v1960, %v1970
        %v1975 = vmul.f32 %v1961, %v1636
        %v1976 = vmul.f32 %v1962, %v1640
        %v1979 = vrot.slane %v1975, 7
        %v1980 = vrot.slane %v1976, 7
        %v1983 = vadd.f32 %v1971, %v1979
        %v1984 = vadd.f32 %v1972, %v1980
        %v1985 = vadd.f32 %v1973, %v1979
        %v1986 = vadd.f32 %v1974, %v1980
        %v1987 = vmul.f32 %v1963, %v1649
        %v1988 = vmul.f32 %v1964, %v1653
        %v1989 = vmul.f32 %v1965, %v1649
        %v1990 = vmul.f32 %v1966, %v1653
        %v1995 = vrot.slane %v1987, 1
        %v1996 = vrot.slane %v1989, 1
        %v1997 = vsel %vm1768, %v1995, %v1996
        %v1998 = vrot.slane %v1988, 1
        %v1999 = vrot.slane %v1990, 1
        %v2000 = vsel %vm1768, %v1998, %v1999
        %v2005 = vadd.f32 %v1983, %v1997
        %v2006 = vadd.f32 %v1984, %v2000
        %v2007 = vadd.f32 %v1985, %v1996
        %v2008 = vadd.f32 %v1986, %v1999
        %v2009 = vld [vmem:[%s626] sm:$0xff]
        %v2010 = vld [vmem:[%s626 + $0x8] sm:$0xff]
        %v2011 = vld [vmem:[%s626 + $0x10] sm:$0xff]
        %v2012 = vld [vmem:[%s626 + $0x18] sm:$0xff]
        %v2013 = vld [vmem:[%s626 + $0x20] sm:$0x3]
        %v2014 = vld [vmem:[%s626 + $0x28] sm:$0x3]
        %v2015 = vmul.f32 %v2011, %v1662
        %v2016 = vmul.f32 %v2012, %v1666
        %v2017 = vmul.f32 %v2013, %v1662
        %v2018 = vmul.f32 %v2014, %v1666
        %v2019 = vadd.f32 %v2005, %v2015
        %v2020 = vadd.f32 %v2006, %v2016
        %v2021 = vadd.f32 %v2007, %v2017
        %v2022 = vadd.f32 %v2008, %v2018
        %v2023 = vmul.f32 %v2009, %v1675
        %v2024 = vmul.f32 %v2010, %v1679
        %v2027 = vrot.slane %v2023, 7
        %v2028 = vrot.slane %v2024, 7
        %v2031 = vadd.f32 %v2019, %v2027
        %v2032 = vadd.f32 %v2020, %v2028
        %v2033 = vadd.f32 %v2021, %v2027
        %v2034 = vadd.f32 %v2022, %v2028
        %v2035 = vmul.f32 %v2011, %v1688
        %v2036 = vmul.f32 %v2012, %v1692
        %v2037 = vmul.f32 %v2013, %v1688
        %v2038 = vmul.f32 %v2014, %v1692
        %v2043 = vrot.slane %v2035, 1
        %v2044 = vrot.slane %v2037, 1
        %v2045 = vsel %vm1768, %v2043, %v2044
        %v2046 = vrot.slane %v2036, 1
        %v2047 = vrot.slane %v2038, 1
        %v2048 = vsel %vm1768, %v2046, %v2047
        %v2053 = vadd.f32 %v2031, %v2045
        %v2054 = vadd.f32 %v2032, %v2048
        %v2055 = vadd.f32 %v2033, %v2044
        %v2056 = vadd.f32 %v2034, %v2047
        %v2057 = vmul.f32 %v2053, %v1701
        %v2058 = vmul.f32 %v2054, %v1705
        %v2059 = vmul.f32 %v2055, %v1701
        %v2060 = vmul.f32 %v2056, %v1705
        %v2061 = vadd.f32 %v2057, %v1714
        %v2062 = vadd.f32 %v2058, %v1718
        %v2063 = vadd.f32 %v2059, %v1714
        %v2064 = vadd.f32 %v2060, %v1718
        %vm2065 = vcmp.ge.f32.partialorder %v2061, 0.0
        %vm2066 = vcmp.ge.f32.partialorder %v2062, 0.0
        %vm2067 = vcmp.ge.f32.partialorder %v2063, 0.0
        %vm2068 = vcmp.ge.f32.partialorder %v2064, 0.0
        %v2069 = vmul.f32 %v2061, %v1727
        %v2070 = vmul.f32 %v2062, %v1731
        %v2071 = vmul.f32 %v2063, %v1727
        %v2072 = vmul.f32 %v2064, %v1731
        %v2073 = vsel %vm2065, %v2061, %v2069
        %v2074 = vsel %vm2066, %v2062, %v2070
        %v2075 = vsel %vm2067, %v2063, %v2071
        %v2076 = vsel %vm2068, %v2064, %v2072
        %v2081 = vrot.slane %v2073, 1
        %v2082 = vrot.slane %v2075, 1
        %v2083 = vsel %vm1768, %v2081, %v2082
        %v2084 = vrot.slane %v2074, 1
        %v2085 = vrot.slane %v2076, 1
        %v2086 = vsel %vm1768, %v2084, %v2085
        %2089 = vst [vmem:[#allocation3 + $0x10] sm:$0xff] %v2083
        %2090 = vst [vmem:[#allocation3 + $0x18] sm:$0xff] %v2086
        %v2091 = vld [vmem:[%s626] sm:$0xff]
        %v2092 = vld [vmem:[%s626 + $0x8] sm:$0xff]
        %v2093 = vld [vmem:[%s626 + $0x10] sm:$0xff]
        %v2094 = vld [vmem:[%s626 + $0x18] sm:$0xff]
        %v2095 = vld [vmem:[%s626 + $0x20] sm:$0x3]
        %v2096 = vld [vmem:[%s626 + $0x28] sm:$0x3]
        %v2097 = vmul.f32 %v2093, %v1584
        %v2098 = vmul.f32 %v2094, %v1588
        %v2099 = vmul.f32 %v2095, %v1584
        %v2100 = vmul.f32 %v2096, %v1588
        %v2101 = vadd.f32 %v2097, 0.0
        %v2102 = vadd.f32 %v2098, 0.0
        %v2103 = vadd.f32 %v2099, 0.0
        %v2104 = vadd.f32 %v2100, 0.0
        %v2105 = vmul.f32 %v2091, %v1597
        %v2106 = vmul.f32 %v2092, %v1601
        %v2109 = vrot.slane %v2105, 7
        %v2110 = vrot.slane %v2106, 7
        %v2113 = vadd.f32 %v2101, %v2109
        %v2114 = vadd.f32 %v2102, %v2110
        %v2115 = vadd.f32 %v2103, %v2109
        %v2116 = vadd.f32 %v2104, %v2110
        %v2117 = vmul.f32 %v2093, %v1610
        %v2118 = vmul.f32 %v2094, %v1614
        %v2119 = vmul.f32 %v2095, %v1610
        %v2120 = vmul.f32 %v2096, %v1614
        %v2125 = vrot.slane %v2117, 1
        %v2126 = vrot.slane %v2119, 1
        %v2127 = vsel %vm1768, %v2125, %v2126
        %v2128 = vrot.slane %v2118, 1
        %v2129 = vrot.slane %v2120, 1
        %v2130 = vsel %vm1768, %v2128, %v2129
        %v2135 = vadd.f32 %v2113, %v2127
        %v2136 = vadd.f32 %v2114, %v2130
        %v2137 = vadd.f32 %v2115, %v2126
        %v2138 = vadd.f32 %v2116, %v2129
        %v2139 = vld [vmem:[%s900] sm:$0xff]
        %v2140 = vld [vmem:[%s900 + $0x8] sm:$0xff]
        %v2141 = vld [vmem:[%s900 + $0x10] sm:$0xff]
        %v2142 = vld [vmem:[%s900 + $0x18] sm:$0xff]
        %v2143 = vld [vmem:[%s900 + $0x20] sm:$0x3]
        %v2144 = vld [vmem:[%s900 + $0x28] sm:$0x3]
        %v2145 = vmul.f32 %v2141, %v1623
        %v2146 = vmul.f32 %v2142, %v1627
        %v2147 = vmul.f32 %v2143, %v1623
        %v2148 = vmul.f32 %v2144, %v1627
        %v2149 = vadd.f32 %v2135, %v2145
        %v2150 = vadd.f32 %v2136, %v2146
        %v2151 = vadd.f32 %v2137, %v2147
        %v2152 = vadd.f32 %v2138, %v2148
        %v2153 = vmul.f32 %v2139, %v1636
        %v2154 = vmul.f32 %v2140, %v1640
        %v2157 = vrot.slane %v2153, 7
        %v2158 = vrot.slane %v2154, 7
        %v2161 = vadd.f32 %v2149, %v2157
        %v2162 = vadd.f32 %v2150, %v2158
        %v2163 = vadd.f32 %v2151, %v2157
        %v2164 = vadd.f32 %v2152, %v2158
        %v2165 = vmul.f32 %v2141, %v1649
        %v2166 = vmul.f32 %v2142, %v1653
        %v2167 = vmul.f32 %v2143, %v1649
        %v2168 = vmul.f32 %v2144, %v1653
        %v2173 = vrot.slane %v2165, 1
        %v2174 = vrot.slane %v2167, 1
        %v2175 = vsel %vm1768, %v2173, %v2174
        %v2176 = vrot.slane %v2166, 1
        %v2177 = vrot.slane %v2168, 1
        %v2178 = vsel %vm1768, %v2176, %v2177
        %v2183 = vadd.f32 %v2161, %v2175
        %v2184 = vadd.f32 %v2162, %v2178
        %v2185 = vadd.f32 %v2163, %v2174
        %v2186 = vadd.f32 %v2164, %v2177
        %v2187 = vld [vmem:[%s913] sm:$0xff]
        %v2188 = vld [vmem:[%s913 + $0x8] sm:$0xff]
        %v2189 = vld [vmem:[%s913 + $0x10] sm:$0xff]
        %v2190 = vld [vmem:[%s913 + $0x18] sm:$0xff]
        %v2191 = vld [vmem:[%s913 + $0x20] sm:$0x3]
        %v2192 = vld [vmem:[%s913 + $0x28] sm:$0x3]
        %v2193 = vmul.f32 %v2189, %v1662
        %v2194 = vmul.f32 %v2190, %v1666
        %v2195 = vmul.f32 %v2191, %v1662
        %v2196 = vmul.f32 %v2192, %v1666
        %v2197 = vadd.f32 %v2183, %v2193
        %v2198 = vadd.f32 %v2184, %v2194
        %v2199 = vadd.f32 %v2185, %v2195
        %v2200 = vadd.f32 %v2186, %v2196
        %v2201 = vmul.f32 %v2187, %v1675
        %v2202 = vmul.f32 %v2188, %v1679
        %v2205 = vrot.slane %v2201, 7
        %v2206 = vrot.slane %v2202, 7
        %v2209 = vadd.f32 %v2197, %v2205
        %v2210 = vadd.f32 %v2198, %v2206
        %v2211 = vadd.f32 %v2199, %v2205
        %v2212 = vadd.f32 %v2200, %v2206
        %v2213 = vmul.f32 %v2189, %v1688
        %v2214 = vmul.f32 %v2190, %v1692
        %v2215 = vmul.f32 %v2191, %v1688
        %v2216 = vmul.f32 %v2192, %v1692
        %v2221 = vrot.slane %v2213, 1
        %v2222 = vrot.slane %v2215, 1
        %v2223 = vsel %vm1768, %v2221, %v2222
        %v2224 = vrot.slane %v2214, 1
        %v2225 = vrot.slane %v2216, 1
        %v2226 = vsel %vm1768, %v2224, %v2225
        %v2231 = vadd.f32 %v2209, %v2223
        %v2232 = vadd.f32 %v2210, %v2226
        %v2233 = vadd.f32 %v2211, %v2222
        %v2234 = vadd.f32 %v2212, %v2225
        %v2235 = vmul.f32 %v2231, %v1701
        %v2236 = vmul.f32 %v2232, %v1705
        %v2237 = vmul.f32 %v2233, %v1701
        %v2238 = vmul.f32 %v2234, %v1705
        %v2239 = vadd.f32 %v2235, %v1714
        %v2240 = vadd.f32 %v2236, %v1718
        %v2241 = vadd.f32 %v2237, %v1714
        %v2242 = vadd.f32 %v2238, %v1718
        %vm2243 = vcmp.ge.f32.partialorder %v2239, 0.0
        %vm2244 = vcmp.ge.f32.partialorder %v2240, 0.0
        %vm2245 = vcmp.ge.f32.partialorder %v2241, 0.0
        %vm2246 = vcmp.ge.f32.partialorder %v2242, 0.0
        %v2247 = vmul.f32 %v2239, %v1727
        %v2248 = vmul.f32 %v2240, %v1731
        %v2249 = vmul.f32 %v2241, %v1727
        %v2250 = vmul.f32 %v2242, %v1731
        %v2251 = vsel %vm2243, %v2239, %v2247
        %v2252 = vsel %vm2244, %v2240, %v2248
        %v2253 = vsel %vm2245, %v2241, %v2249
        %v2254 = vsel %vm2246, %v2242, %v2250
        %v2259 = vrot.slane %v2251, 1
        %v2260 = vrot.slane %v2253, 1
        %v2261 = vsel %vm1768, %v2259, %v2260
        %v2262 = vrot.slane %v2252, 1
        %v2263 = vrot.slane %v2254, 1
        %v2264 = vsel %vm1768, %v2262, %v2263
        %2267 = vst [vmem:[#allocation3 + $0x20] sm:$0xff] %v2261
        %2268 = vst [vmem:[#allocation3 + $0x28] sm:$0xff] %v2264
        %v2269 = vld [vmem:[%s913] sm:$0xff]
        %v2270 = vld [vmem:[%s913 + $0x8] sm:$0xff]
        %v2271 = vld [vmem:[%s913 + $0x10] sm:$0xff]
        %v2272 = vld [vmem:[%s913 + $0x18] sm:$0xff]
        %v2273 = vld [vmem:[%s913 + $0x20] sm:$0x3]
        %v2274 = vld [vmem:[%s913 + $0x28] sm:$0x3]
        %v2275 = vmul.f32 %v2271, %v1584
        %v2276 = vmul.f32 %v2272, %v1588
        %v2277 = vmul.f32 %v2273, %v1584
        %v2278 = vmul.f32 %v2274, %v1588
        %v2279 = vadd.f32 %v2275, 0.0
        %v2280 = vadd.f32 %v2276, 0.0
        %v2281 = vadd.f32 %v2277, 0.0
        %v2282 = vadd.f32 %v2278, 0.0
        %v2283 = vmul.f32 %v2269, %v1597
        %v2284 = vmul.f32 %v2270, %v1601
        %v2287 = vrot.slane %v2283, 7
        %v2288 = vrot.slane %v2284, 7
        %v2291 = vadd.f32 %v2279, %v2287
        %v2292 = vadd.f32 %v2280, %v2288
        %v2293 = vadd.f32 %v2281, %v2287
        %v2294 = vadd.f32 %v2282, %v2288
        %v2295 = vmul.f32 %v2271, %v1610
        %v2296 = vmul.f32 %v2272, %v1614
        %v2297 = vmul.f32 %v2273, %v1610
        %v2298 = vmul.f32 %v2274, %v1614
        %v2303 = vrot.slane %v2295, 1
        %v2304 = vrot.slane %v2297, 1
        %v2305 = vsel %vm1768, %v2303, %v2304
        %v2306 = vrot.slane %v2296, 1
        %v2307 = vrot.slane %v2298, 1
        %v2308 = vsel %vm1768, %v2306, %v2307
        %v2313 = vadd.f32 %v2291, %v2305
        %v2314 = vadd.f32 %v2292, %v2308
        %v2315 = vadd.f32 %v2293, %v2304
        %v2316 = vadd.f32 %v2294, %v2307
        %v2317 = vld [vmem:[%s926] sm:$0xff]
        %v2318 = vld [vmem:[%s926 + $0x8] sm:$0xff]
        %v2319 = vld [vmem:[%s926 + $0x10] sm:$0xff]
        %v2320 = vld [vmem:[%s926 + $0x18] sm:$0xff]
        %v2321 = vld [vmem:[%s926 + $0x20] sm:$0x3]
        %v2322 = vld [vmem:[%s926 + $0x28] sm:$0x3]
        %v2323 = vmul.f32 %v2319, %v1623
        %v2324 = vmul.f32 %v2320, %v1627
        %v2325 = vmul.f32 %v2321, %v1623
        %v2326 = vmul.f32 %v2322, %v1627
        %v2327 = vadd.f32 %v2313, %v2323
        %v2328 = vadd.f32 %v2314, %v2324
        %v2329 = vadd.f32 %v2315, %v2325
        %v2330 = vadd.f32 %v2316, %v2326
        %v2331 = vmul.f32 %v2317, %v1636
        %v2332 = vmul.f32 %v2318, %v1640
        %v2335 = vrot.slane %v2331, 7
        %v2336 = vrot.slane %v2332, 7
        %v2339 = vadd.f32 %v2327, %v2335
        %v2340 = vadd.f32 %v2328, %v2336
        %v2341 = vadd.f32 %v2329, %v2335
        %v2342 = vadd.f32 %v2330, %v2336
        %v2343 = vmul.f32 %v2319, %v1649
        %v2344 = vmul.f32 %v2320, %v1653
        %v2345 = vmul.f32 %v2321, %v1649
        %v2346 = vmul.f32 %v2322, %v1653
        %v2351 = vrot.slane %v2343, 1
        %v2352 = vrot.slane %v2345, 1
        %v2353 = vsel %vm1768, %v2351, %v2352
        %v2354 = vrot.slane %v2344, 1
        %v2355 = vrot.slane %v2346, 1
        %v2356 = vsel %vm1768, %v2354, %v2355
        %v2361 = vadd.f32 %v2339, %v2353
        %v2362 = vadd.f32 %v2340, %v2356
        %v2363 = vadd.f32 %v2341, %v2352
        %v2364 = vadd.f32 %v2342, %v2355
        %v2365 = vld [vmem:[%s939] sm:$0xff]
        %v2366 = vld [vmem:[%s939 + $0x8] sm:$0xff]
        %v2367 = vld [vmem:[%s939 + $0x10] sm:$0xff]
        %v2368 = vld [vmem:[%s939 + $0x18] sm:$0xff]
        %v2369 = vld [vmem:[%s939 + $0x20] sm:$0x3]
        %v2370 = vld [vmem:[%s939 + $0x28] sm:$0x3]
        %v2371 = vmul.f32 %v2367, %v1662
        %v2372 = vmul.f32 %v2368, %v1666
        %v2373 = vmul.f32 %v2369, %v1662
        %v2374 = vmul.f32 %v2370, %v1666
        %v2375 = vadd.f32 %v2361, %v2371
        %v2376 = vadd.f32 %v2362, %v2372
        %v2377 = vadd.f32 %v2363, %v2373
        %v2378 = vadd.f32 %v2364, %v2374
        %v2379 = vmul.f32 %v2365, %v1675
        %v2380 = vmul.f32 %v2366, %v1679
        %v2383 = vrot.slane %v2379, 7
        %v2384 = vrot.slane %v2380, 7
        %v2387 = vadd.f32 %v2375, %v2383
        %v2388 = vadd.f32 %v2376, %v2384
        %v2389 = vadd.f32 %v2377, %v2383
        %v2390 = vadd.f32 %v2378, %v2384
        %v2391 = vmul.f32 %v2367, %v1688
        %v2392 = vmul.f32 %v2368, %v1692
        %v2393 = vmul.f32 %v2369, %v1688
        %v2394 = vmul.f32 %v2370, %v1692
        %v2399 = vrot.slane %v2391, 1
        %v2400 = vrot.slane %v2393, 1
        %v2401 = vsel %vm1768, %v2399, %v2400
        %v2402 = vrot.slane %v2392, 1
        %v2403 = vrot.slane %v2394, 1
        %v2404 = vsel %vm1768, %v2402, %v2403
        %v2409 = vadd.f32 %v2387, %v2401
        %v2410 = vadd.f32 %v2388, %v2404
        %v2411 = vadd.f32 %v2389, %v2400
        %v2412 = vadd.f32 %v2390, %v2403
        %v2413 = vmul.f32 %v2409, %v1701
        %v2414 = vmul.f32 %v2410, %v1705
        %v2415 = vmul.f32 %v2411, %v1701
        %v2416 = vmul.f32 %v2412, %v1705
        %v2417 = vadd.f32 %v2413, %v1714
        %v2418 = vadd.f32 %v2414, %v1718
        %v2419 = vadd.f32 %v2415, %v1714
        %v2420 = vadd.f32 %v2416, %v1718
        %vm2421 = vcmp.ge.f32.partialorder %v2417, 0.0
        %vm2422 = vcmp.ge.f32.partialorder %v2418, 0.0
        %vm2423 = vcmp.ge.f32.partialorder %v2419, 0.0
        %vm2424 = vcmp.ge.f32.partialorder %v2420, 0.0
        %v2425 = vmul.f32 %v2417, %v1727
        %v2426 = vmul.f32 %v2418, %v1731
        %v2427 = vmul.f32 %v2419, %v1727
        %v2428 = vmul.f32 %v2420, %v1731
        %v2429 = vsel %vm2421, %v2417, %v2425
        %v2430 = vsel %vm2422, %v2418, %v2426
        %v2431 = vsel %vm2423, %v2419, %v2427
        %v2432 = vsel %vm2424, %v2420, %v2428
        %v2437 = vrot.slane %v2429, 1
        %v2438 = vrot.slane %v2431, 1
        %v2439 = vsel %vm1768, %v2437, %v2438
        %v2440 = vrot.slane %v2430, 1
        %v2441 = vrot.slane %v2432, 1
        %v2442 = vsel %vm1768, %v2440, %v2441
        %2445 = vst [vmem:[#allocation3 + $0x30] sm:$0xff] %v2439
        %2446 = vst [vmem:[#allocation3 + $0x38] sm:$0xff] %v2442
        %v2447 = vld [vmem:[%s939] sm:$0xff]
        %v2448 = vld [vmem:[%s939 + $0x8] sm:$0xff]
        %v2449 = vld [vmem:[%s939 + $0x10] sm:$0xff]
        %v2450 = vld [vmem:[%s939 + $0x18] sm:$0xff]
        %v2451 = vld [vmem:[%s939 + $0x20] sm:$0x3]
        %v2452 = vld [vmem:[%s939 + $0x28] sm:$0x3]
        %v2453 = vmul.f32 %v2449, %v1584
        %v2454 = vmul.f32 %v2450, %v1588
        %v2455 = vmul.f32 %v2451, %v1584
        %v2456 = vmul.f32 %v2452, %v1588
        %v2457 = vadd.f32 %v2453, 0.0
        %v2458 = vadd.f32 %v2454, 0.0
        %v2459 = vadd.f32 %v2455, 0.0
        %v2460 = vadd.f32 %v2456, 0.0
        %v2461 = vmul.f32 %v2447, %v1597
        %v2462 = vmul.f32 %v2448, %v1601
        %v2465 = vrot.slane %v2461, 7
        %v2466 = vrot.slane %v2462, 7
        %v2469 = vadd.f32 %v2457, %v2465
        %v2470 = vadd.f32 %v2458, %v2466
        %v2471 = vadd.f32 %v2459, %v2465
        %v2472 = vadd.f32 %v2460, %v2466
        %v2473 = vmul.f32 %v2449, %v1610
        %v2474 = vmul.f32 %v2450, %v1614
        %v2475 = vmul.f32 %v2451, %v1610
        %v2476 = vmul.f32 %v2452, %v1614
        %v2481 = vrot.slane %v2473, 1
        %v2482 = vrot.slane %v2475, 1
        %v2483 = vsel %vm1768, %v2481, %v2482
        %v2484 = vrot.slane %v2474, 1
        %v2485 = vrot.slane %v2476, 1
        %v2486 = vsel %vm1768, %v2484, %v2485
        %v2491 = vadd.f32 %v2469, %v2483
        %v2492 = vadd.f32 %v2470, %v2486
        %v2493 = vadd.f32 %v2471, %v2482
        %v2494 = vadd.f32 %v2472, %v2485
        %v2495 = vld [vmem:[%s1213] sm:$0xff]
        %v2496 = vld [vmem:[%s1213 + $0x8] sm:$0xff]
        %v2497 = vld [vmem:[%s1213 + $0x10] sm:$0xff]
        %v2498 = vld [vmem:[%s1213 + $0x18] sm:$0xff]
        %v2499 = vld [vmem:[%s1213 + $0x20] sm:$0x3]
        %v2500 = vld [vmem:[%s1213 + $0x28] sm:$0x3]
        %v2501 = vmul.f32 %v2497, %v1623
        %v2502 = vmul.f32 %v2498, %v1627
        %v2503 = vmul.f32 %v2499, %v1623
        %v2504 = vmul.f32 %v2500, %v1627
        %v2505 = vadd.f32 %v2491, %v2501
        %v2506 = vadd.f32 %v2492, %v2502
        %v2507 = vadd.f32 %v2493, %v2503
        %v2508 = vadd.f32 %v2494, %v2504
        %v2509 = vmul.f32 %v2495, %v1636
        %v2510 = vmul.f32 %v2496, %v1640
        %v2513 = vrot.slane %v2509, 7
        %v2514 = vrot.slane %v2510, 7
        %v2517 = vadd.f32 %v2505, %v2513
        %v2518 = vadd.f32 %v2506, %v2514
        %v2519 = vadd.f32 %v2507, %v2513
        %v2520 = vadd.f32 %v2508, %v2514
        %v2521 = vmul.f32 %v2497, %v1649
        %v2522 = vmul.f32 %v2498, %v1653
        %v2523 = vmul.f32 %v2499, %v1649
        %v2524 = vmul.f32 %v2500, %v1653
        %v2529 = vrot.slane %v2521, 1
        %v2530 = vrot.slane %v2523, 1
        %v2531 = vsel %vm1768, %v2529, %v2530
        %v2532 = vrot.slane %v2522, 1
        %v2533 = vrot.slane %v2524, 1
        %v2534 = vsel %vm1768, %v2532, %v2533
        %v2539 = vadd.f32 %v2517, %v2531
        %v2540 = vadd.f32 %v2518, %v2534
        %v2541 = vadd.f32 %v2519, %v2530
        %v2542 = vadd.f32 %v2520, %v2533
        %v2543 = vld [vmem:[%s1226] sm:$0xff]
        %v2544 = vld [vmem:[%s1226 + $0x8] sm:$0xff]
        %v2545 = vld [vmem:[%s1226 + $0x10] sm:$0xff]
        %v2546 = vld [vmem:[%s1226 + $0x18] sm:$0xff]
        %v2547 = vld [vmem:[%s1226 + $0x20] sm:$0x3]
        %v2548 = vld [vmem:[%s1226 + $0x28] sm:$0x3]
        %v2549 = vmul.f32 %v2545, %v1662
        %v2550 = vmul.f32 %v2546, %v1666
        %v2551 = vmul.f32 %v2547, %v1662
        %v2552 = vmul.f32 %v2548, %v1666
        %v2553 = vadd.f32 %v2539, %v2549
        %v2554 = vadd.f32 %v2540, %v2550
        %v2555 = vadd.f32 %v2541, %v2551
        %v2556 = vadd.f32 %v2542, %v2552
        %v2557 = vmul.f32 %v2543, %v1675
        %v2558 = vmul.f32 %v2544, %v1679
        %v2561 = vrot.slane %v2557, 7
        %v2562 = vrot.slane %v2558, 7
        %v2565 = vadd.f32 %v2553, %v2561
        %v2566 = vadd.f32 %v2554, %v2562
        %v2567 = vadd.f32 %v2555, %v2561
        %v2568 = vadd.f32 %v2556, %v2562
        %v2569 = vmul.f32 %v2545, %v1688
        %v2570 = vmul.f32 %v2546, %v1692
        %v2571 = vmul.f32 %v2547, %v1688
        %v2572 = vmul.f32 %v2548, %v1692
        %v2577 = vrot.slane %v2569, 1
        %v2578 = vrot.slane %v2571, 1
        %v2579 = vsel %vm1768, %v2577, %v2578
        %v2580 = vrot.slane %v2570, 1
        %v2581 = vrot.slane %v2572, 1
        %v2582 = vsel %vm1768, %v2580, %v2581
        %v2587 = vadd.f32 %v2565, %v2579
        %v2588 = vadd.f32 %v2566, %v2582
        %v2589 = vadd.f32 %v2567, %v2578
        %v2590 = vadd.f32 %v2568, %v2581
        %v2591 = vmul.f32 %v2587, %v1701
        %v2592 = vmul.f32 %v2588, %v1705
        %v2593 = vmul.f32 %v2589, %v1701
        %v2594 = vmul.f32 %v2590, %v1705
        %v2595 = vadd.f32 %v2591, %v1714
        %v2596 = vadd.f32 %v2592, %v1718
        %v2597 = vadd.f32 %v2593, %v1714
        %v2598 = vadd.f32 %v2594, %v1718
        %vm2599 = vcmp.ge.f32.partialorder %v2595, 0.0
        %vm2600 = vcmp.ge.f32.partialorder %v2596, 0.0
        %vm2601 = vcmp.ge.f32.partialorder %v2597, 0.0
        %vm2602 = vcmp.ge.f32.partialorder %v2598, 0.0
        %v2603 = vmul.f32 %v2595, %v1727
        %v2604 = vmul.f32 %v2596, %v1731
        %v2605 = vmul.f32 %v2597, %v1727
        %v2606 = vmul.f32 %v2598, %v1731
        %v2607 = vsel %vm2599, %v2595, %v2603
        %v2608 = vsel %vm2600, %v2596, %v2604
        %v2609 = vsel %vm2601, %v2597, %v2605
        %v2610 = vsel %vm2602, %v2598, %v2606
        %v2615 = vrot.slane %v2607, 1
        %v2616 = vrot.slane %v2609, 1
        %v2617 = vsel %vm1768, %v2615, %v2616
        %v2618 = vrot.slane %v2608, 1
        %v2619 = vrot.slane %v2610, 1
        %v2620 = vsel %vm1768, %v2618, %v2619
        %2623 = vst [vmem:[#allocation3 + $0x40] sm:$0xff] %v2617
        %2624 = vst [vmem:[#allocation3 + $0x48] sm:$0xff] %v2620
        %v2625 = vld [vmem:[%s1226] sm:$0xff]
        %v2626 = vld [vmem:[%s1226 + $0x8] sm:$0xff]
        %v2627 = vld [vmem:[%s1226 + $0x10] sm:$0xff]
        %v2628 = vld [vmem:[%s1226 + $0x18] sm:$0xff]
        %v2629 = vld [vmem:[%s1226 + $0x20] sm:$0x3]
        %v2630 = vld [vmem:[%s1226 + $0x28] sm:$0x3]
        %v2631 = vmul.f32 %v2627, %v1584
        %v2632 = vmul.f32 %v2628, %v1588
        %v2633 = vmul.f32 %v2629, %v1584
        %v2634 = vmul.f32 %v2630, %v1588
        %v2635 = vadd.f32 %v2631, 0.0
        %v2636 = vadd.f32 %v2632, 0.0
        %v2637 = vadd.f32 %v2633, 0.0
        %v2638 = vadd.f32 %v2634, 0.0
        %v2639 = vmul.f32 %v2625, %v1597
        %v2640 = vmul.f32 %v2626, %v1601
        %v2643 = vrot.slane %v2639, 7
        %v2644 = vrot.slane %v2640, 7
        %v2647 = vadd.f32 %v2635, %v2643
        %v2648 = vadd.f32 %v2636, %v2644
        %v2649 = vadd.f32 %v2637, %v2643
        %v2650 = vadd.f32 %v2638, %v2644
        %v2651 = vmul.f32 %v2627, %v1610
        %v2652 = vmul.f32 %v2628, %v1614
        %v2653 = vmul.f32 %v2629, %v1610
        %v2654 = vmul.f32 %v2630, %v1614
        %v2659 = vrot.slane %v2651, 1
        %v2660 = vrot.slane %v2653, 1
        %v2661 = vsel %vm1768, %v2659, %v2660
        %v2662 = vrot.slane %v2652, 1
        %v2663 = vrot.slane %v2654, 1
        %v2664 = vsel %vm1768, %v2662, %v2663
        %v2669 = vadd.f32 %v2647, %v2661
        %v2670 = vadd.f32 %v2648, %v2664
        %v2671 = vadd.f32 %v2649, %v2660
        %v2672 = vadd.f32 %v2650, %v2663
        %v2673 = vld [vmem:[%s1239] sm:$0xff]
        %v2674 = vld [vmem:[%s1239 + $0x8] sm:$0xff]
        %v2675 = vld [vmem:[%s1239 + $0x10] sm:$0xff]
        %v2676 = vld [vmem:[%s1239 + $0x18] sm:$0xff]
        %v2677 = vld [vmem:[%s1239 + $0x20] sm:$0x3]
        %v2678 = vld [vmem:[%s1239 + $0x28] sm:$0x3]
        %v2679 = vmul.f32 %v2675, %v1623
        %v2680 = vmul.f32 %v2676, %v1627
        %v2681 = vmul.f32 %v2677, %v1623
        %v2682 = vmul.f32 %v2678, %v1627
        %v2683 = vadd.f32 %v2669, %v2679
        %v2684 = vadd.f32 %v2670, %v2680
        %v2685 = vadd.f32 %v2671, %v2681
        %v2686 = vadd.f32 %v2672, %v2682
        %v2687 = vmul.f32 %v2673, %v1636
        %v2688 = vmul.f32 %v2674, %v1640
        %v2691 = vrot.slane %v2687, 7
        %v2692 = vrot.slane %v2688, 7
        %v2695 = vadd.f32 %v2683, %v2691
        %v2696 = vadd.f32 %v2684, %v2692
        %v2697 = vadd.f32 %v2685, %v2691
        %v2698 = vadd.f32 %v2686, %v2692
        %v2699 = vmul.f32 %v2675, %v1649
        %v2700 = vmul.f32 %v2676, %v1653
        %v2701 = vmul.f32 %v2677, %v1649
        %v2702 = vmul.f32 %v2678, %v1653
        %v2707 = vrot.slane %v2699, 1
        %v2708 = vrot.slane %v2701, 1
        %v2709 = vsel %vm1768, %v2707, %v2708
        %v2710 = vrot.slane %v2700, 1
        %v2711 = vrot.slane %v2702, 1
        %v2712 = vsel %vm1768, %v2710, %v2711
        %v2717 = vadd.f32 %v2695, %v2709
        %v2718 = vadd.f32 %v2696, %v2712
        %v2719 = vadd.f32 %v2697, %v2708
        %v2720 = vadd.f32 %v2698, %v2711
        %v2721 = vld [vmem:[%s1252] sm:$0xff]
        %v2722 = vld [vmem:[%s1252 + $0x8] sm:$0xff]
        %v2723 = vld [vmem:[%s1252 + $0x10] sm:$0xff]
        %v2724 = vld [vmem:[%s1252 + $0x18] sm:$0xff]
        %v2725 = vld [vmem:[%s1252 + $0x20] sm:$0x3]
        %v2726 = vld [vmem:[%s1252 + $0x28] sm:$0x3]
        %v2727 = vmul.f32 %v2723, %v1662
        %v2728 = vmul.f32 %v2724, %v1666
        %v2729 = vmul.f32 %v2725, %v1662
        %v2730 = vmul.f32 %v2726, %v1666
        %v2731 = vadd.f32 %v2717, %v2727
        %v2732 = vadd.f32 %v2718, %v2728
        %v2733 = vadd.f32 %v2719, %v2729
        %v2734 = vadd.f32 %v2720, %v2730
        %v2735 = vmul.f32 %v2721, %v1675
        %v2736 = vmul.f32 %v2722, %v1679
        %v2739 = vrot.slane %v2735, 7
        %v2740 = vrot.slane %v2736, 7
        %v2743 = vadd.f32 %v2731, %v2739
        %v2744 = vadd.f32 %v2732, %v2740
        %v2745 = vadd.f32 %v2733, %v2739
        %v2746 = vadd.f32 %v2734, %v2740
        %v2747 = vmul.f32 %v2723, %v1688
        %v2748 = vmul.f32 %v2724, %v1692
        %v2749 = vmul.f32 %v2725, %v1688
        %v2750 = vmul.f32 %v2726, %v1692
        %v2755 = vrot.slane %v2747, 1
        %v2756 = vrot.slane %v2749, 1
        %v2757 = vsel %vm1768, %v2755, %v2756
        %v2758 = vrot.slane %v2748, 1
        %v2759 = vrot.slane %v2750, 1
        %v2760 = vsel %vm1768, %v2758, %v2759
        %v2765 = vadd.f32 %v2743, %v2757
        %v2766 = vadd.f32 %v2744, %v2760
        %v2767 = vadd.f32 %v2745, %v2756
        %v2768 = vadd.f32 %v2746, %v2759
        %v2769 = vmul.f32 %v2765, %v1701
        %v2770 = vmul.f32 %v2766, %v1705
        %v2771 = vmul.f32 %v2767, %v1701
        %v2772 = vmul.f32 %v2768, %v1705
        %v2773 = vadd.f32 %v2769, %v1714
        %v2774 = vadd.f32 %v2770, %v1718
        %v2775 = vadd.f32 %v2771, %v1714
        %v2776 = vadd.f32 %v2772, %v1718
        %vm2777 = vcmp.ge.f32.partialorder %v2773, 0.0
        %vm2778 = vcmp.ge.f32.partialorder %v2774, 0.0
        %vm2779 = vcmp.ge.f32.partialorder %v2775, 0.0
        %vm2780 = vcmp.ge.f32.partialorder %v2776, 0.0
        %v2781 = vmul.f32 %v2773, %v1727
        %v2782 = vmul.f32 %v2774, %v1731
        %v2783 = vmul.f32 %v2775, %v1727
        %v2784 = vmul.f32 %v2776, %v1731
        %v2785 = vsel %vm2777, %v2773, %v2781
        %v2786 = vsel %vm2778, %v2774, %v2782
        %v2787 = vsel %vm2779, %v2775, %v2783
        %v2788 = vsel %vm2780, %v2776, %v2784
        %v2793 = vrot.slane %v2785, 1
        %v2794 = vrot.slane %v2787, 1
        %v2795 = vsel %vm1768, %v2793, %v2794
        %v2796 = vrot.slane %v2786, 1
        %v2797 = vrot.slane %v2788, 1
        %v2798 = vsel %vm1768, %v2796, %v2797
        %2801 = vst [vmem:[#allocation3 + $0x50] sm:$0xff] %v2795
        %2802 = vst [vmem:[#allocation3 + $0x58] sm:$0xff] %v2798
        %v2803 = vld [vmem:[%s1252] sm:$0xff]
        %v2804 = vld [vmem:[%s1252 + $0x8] sm:$0xff]
        %v2805 = vld [vmem:[%s1252 + $0x10] sm:$0xff]
        %v2806 = vld [vmem:[%s1252 + $0x18] sm:$0xff]
        %v2807 = vld [vmem:[%s1252 + $0x20] sm:$0x3]
        %v2808 = vld [vmem:[%s1252 + $0x28] sm:$0x3]
        %v2809 = vmul.f32 %v2805, %v1584
        %v2810 = vmul.f32 %v2806, %v1588
        %v2811 = vmul.f32 %v2807, %v1584
        %v2812 = vmul.f32 %v2808, %v1588
        %v2813 = vadd.f32 %v2809, 0.0
        %v2814 = vadd.f32 %v2810, 0.0
        %v2815 = vadd.f32 %v2811, 0.0
        %v2816 = vadd.f32 %v2812, 0.0
        %v2817 = vmul.f32 %v2803, %v1597
        %v2818 = vmul.f32 %v2804, %v1601
        %v2821 = vrot.slane %v2817, 7
        %v2822 = vrot.slane %v2818, 7
        %v2825 = vadd.f32 %v2813, %v2821
        %v2826 = vadd.f32 %v2814, %v2822
        %v2827 = vadd.f32 %v2815, %v2821
        %v2828 = vadd.f32 %v2816, %v2822
        %v2829 = vmul.f32 %v2805, %v1610
        %v2830 = vmul.f32 %v2806, %v1614
        %v2831 = vmul.f32 %v2807, %v1610
        %v2832 = vmul.f32 %v2808, %v1614
        %v2837 = vrot.slane %v2829, 1
        %v2838 = vrot.slane %v2831, 1
        %v2839 = vsel %vm1768, %v2837, %v2838
        %v2840 = vrot.slane %v2830, 1
        %v2841 = vrot.slane %v2832, 1
        %v2842 = vsel %vm1768, %v2840, %v2841
        %v2847 = vadd.f32 %v2825, %v2839
        %v2848 = vadd.f32 %v2826, %v2842
        %v2849 = vadd.f32 %v2827, %v2838
        %v2850 = vadd.f32 %v2828, %v2841
        %v2851 = vld [vmem:[%s1526] sm:$0xff]
        %v2852 = vld [vmem:[%s1526 + $0x8] sm:$0xff]
        %v2853 = vld [vmem:[%s1526 + $0x10] sm:$0xff]
        %v2854 = vld [vmem:[%s1526 + $0x18] sm:$0xff]
        %v2855 = vld [vmem:[%s1526 + $0x20] sm:$0x3]
        %v2856 = vld [vmem:[%s1526 + $0x28] sm:$0x3]
        %v2857 = vmul.f32 %v2853, %v1623
        %v2858 = vmul.f32 %v2854, %v1627
        %v2859 = vmul.f32 %v2855, %v1623
        %v2860 = vmul.f32 %v2856, %v1627
        %v2861 = vadd.f32 %v2847, %v2857
        %v2862 = vadd.f32 %v2848, %v2858
        %v2863 = vadd.f32 %v2849, %v2859
        %v2864 = vadd.f32 %v2850, %v2860
        %v2865 = vmul.f32 %v2851, %v1636
        %v2866 = vmul.f32 %v2852, %v1640
        %v2869 = vrot.slane %v2865, 7
        %v2870 = vrot.slane %v2866, 7
        %v2873 = vadd.f32 %v2861, %v2869
        %v2874 = vadd.f32 %v2862, %v2870
        %v2875 = vadd.f32 %v2863, %v2869
        %v2876 = vadd.f32 %v2864, %v2870
        %v2877 = vmul.f32 %v2853, %v1649
        %v2878 = vmul.f32 %v2854, %v1653
        %v2879 = vmul.f32 %v2855, %v1649
        %v2880 = vmul.f32 %v2856, %v1653
        %v2885 = vrot.slane %v2877, 1
        %v2886 = vrot.slane %v2879, 1
        %v2887 = vsel %vm1768, %v2885, %v2886
        %v2888 = vrot.slane %v2878, 1
        %v2889 = vrot.slane %v2880, 1
        %v2890 = vsel %vm1768, %v2888, %v2889
        %v2895 = vadd.f32 %v2873, %v2887
        %v2896 = vadd.f32 %v2874, %v2890
        %v2897 = vadd.f32 %v2875, %v2886
        %v2898 = vadd.f32 %v2876, %v2889
        %v2899 = vld [vmem:[%s1539] sm:$0xff]
        %v2900 = vld [vmem:[%s1539 + $0x8] sm:$0xff]
        %v2901 = vld [vmem:[%s1539 + $0x10] sm:$0xff]
        %v2902 = vld [vmem:[%s1539 + $0x18] sm:$0xff]
        %v2903 = vld [vmem:[%s1539 + $0x20] sm:$0x3]
        %v2904 = vld [vmem:[%s1539 + $0x28] sm:$0x3]
        %v2905 = vmul.f32 %v2901, %v1662
        %v2906 = vmul.f32 %v2902, %v1666
        %v2907 = vmul.f32 %v2903, %v1662
        %v2908 = vmul.f32 %v2904, %v1666
        %v2909 = vadd.f32 %v2895, %v2905
        %v2910 = vadd.f32 %v2896, %v2906
        %v2911 = vadd.f32 %v2897, %v2907
        %v2912 = vadd.f32 %v2898, %v2908
        %v2913 = vmul.f32 %v2899, %v1675
        %v2914 = vmul.f32 %v2900, %v1679
        %v2917 = vrot.slane %v2913, 7
        %v2918 = vrot.slane %v2914, 7
        %v2921 = vadd.f32 %v2909, %v2917
        %v2922 = vadd.f32 %v2910, %v2918
        %v2923 = vadd.f32 %v2911, %v2917
        %v2924 = vadd.f32 %v2912, %v2918
        %v2925 = vmul.f32 %v2901, %v1688
        %v2926 = vmul.f32 %v2902, %v1692
        %v2927 = vmul.f32 %v2903, %v1688
        %v2928 = vmul.f32 %v2904, %v1692
        %v2933 = vrot.slane %v2925, 1
        %v2934 = vrot.slane %v2927, 1
        %v2935 = vsel %vm1768, %v2933, %v2934
        %v2936 = vrot.slane %v2926, 1
        %v2937 = vrot.slane %v2928, 1
        %v2938 = vsel %vm1768, %v2936, %v2937
        %v2943 = vadd.f32 %v2921, %v2935
        %v2944 = vadd.f32 %v2922, %v2938
        %v2945 = vadd.f32 %v2923, %v2934
        %v2946 = vadd.f32 %v2924, %v2937
        %v2947 = vmul.f32 %v2943, %v1701
        %v2948 = vmul.f32 %v2944, %v1705
        %v2949 = vmul.f32 %v2945, %v1701
        %v2950 = vmul.f32 %v2946, %v1705
        %v2951 = vadd.f32 %v2947, %v1714
        %v2952 = vadd.f32 %v2948, %v1718
        %v2953 = vadd.f32 %v2949, %v1714
        %v2954 = vadd.f32 %v2950, %v1718
        %vm2955 = vcmp.ge.f32.partialorder %v2951, 0.0
        %vm2956 = vcmp.ge.f32.partialorder %v2952, 0.0
        %vm2957 = vcmp.ge.f32.partialorder %v2953, 0.0
        %vm2958 = vcmp.ge.f32.partialorder %v2954, 0.0
        %v2959 = vmul.f32 %v2951, %v1727
        %v2960 = vmul.f32 %v2952, %v1731
        %v2961 = vmul.f32 %v2953, %v1727
        %v2962 = vmul.f32 %v2954, %v1731
        %v2963 = vsel %vm2955, %v2951, %v2959
        %v2964 = vsel %vm2956, %v2952, %v2960
        %v2965 = vsel %vm2957, %v2953, %v2961
        %v2966 = vsel %vm2958, %v2954, %v2962
        %v2971 = vrot.slane %v2963, 1
        %v2972 = vrot.slane %v2965, 1
        %v2973 = vsel %vm1768, %v2971, %v2972
        %v2974 = vrot.slane %v2964, 1
        %v2975 = vrot.slane %v2966, 1
        %v2976 = vsel %vm1768, %v2974, %v2975
        %2979 = vst [vmem:[#allocation3 + $0x60] sm:$0xff] %v2973
        %2980 = vst [vmem:[#allocation3 + $0x68] sm:$0xff] %v2976
        %v2981 = vld [vmem:[%s1539] sm:$0xff]
        %v2982 = vld [vmem:[%s1539 + $0x8] sm:$0xff]
        %v2983 = vld [vmem:[%s1539 + $0x10] sm:$0xff]
        %v2984 = vld [vmem:[%s1539 + $0x18] sm:$0xff]
        %v2985 = vld [vmem:[%s1539 + $0x20] sm:$0x3]
        %v2986 = vld [vmem:[%s1539 + $0x28] sm:$0x3]
        %v2987 = vmul.f32 %v2983, %v1584
        %v2988 = vmul.f32 %v2984, %v1588
        %v2989 = vmul.f32 %v2985, %v1584
        %v2990 = vmul.f32 %v2986, %v1588
        %v2991 = vadd.f32 %v2987, 0.0
        %v2992 = vadd.f32 %v2988, 0.0
        %v2993 = vadd.f32 %v2989, 0.0
        %v2994 = vadd.f32 %v2990, 0.0
        %v2995 = vmul.f32 %v2981, %v1597
        %v2996 = vmul.f32 %v2982, %v1601
        %v2999 = vrot.slane %v2995, 7
        %v3000 = vrot.slane %v2996, 7
        %v3003 = vadd.f32 %v2991, %v2999
        %v3004 = vadd.f32 %v2992, %v3000
        %v3005 = vadd.f32 %v2993, %v2999
        %v3006 = vadd.f32 %v2994, %v3000
        %v3007 = vmul.f32 %v2983, %v1610
        %v3008 = vmul.f32 %v2984, %v1614
        %v3009 = vmul.f32 %v2985, %v1610
        %v3010 = vmul.f32 %v2986, %v1614
        %v3015 = vrot.slane %v3007, 1
        %v3016 = vrot.slane %v3009, 1
        %v3017 = vsel %vm1768, %v3015, %v3016
        %v3018 = vrot.slane %v3008, 1
        %v3019 = vrot.slane %v3010, 1
        %v3020 = vsel %vm1768, %v3018, %v3019
        %v3025 = vadd.f32 %v3003, %v3017
        %v3026 = vadd.f32 %v3004, %v3020
        %v3027 = vadd.f32 %v3005, %v3016
        %v3028 = vadd.f32 %v3006, %v3019
        %v3029 = vld [vmem:[%s1552] sm:$0xff]
        %v3030 = vld [vmem:[%s1552 + $0x8] sm:$0xff]
        %v3031 = vld [vmem:[%s1552 + $0x10] sm:$0xff]
        %v3032 = vld [vmem:[%s1552 + $0x18] sm:$0xff]
        %v3033 = vld [vmem:[%s1552 + $0x20] sm:$0x3]
        %v3034 = vld [vmem:[%s1552 + $0x28] sm:$0x3]
        %v3035 = vmul.f32 %v3031, %v1623
        %v3036 = vmul.f32 %v3032, %v1627
        %v3037 = vmul.f32 %v3033, %v1623
        %v3038 = vmul.f32 %v3034, %v1627
        %v3039 = vadd.f32 %v3025, %v3035
        %v3040 = vadd.f32 %v3026, %v3036
        %v3041 = vadd.f32 %v3027, %v3037
        %v3042 = vadd.f32 %v3028, %v3038
        %v3043 = vmul.f32 %v3029, %v1636
        %v3044 = vmul.f32 %v3030, %v1640
        %v3047 = vrot.slane %v3043, 7
        %v3048 = vrot.slane %v3044, 7
        %v3051 = vadd.f32 %v3039, %v3047
        %v3052 = vadd.f32 %v3040, %v3048
        %v3053 = vadd.f32 %v3041, %v3047
        %v3054 = vadd.f32 %v3042, %v3048
        %v3055 = vmul.f32 %v3031, %v1649
        %v3056 = vmul.f32 %v3032, %v1653
        %v3057 = vmul.f32 %v3033, %v1649
        %v3058 = vmul.f32 %v3034, %v1653
        %v3063 = vrot.slane %v3055, 1
        %v3064 = vrot.slane %v3057, 1
        %v3065 = vsel %vm1768, %v3063, %v3064
        %v3066 = vrot.slane %v3056, 1
        %v3067 = vrot.slane %v3058, 1
        %v3068 = vsel %vm1768, %v3066, %v3067
        %v3073 = vadd.f32 %v3051, %v3065
        %v3074 = vadd.f32 %v3052, %v3068
        %v3075 = vadd.f32 %v3053, %v3064
        %v3076 = vadd.f32 %v3054, %v3067
        %v3077 = vld [vmem:[%s1565] sm:$0xff]
        %v3078 = vld [vmem:[%s1565 + $0x8] sm:$0xff]
        %v3079 = vld [vmem:[%s1565 + $0x10] sm:$0xff]
        %v3080 = vld [vmem:[%s1565 + $0x18] sm:$0xff]
        %v3081 = vld [vmem:[%s1565 + $0x20] sm:$0x3]
        %v3082 = vld [vmem:[%s1565 + $0x28] sm:$0x3]
        %v3083 = vmul.f32 %v3079, %v1662
        %v3084 = vmul.f32 %v3080, %v1666
        %v3085 = vmul.f32 %v3081, %v1662
        %v3086 = vmul.f32 %v3082, %v1666
        %v3087 = vadd.f32 %v3073, %v3083
        %v3088 = vadd.f32 %v3074, %v3084
        %v3089 = vadd.f32 %v3075, %v3085
        %v3090 = vadd.f32 %v3076, %v3086
        %v3091 = vmul.f32 %v3077, %v1675
        %v3092 = vmul.f32 %v3078, %v1679
        %v3095 = vrot.slane %v3091, 7
        %v3096 = vrot.slane %v3092, 7
        %v3099 = vadd.f32 %v3087, %v3095
        %v3100 = vadd.f32 %v3088, %v3096
        %v3101 = vadd.f32 %v3089, %v3095
        %v3102 = vadd.f32 %v3090, %v3096
        %v3103 = vmul.f32 %v3079, %v1688
        %v3104 = vmul.f32 %v3080, %v1692
        %v3105 = vmul.f32 %v3081, %v1688
        %v3106 = vmul.f32 %v3082, %v1692
        %v3111 = vrot.slane %v3103, 1
        %v3112 = vrot.slane %v3105, 1
        %v3113 = vsel %vm1768, %v3111, %v3112
        %v3114 = vrot.slane %v3104, 1
        %v3115 = vrot.slane %v3106, 1
        %v3116 = vsel %vm1768, %v3114, %v3115
        %v3121 = vadd.f32 %v3099, %v3113
        %v3122 = vadd.f32 %v3100, %v3116
        %v3123 = vadd.f32 %v3101, %v3112
        %v3124 = vadd.f32 %v3102, %v3115
        %v3125 = vmul.f32 %v3121, %v1701
        %v3126 = vmul.f32 %v3122, %v1705
        %v3127 = vmul.f32 %v3123, %v1701
        %v3128 = vmul.f32 %v3124, %v1705
        %v3129 = vadd.f32 %v3125, %v1714
        %v3130 = vadd.f32 %v3126, %v1718
        %v3131 = vadd.f32 %v3127, %v1714
        %v3132 = vadd.f32 %v3128, %v1718
        %vm3133 = vcmp.ge.f32.partialorder %v3129, 0.0
        %vm3134 = vcmp.ge.f32.partialorder %v3130, 0.0
        %vm3135 = vcmp.ge.f32.partialorder %v3131, 0.0
        %vm3136 = vcmp.ge.f32.partialorder %v3132, 0.0
        %v3137 = vmul.f32 %v3129, %v1727
        %v3138 = vmul.f32 %v3130, %v1731
        %v3139 = vmul.f32 %v3131, %v1727
        %v3140 = vmul.f32 %v3132, %v1731
        %v3141 = vsel %vm3133, %v3129, %v3137
        %v3142 = vsel %vm3134, %v3130, %v3138
        %v3143 = vsel %vm3135, %v3131, %v3139
        %v3144 = vsel %vm3136, %v3132, %v3140
        %v3149 = vrot.slane %v3141, 1
        %v3150 = vrot.slane %v3143, 1
        %v3151 = vsel %vm1768, %v3149, %v3150
        %v3152 = vrot.slane %v3142, 1
        %v3153 = vrot.slane %v3144, 1
        %v3154 = vsel %vm1768, %v3152, %v3153
        %3157 = vst [vmem:[#allocation3 + $0x70] sm:$0xff] %v3151
        %3158 = vst [vmem:[#allocation3 + $0x78] sm:$0xff] %v3154
        %v3159 = vld [vmem:[%s4] sm:$0x1]
        %v3160 = vld [vmem:[%s4 + $0x1] sm:$0x1]
        %v3161 = vld [vmem:[#allocation3] sm:$0xff]
        %v3162 = vld [vmem:[#allocation3 + $0x8] sm:$0xff]
        %v3163 = vld [vmem:[#allocation3 + $0x10] sm:$0xff]
        %v3164 = vld [vmem:[#allocation3 + $0x18] sm:$0xff]
        %v3165 = vld [vmem:[#allocation3 + $0x20] sm:$0xff]
        %v3166 = vld [vmem:[#allocation3 + $0x28] sm:$0xff]
        %v3167 = vld [vmem:[#allocation3 + $0x30] sm:$0xff]
        %v3168 = vld [vmem:[#allocation3 + $0x38] sm:$0xff]
        %v3169 = vld [vmem:[#allocation3 + $0x40] sm:$0xff]
        %v3170 = vld [vmem:[#allocation3 + $0x48] sm:$0xff]
        %v3171 = vld [vmem:[#allocation3 + $0x50] sm:$0xff]
        %v3172 = vld [vmem:[#allocation3 + $0x58] sm:$0xff]
        %v3173 = vld [vmem:[#allocation3 + $0x60] sm:$0xff]
        %v3174 = vld [vmem:[#allocation3 + $0x68] sm:$0xff]
        %v3175 = vld [vmem:[#allocation3 + $0x70] sm:$0xff]
        %v3176 = vld [vmem:[#allocation3 + $0x78] sm:$0xff]
        %v3177 = vpack.c.bf16 %v3163, %v3161
        %v3178 = vpack.c.bf16 %v3164, %v3162
        %v3179 = vpack.c.bf16 %v3167, %v3165
        %v3180 = vpack.c.bf16 %v3168, %v3166
        %v3181 = vpack.c.bf16 %v3171, %v3169
        %v3182 = vpack.c.bf16 %v3172, %v3170
        %v3183 = vpack.c.bf16 %v3175, %v3173
        %v3184 = vpack.c.bf16 %v3176, %v3174
        %v3185 = vld [vmem:[%s3] sm:$0xf]
        %v3186 = vld [vmem:[%s3 + $0x4] sm:$0xf]
        %v3187 = vld [vmem:[%s3 + $0x8] sm:$0xf]
        %v3188 = vld [vmem:[%s3 + $0xc] sm:$0xf]
        %v3189 = vld [vmem:[%s3 + $0x10] sm:$0xf]
        %v3190 = vld [vmem:[%s3 + $0x14] sm:$0xf]
        %v3191 = vld [vmem:[%s3 + $0x18] sm:$0xf]
        %v3192 = vld [vmem:[%s3 + $0x1c] sm:$0xf]
        %v3193 = vld [vmem:[%s3 + $0x20] sm:$0xf]
        %v3194 = vld [vmem:[%s3 + $0x24] sm:$0xf]
        %v3195 = vld [vmem:[%s3 + $0x28] sm:$0xf]
        %v3196 = vld [vmem:[%s3 + $0x2c] sm:$0xf]
        %v3197 = vld [vmem:[%s3 + $0x30] sm:$0xf]
        %v3198 = vld [vmem:[%s3 + $0x34] sm:$0xf]
        %v3199 = vld [vmem:[%s3 + $0x38] sm:$0xf]
        %v3200 = vld [vmem:[%s3 + $0x3c] sm:$0xf]
        %v3201 = vld [vmem:[%s3 + $0x40] sm:$0xf]
        %v3202 = vld [vmem:[%s3 + $0x44] sm:$0xf]
        %v3203 = vld [vmem:[%s3 + $0x48] sm:$0xf]
        %v3204 = vld [vmem:[%s3 + $0x4c] sm:$0xf]
        %v3205 = vld [vmem:[%s3 + $0x50] sm:$0xf]
        %v3206 = vld [vmem:[%s3 + $0x54] sm:$0xf]
        %v3207 = vld [vmem:[%s3 + $0x58] sm:$0xf]
        %v3208 = vld [vmem:[%s3 + $0x5c] sm:$0xf]
        %v3209 = vld [vmem:[%s3 + $0x60] sm:$0xf]
        %v3210 = vld [vmem:[%s3 + $0x64] sm:$0xf]
        %v3211 = vld [vmem:[%s3 + $0x68] sm:$0xf]
        %v3212 = vld [vmem:[%s3 + $0x6c] sm:$0xf]
        %v3213 = vld [vmem:[%s3 + $0x70] sm:$0xf]
        %v3214 = vld [vmem:[%s3 + $0x74] sm:$0xf]
        %v3215 = vld [vmem:[%s3 + $0x78] sm:$0xf]
        %v3216 = vld [vmem:[%s3 + $0x7c] sm:$0xf]
        %v3249 = vunpack.c.l.b16 %v3185
        %v3250 = vunpack.c.l.b16 %v3186
        %v3251 = vunpack.c.l.b16 %v3187
        %v3252 = vunpack.c.l.b16 %v3188
        %v3253 = vunpack.c.l.b16 %v3189
        %v3254 = vunpack.c.l.b16 %v3190
        %v3255 = vunpack.c.l.b16 %v3191
        %v3256 = vunpack.c.l.b16 %v3192
        %v3257 = vunpack.c.l.b16 %v3193
        %v3258 = vunpack.c.l.b16 %v3194
        %v3259 = vunpack.c.l.b16 %v3195
        %v3260 = vunpack.c.l.b16 %v3196
        %v3261 = vunpack.c.l.b16 %v3197
        %v3262 = vunpack.c.l.b16 %v3198
        %v3263 = vunpack.c.l.b16 %v3199
        %v3264 = vunpack.c.l.b16 %v3200
        %v3265 = vunpack.c.l.b16 %v3201
        %v3266 = vunpack.c.l.b16 %v3202
        %v3267 = vunpack.c.l.b16 %v3203
        %v3268 = vunpack.c.l.b16 %v3204
        %v3269 = vunpack.c.l.b16 %v3205
        %v3270 = vunpack.c.l.b16 %v3206
        %v3271 = vunpack.c.l.b16 %v3207
        %v3272 = vunpack.c.l.b16 %v3208
        %v3273 = vunpack.c.l.b16 %v3209
        %v3274 = vunpack.c.l.b16 %v3210
        %v3275 = vunpack.c.l.b16 %v3211
        %v3276 = vunpack.c.l.b16 %v3212
        %v3277 = vunpack.c.l.b16 %v3213
        %v3278 = vunpack.c.l.b16 %v3214
        %v3279 = vunpack.c.l.b16 %v3215
        %v3280 = vunpack.c.l.b16 %v3216
        %v3281 = vpack.c.b16 %v3250, %v3249
        %v3282 = vpack.c.b16 %v3252, %v3251
        %v3283 = vpack.c.b16 %v3254, %v3253
        %v3284 = vpack.c.b16 %v3256, %v3255
        %v3285 = vpack.c.b16 %v3258, %v3257
        %v3286 = vpack.c.b16 %v3260, %v3259
        %v3287 = vpack.c.b16 %v3262, %v3261
        %v3288 = vpack.c.b16 %v3264, %v3263
        %v3289 = vpack.c.b16 %v3266, %v3265
        %v3290 = vpack.c.b16 %v3268, %v3267
        %v3291 = vpack.c.b16 %v3270, %v3269
        %v3292 = vpack.c.b16 %v3272, %v3271
        %v3293 = vpack.c.b16 %v3274, %v3273
        %v3294 = vpack.c.b16 %v3276, %v3275
        %v3295 = vpack.c.b16 %v3278, %v3277
        %v3296 = vpack.c.b16 %v3280, %v3279
        %3313 = vmatprep.subr.bf16.mxu0 0
        %3314 = vmatpush1.bf16.msra.mxu0 %v3288
        %3315 = vmatprep.subr.bf16.mxu0 0
        %3316 = vmatpush1.bf16.msra.mxu0 %v3287
        %3317 = vmatprep.subr.bf16.mxu0 0
        %3318 = vmatpush1.bf16.msra.mxu0 %v3286
        %3319 = vmatprep.subr.bf16.mxu0 0
        %3320 = vmatpush1.bf16.msra.mxu0 %v3285
        %3321 = vmatprep.subr.bf16.mxu0 0
        %3322 = vmatpush1.bf16.msra.mxu0 %v3284
        %3323 = vmatprep.subr.bf16.mxu0 0
        %3324 = vmatpush1.bf16.msra.mxu0 %v3283
        %3325 = vmatprep.subr.bf16.mxu0 0
        %3326 = vmatpush1.bf16.msra.mxu0 %v3282
        %3327 = vmatprep.subr.bf16.mxu0 0
        %3328 = vmatpush1.bf16.msra.mxu0 %v3281
        %3329 = vmatprep.subr.bf16.mxu0 0
        %3330 = vmatpush2.bf16.msra.mxu0 %v3296
        %3331 = vmatprep.subr.bf16.mxu0 0
        %3332 = vmatpush2.bf16.msra.mxu0 %v3295
        %3333 = vmatprep.subr.bf16.mxu0 0
        %3334 = vmatpush2.bf16.msra.mxu0 %v3294
        %3335 = vmatprep.subr.bf16.mxu0 0
        %3336 = vmatpush2.bf16.msra.mxu0 %v3293
        %3337 = vmatprep.subr.bf16.mxu0 0
        %3338 = vmatpush2.bf16.msra.mxu0 %v3292
        %3339 = vmatprep.subr.bf16.mxu0 0
        %3340 = vmatpush2.bf16.msra.mxu0 %v3291
        %3341 = vmatprep.subr.bf16.mxu0 0
        %3342 = vmatpush2.bf16.msra.mxu0 %v3290
        %3343 = vmatprep.subr.bf16.mxu0 0
        %3344 = vmatpush2.bf16.msra.mxu0 %v3289
        %3345 = vmatprep.mubr.bf16.mxu0 %v3178
        %3346 = vmatmul.mubr.bf16.gmra.mxu0 %v3177
        %v3347 = vpop.f32.mrf.mxu0
        %v3348 = vadd.f32 0.0, %v3347
        %v3349 = vpop.f32.mrf.mxu0
        %v3350 = vpop.f32.mrf.mxu0
        %v3351 = vadd.f32 0.0, %v3350
        %v3352 = vpop.f32.mrf.mxu0
        %3353 = vmatprep.mubr.bf16.mxu0 %v3180
        %3354 = vmatmul.mubr.bf16.gmra.mxu0 %v3179
        %v3355 = vpop.f32.mrf.mxu0
        %v3356 = vadd.f32 0.0, %v3355
        %v3357 = vpop.f32.mrf.mxu0
        %v3358 = vpop.f32.mrf.mxu0
        %v3359 = vadd.f32 0.0, %v3358
        %v3360 = vpop.f32.mrf.mxu0
        %3361 = vmatprep.mubr.bf16.mxu0 %v3182
        %3362 = vmatmul.mubr.bf16.gmra.mxu0 %v3181
        %v3363 = vpop.f32.mrf.mxu0
        %v3364 = vadd.f32 0.0, %v3363
        %v3365 = vpop.f32.mrf.mxu0
        %v3366 = vpop.f32.mrf.mxu0
        %v3367 = vadd.f32 0.0, %v3366
        %v3368 = vpop.f32.mrf.mxu0
        %3369 = vmatprep.mubr.bf16.mxu0 %v3184
        %3370 = vmatmul.mubr.bf16.gmra.mxu0 %v3183
        %v3371 = vpop.f32.mrf.mxu0
        %v3372 = vadd.f32 0.0, %v3371
        %v3373 = vpop.f32.mrf.mxu0
        %v3374 = vpop.f32.mrf.mxu0
        %v3375 = vadd.f32 0.0, %v3374
        %v3376 = vpop.f32.mrf.mxu0
        %3377 = vdwg.mxu0
        %v3378 = vlaneseq
        %v3379 = vshrl.u32 %v3378, 7
        %v3380 = vsub.s32 0, %v3379
        %v3381 = vrot.slane %v3159, %v3380
        %v3382 = vmul.f32 %v3348, %v3381
        %v3383 = vmul.f32 %v3351, %v3381
        %v3384 = vmul.f32 %v3356, %v3381
        %v3385 = vmul.f32 %v3359, %v3381
        %v3386 = vmul.f32 %v3364, %v3381
        %v3387 = vmul.f32 %v3367, %v3381
        %v3388 = vmul.f32 %v3372, %v3381
        %v3389 = vmul.f32 %v3375, %v3381
        %v3390 = vlaneseq
        %v3391 = vshrl.u32 %v3390, 7
        %v3392 = vsub.s32 0, %v3391
        %v3393 = vrot.slane %v3160, %v3392
        %v3394 = vadd.f32 %v3382, %v3393
        %v3395 = vadd.f32 %v3383, %v3393
        %v3396 = vadd.f32 %v3384, %v3393
        %v3397 = vadd.f32 %v3385, %v3393
        %v3398 = vadd.f32 %v3386, %v3393
        %v3399 = vadd.f32 %v3387, %v3393
        %v3400 = vadd.f32 %v3388, %v3393
        %v3401 = vadd.f32 %v3389, %v3393
        %3402 = vst [vmem:[%s217] sm:$0xff] %v3394
        %3403 = vst [vmem:[%s217 + $0x8] sm:$0xff] %v3395
        %3404 = vst [vmem:[%s217 + $0x10] sm:$0xff] %v3396
        %3405 = vst [vmem:[%s217 + $0x18] sm:$0xff] %v3397
        %3406 = vst [vmem:[%s217 + $0x20] sm:$0xff] %v3398
        %3407 = vst [vmem:[%s217 + $0x28] sm:$0xff] %v3399
        %3408 = vst [vmem:[%s217 + $0x30] sm:$0xff] %v3400
        %3409 = vst [vmem:[%s217 + $0x38] sm:$0xff] %v3401
        %s3410 = sand.u32 %s137, 1
        %s3411 = scalar_lea.sflag [#allocation5], %s3410
        %s3412 = sand.u32 %s137, 1
        %s3413 = smul.addr %s3412, 64
        %s3414 = scalar_lea.vmem [#allocation4], %s3413
        // Predicated region
        $region41: #{depth_wise_forward.1} parent=39 // pred_check
          %p3415 = pneg %p147
        $region42: #{depth_wise_forward.1} parent=39 // pred_check_branch
          %3417 = sbr.rel (%p3415) target = $region44
        $region43: #{depth_wise_forward.1} parent=39 // pred_region
          %s3419 = ssub.s32 1024, 1024
          %3420 = vsyncadd %s3411, %s3419
          %s3421 = smul.addr %s19, 8
          %s3422 = smul.addr %s3421, 128
          %s3423 = scalar_lea.hbm %s5, %s3422
          %s3424 = sshll.u32 %s3414, 4
          %s3425 = int_to_ptr.vmem [resolvable:$true] %s3424
          %3430 = dma.vmem_to_hbm [thread:$0]  %s3425, 1024, %s3423, %s3411, 128, 128, 8
        $region44: #{depth_wise_forward.1} parent=39 // pred_fallthru
          _
      $region40: #{depth_wise_forward.1} parent=5 // pred_fallthru
        _
      %p3431 = scmp.le.s32.totalorder 2, %s14
      // Predicated region
      $region45: #{depth_wise_forward.1} parent=5 // pred_check
        %p3432 = pneg %p3431
      $region46: #{depth_wise_forward.1} parent=5 // pred_check_branch
        %3434 = sbr.rel (%p3432) target = $region48
      $region47: #{depth_wise_forward.1} parent=5 // pred_region
        %s3435 = ssub.s32 %s14, 2
        // Predicated region
        $region49: #{depth_wise_forward.1} parent=47 // pred_check
          %p3436 = pneg %p153
        $region50: #{depth_wise_forward.1} parent=47 // pred_check_branch
          %3438 = sbr.rel (%p3436) target = $region52
        $region51: #{depth_wise_forward.1} parent=47 // pred_region
          %s3439 = sand.u32 %s138, 1
          %s3440 = scalar_lea.sflag [#allocation5], %s3439
          %s3441 = sand.u32 %s138, 1
          %s3442 = smul.addr %s3441, 64
          %s3443 = scalar_lea.vmem [#allocation4], %s3442
          %3444 = dma.done %s3440, 1024
        $region52: #{depth_wise_forward.1} parent=47 // pred_fallthru
          _
      $region48: #{depth_wise_forward.1} parent=5 // pred_fallthru
        _
    $region6: #{depth_wise_forward.1} parent=1 // loop_footer
      %s18 = sadd.s32 1, %s14
    $region7: #{depth_wise_forward.1} parent=1 // loop_footer_branch
      %13 = sbr.rel target = $region3
    $region8: #{depth_wise_forward.1} parent=1 // loop_exit
      _
    %3445 = vsyncpa [#allocation5], 1
    %s3446 = scalar_lea.sflag [#allocation5], 1
    %3447 = vsyncpa %s3446, 1

</llo_original>
